<compile_context>
chip_gen: v6e
topology: v6e:2x2x1
jax: 0.10.0
libtpu: 0.0.40
codegen_flags: <defaults>
</compile_context>

<pallas_src>
import math
import functools

import jax
import jax.numpy as jnp
from jax.experimental import pallas as pl
from jax.experimental.pallas import tpu as pltpu


def mha_kernel(q_ref, k_ref, v_ref,
               wq_ref, bq_ref, wk_ref, bk_ref, wv_ref, bv_ref,
               wo_ref, bo_ref,
               o_ref,
               kp_ref, vp_ref,
               *, heads: int, d_k: int, compute_dtype):
    cd = compute_dtype

    # --- K/V projections: once per batch element, carried across the t (query-tile)
    # axis in VMEM scratch (t axis is "arbitrary" so the carry is well defined).
    @pl.when(pl.program_id(1) == 0)
    def _():
        k = k_ref[0]                                    # (S, D) bf16 (pre-cast in wrapper)
        v = v_ref[0]
        kp = jnp.dot(k, wk_ref[...], preferred_element_type=jnp.float32) + bk_ref[0]
        vp = jnp.dot(v, wv_ref[...], preferred_element_type=jnp.float32) + bv_ref[0]
        kp_ref[...] = kp.astype(cd)                     # single f32->bf16 cast each
        vp_ref[...] = vp.astype(cd)

    # --- Q projection for this query tile.  Wq/bq arrive pre-scaled by 1/sqrt(d_k),
    # so the attention scores need no extra multiply.
    q = q_ref[0]                                        # (TQ, D) bf16
    qp = (jnp.dot(q, wq_ref[...], preferred_element_type=jnp.float32)
          + bq_ref[0]).astype(cd)                       # (TQ, D) bf16

    tq = q.shape[0]
    d_model = q.shape[1]

    # --- Per-head attention with Wo fused into the head loop:
    #       acc += softmax(qh kh^T) vh @ Wo[lo:hi, :]
    # Every store stays D-wide lane-dense; no concat scratch / read-back.
    # TODO(synk): the optional `mask` argument and dropout of the PyTorch forward are
    # not plumbed through (this forward is exercised with mask=None, dropout=0.0).
    # TODO(synk): for very long S, replace the full-S kp/vp residency with a
    # flash-style K-block loop (online softmax) so VMEM is O(tq*tk), not O(tq*S).
    # TODO(synk): for many heads, switch this static loop to lax.fori_loop with a
    # small unroll + pl.ds(h*d_k, d_k) to bound live ranges (heads is small here).
    acc = jnp.zeros((tq, d_model), jnp.float32)
    for h in range(heads):
        lo = h * d_k
        hi = lo + d_k
        qh = qp[:, lo:hi]                               # (TQ, d_k) bf16
        kh = kp_ref[:, lo:hi]                           # (S,  d_k) bf16
        vh = vp_ref[:, lo:hi]                           # (S,  d_k) bf16

        # scores[i, j] = sum_d qh[i, d] * kh[j, d] -- contract the last dim of both
        # operands, so no transposed copy of kh is materialized in VMEM.
        scores = jax.lax.dot_general(
            qh, kh,
            dimension_numbers=(((1,), (1,)), ((), ())),
            preferred_element_type=jnp.float32)         # (TQ, S) f32

        scores = scores - jnp.max(scores, axis=-1, keepdims=True)
        e = jnp.exp(scores)
        # NOTE: approx reciprocal (EUP path) -> softmax rows sum to 1 only to ~1e-3
        # relative; fine for inference at the checked tolerance.
        attn = e * pl.reciprocal(jnp.sum(e, axis=-1, keepdims=True), approx=True)

        head_out = jnp.dot(attn.astype(cd), vh,
                           preferred_element_type=jnp.float32)      # (TQ, d_k) f32
        acc = acc + jnp.dot(head_out.astype(cd), wo_ref[lo:hi, :],
                            preferred_element_type=jnp.float32)     # (TQ, D)  f32

    o_ref[0] = (acc + bo_ref[0]).astype(o_ref.dtype)


def _vmem_limit_bytes():
    # Generation-aware budget: ~85% of per-core physical VMEM, capped at 100 MiB
    # (v5e/v6e: 128 MiB; v7x: 64 MiB per TensorCore).
    try:
        cap = pltpu.get_tpu_info().vmem_capacity_bytes
    except Exception:
        cap = 64 * 1024 * 1024          # conservative fallback (v7x per-TC)
    return int(min(cap * 0.85, 100 * 1024 * 1024))


def _tq_candidates():
    # 256-aligned query tiles feed the 256-wide MXU on v6e/v7x; 128/256 is enough on
    # v5e (4x128 MXU) and keeps (tq, S) f32 scores / vreg pressure down.
    try:
        chip = str(getattr(pltpu.get_tpu_info(), "chip_version", ""))
    except Exception:
        chip = ""
    if "5" in chip:
        return (256, 128)
    return (512, 256, 128)


def multi_head_attention(q, k, v, params, heads: int, *,
                         compute_dtype=jnp.bfloat16, tq=None):
    """q, k, v: [B, S, D].  params: PyTorch nn.Linear layout (W: [out, in], b: [out])."""
    B, S, D = q.shape
    assert D % heads == 0
    d_k = D // heads
    out_dtype = q.dtype

    if tq is None:
        tq = S
        for cand in _tq_candidates():
            if S > cand and S % cand == 0:
                tq = cand
                break
    assert S % tq == 0

    scale = 1.0 / math.sqrt(d_k)

    # Trace-time weight prep OUTSIDE the kernel:
    #   * transpose to [in, out] so the kernel computes x @ W (no in-kernel transpose)
    #   * fold the 1/sqrt(d_k) score scale into Wq AND bq  (NOTE: swapping in unscaled
    #     parameters here would silently produce wrong scores)
    #   * store weights in the MXU compute dtype (bf16 halves weight DMA / VMEM)
    wq = (params["wq"] * scale).T.astype(compute_dtype)
    wk = params["wk"].T.astype(compute_dtype)
    wv = params["wv"].T.astype(compute_dtype)
    wo = params["wo"].T.astype(compute_dtype)
    bq = (params["bq"] * scale).reshape(1, D).astype(jnp.float32)
    bk = params["bk"].reshape(1, D).astype(jnp.float32)
    bv = params["bv"].reshape(1, D).astype(jnp.float32)
    bo = params["bo"].reshape(1, D).astype(jnp.float32)

    # Pre-cast activations: they are only consumed in bf16, so casting in the wrapper
    # halves HBM->VMEM DMA bytes and the double-buffered k/v VMEM footprint.
    q = q.astype(compute_dtype)
    k = k.astype(compute_dtype)
    v = v.astype(compute_dtype)

    kernel = functools.partial(mha_kernel, heads=heads, d_k=d_k,
                               compute_dtype=compute_dtype)

    q_spec = pl.BlockSpec((1, tq, D), lambda b, t: (b, t, 0))
    kv_spec = pl.BlockSpec((1, S, D), lambda b, t: (b, 0, 0))   # revisited across t
    out_spec = pl.BlockSpec((1, tq, D), lambda b, t: (b, t, 0))

    def build(single_buffer_weights: bool):
        if single_buffer_weights:
            # Constant index_map -> double-buffering buys nothing; single-buffer to
            # save ~4*D*D bytes of VMEM (bf16 weights).
            w_spec = pl.BlockSpec((D, D), lambda b, t: (0, 0),
                                  pipeline_mode=pl.Buffered(1))
            b_spec = pl.BlockSpec((1, D), lambda b, t: (0, 0),
                                  pipeline_mode=pl.Buffered(1))
        else:
            w_spec = pl.BlockSpec((D, D), lambda b, t: (0, 0))
            b_spec = pl.BlockSpec((1, D), lambda b, t: (0, 0))

        return pl.pallas_call(
            kernel,
            out_shape=jax.ShapeDtypeStruct((B, S, D), out_dtype),
            grid=(B, S // tq),
            in_specs=[q_spec, kv_spec, kv_spec,
                      w_spec, b_spec, w_spec, b_spec, w_spec, b_spec,
                      w_spec, b_spec],
            out_specs=out_spec,
            # K/V projections are carried across the t axis in these scratches,
            # hence t must be "arbitrary"; b stays "parallel" for megacore.
            scratch_shapes=[pltpu.VMEM((S, D), compute_dtype),   # kp carry
                            pltpu.VMEM((S, D), compute_dtype)],  # vp carry
            compiler_params=pltpu.CompilerParams(
                dimension_semantics=("parallel", "arbitrary"),
                vmem_limit_bytes=_vmem_limit_bytes()),
        )

    args = (q, k, v, wq, bq, wk, bk, wv, bv, wo, bo)
    try:
        out = build(single_buffer_weights=True)(*args)
        return jax.block_until_ready(out)
    except Exception:
        # Fallback if pipeline_mode=pl.Buffered(1) is rejected by the deployed jax.
        out = build(single_buffer_weights=False)(*args)
        return jax.block_until_ready(out)


def mha_reference(q, k, v, params, heads: int):
    """Pure-JAX float32 reference mirroring the PyTorch forward (mask=None, dropout=0)."""
    B, S, D = q.shape
    d_k = D // heads

    def lin(x, w, b):
        return x @ w.T + b

    qp = lin(q, params["wq"], params["bq"]).reshape(B, S, heads, d_k).transpose(0, 2, 1, 3)
    kp = lin(k, params["wk"], params["bk"]).reshape(B, S, heads, d_k).transpose(0, 2, 1, 3)
    vp = lin(v, params["wv"], params["bv"]).reshape(B, S, heads, d_k).transpose(0, 2, 1, 3)

    scores = jnp.einsum("bhqd,bhkd->bhqk", qp, kp) / math.sqrt(d_k)
    scores = jax.nn.softmax(scores, axis=-1)
    out = jnp.einsum("bhqk,bhkd->bhqd", scores, vp)
    concat = out.transpose(0, 2, 1, 3).reshape(B, S, D)
    return lin(concat, params["wo"], params["bo"])


if __name__ == "__main__":
    B, S, D, H = 2, 8, 32, 4

    key = jax.random.PRNGKey(0)
    keys = jax.random.split(key, 12)

    # Deterministic synthetic parameters (PyTorch nn.Linear layout: W [out,in], b [out]).
    scale = 1.0 / math.sqrt(D)
    params = {
        "wq": jax.random.uniform(keys[0], (D, D), jnp.float32, -scale, scale),
        "bq": jax.random.uniform(keys[1], (D,), jnp.float32, -scale, scale),
        "wk": jax.random.uniform(keys[2], (D, D), jnp.float32, -scale, scale),
        "bk": jax.random.uniform(keys[3], (D,), jnp.float32, -scale, scale),
        "wv": jax.random.uniform(keys[4], (D, D), jnp.float32, -scale, scale),
        "bv": jax.random.uniform(keys[5], (D,), jnp.float32, -scale, scale),
        "wo": jax.random.uniform(keys[6], (D, D), jnp.float32, -scale, scale),
        "bo": jax.random.uniform(keys[7], (D,), jnp.float32, -scale, scale),
    }

    q = jax.random.normal(keys[8], (B, S, D), jnp.float32)
    k = jax.random.normal(keys[9], (B, S, D), jnp.float32)
    v = jax.random.normal(keys[10], (B, S, D), jnp.float32)

    out = multi_head_attention(q, k, v, params, heads=H)   # bf16 MXU path, f32 accum
    out = jax.block_until_ready(out)

    ref = mha_reference(q, k, v, params, heads=H)
    assert out.shape == (B, S, D)
    # Tolerance accounts for bf16 MXU operands / inputs (f32 accumulation) and the
    # approximate EUP reciprocal in the softmax vs the pure-f32 reference.
    assert jnp.allclose(out, ref, atol=5e-2, rtol=5e-2), "mismatch vs reference"

    print("KERNEL_OK")
</pallas_src>

<mosaic_0001>
module attributes {stable_mosaic.version = 11 : i64} {
  func.func @mha_kernel(%arg0: i32, %arg1: i32, %arg2: memref<1x8x32xbf16, #tpu.memory_space<vmem>>, %arg3: memref<1x8x32xbf16, #tpu.memory_space<vmem>>, %arg4: memref<1x8x32xbf16, #tpu.memory_space<vmem>>, %arg5: memref<32x32xbf16, #tpu.memory_space<vmem>>, %arg6: memref<1x32xf32, #tpu.memory_space<vmem>>, %arg7: memref<32x32xbf16, #tpu.memory_space<vmem>>, %arg8: memref<1x32xf32, #tpu.memory_space<vmem>>, %arg9: memref<32x32xbf16, #tpu.memory_space<vmem>>, %arg10: memref<1x32xf32, #tpu.memory_space<vmem>>, %arg11: memref<32x32xbf16, #tpu.memory_space<vmem>>, %arg12: memref<1x32xf32, #tpu.memory_space<vmem>>, %arg13: memref<1x8x32xf32, #tpu.memory_space<vmem>>, %arg14: memref<8x32xbf16, #tpu.memory_space<vmem>>, %arg15: memref<8x32xbf16, #tpu.memory_space<vmem>>) attributes {dimension_semantics = [#tpu.dimension_semantics<parallel>, #tpu.dimension_semantics<arbitrary>], iteration_bounds = array<i64: 2, 1>, scalar_prefetch = 0 : i64, scratch_operands = 2 : i64, tpu.core_type = #tpu.core_type<tc>, window_params = [{transform_indices = @transform_0, window_bounds = array<i64: 1, 8, 32>}, {transform_indices = @transform_1, window_bounds = array<i64: 1, 8, 32>}, {transform_indices = @transform_2, window_bounds = array<i64: 1, 8, 32>}, {pipeline_mode = #tpu.pipeline_mode<synchronous>, transform_indices = @transform_3, window_bounds = array<i64: 32, 32>}, {pipeline_mode = #tpu.pipeline_mode<synchronous>, transform_indices = @transform_4, window_bounds = array<i64: 1, 32>}, {pipeline_mode = #tpu.pipeline_mode<synchronous>, transform_indices = @transform_5, window_bounds = array<i64: 32, 32>}, {pipeline_mode = #tpu.pipeline_mode<synchronous>, transform_indices = @transform_6, window_bounds = array<i64: 1, 32>}, {pipeline_mode = #tpu.pipeline_mode<synchronous>, transform_indices = @transform_7, window_bounds = array<i64: 32, 32>}, {pipeline_mode = #tpu.pipeline_mode<synchronous>, transform_indices = @transform_8, window_bounds = array<i64: 1, 32>}, {pipeline_mode = #tpu.pipeline_mode<synchronous>, transform_indices = @transform_9, window_bounds = array<i64: 32, 32>}, {pipeline_mode = #tpu.pipeline_mode<synchronous>, transform_indices = @transform_10, window_bounds = array<i64: 1, 32>}, {transform_indices = @transform_11, window_bounds = array<i64: 1, 8, 32>}]} {
    %c0_i32 = arith.constant 0 : i32
    %0 = arith.cmpi eq, %arg1, %c0_i32 : i32
    %1 = arith.extui %0 : i1 to i32
    %c0_i32_0 = arith.constant 0 : i32
    %2 = arith.cmpi ne, %1, %c0_i32_0 : i32
    scf.if %2 {
      %c0_54 = arith.constant 0 : index
      %c0_55 = arith.constant 0 : index
      %c0_56 = arith.constant 0 : index
      %102 = vector.load %arg3[%c0_54, %c0_55, %c0_56] : memref<1x8x32xbf16, #tpu.memory_space<vmem>>, vector<1x8x32xbf16>
      %103 = vector.shape_cast %102 : vector<1x8x32xbf16> to vector<8x32xbf16>
      %c0_57 = arith.constant 0 : index
      %c0_58 = arith.constant 0 : index
      %c0_59 = arith.constant 0 : index
      %104 = vector.load %arg4[%c0_57, %c0_58, %c0_59] : memref<1x8x32xbf16, #tpu.memory_space<vmem>>, vector<1x8x32xbf16>
      %105 = vector.shape_cast %104 : vector<1x8x32xbf16> to vector<8x32xbf16>
      %c0_60 = arith.constant 0 : index
      %c0_61 = arith.constant 0 : index
      %106 = vector.load %arg7[%c0_60, %c0_61] : memref<32x32xbf16, #tpu.memory_space<vmem>>, vector<32x32xbf16>
      %cst_62 = arith.constant dense<0.000000e+00> : vector<8x32xf32>
      %107 = tpu.matmul %103, %106, %cst_62 {dimension_numbers = #tpu.dot_dimension_numbers<[1], [0], [0], [1], [0, 0, 1, 1], [], []>} : vector<8x32xbf16>, vector<32x32xbf16>, vector<8x32xf32> -> vector<8x32xf32>
      %c0_63 = arith.constant 0 : index
      %c0_64 = arith.constant 0 : index
      %108 = vector.load %arg8[%c0_63, %c0_64] : memref<1x32xf32, #tpu.memory_space<vmem>>, vector<1x32xf32>
      %109 = vector.shape_cast %108 : vector<1x32xf32> to vector<32xf32>
      %110 = vector.shape_cast %109 : vector<32xf32> to vector<1x32xf32>
      %111 = vector.broadcast %110 : vector<1x32xf32> to vector<8x32xf32>
      %112 = arith.addf %107, %111 : vector<8x32xf32>
      %c0_65 = arith.constant 0 : index
      %c0_66 = arith.constant 0 : index
      %113 = vector.load %arg9[%c0_65, %c0_66] : memref<32x32xbf16, #tpu.memory_space<vmem>>, vector<32x32xbf16>
      %cst_67 = arith.constant dense<0.000000e+00> : vector<8x32xf32>
      %114 = tpu.matmul %105, %113, %cst_67 {dimension_numbers = #tpu.dot_dimension_numbers<[1], [0], [0], [1], [0, 0, 1, 1], [], []>} : vector<8x32xbf16>, vector<32x32xbf16>, vector<8x32xf32> -> vector<8x32xf32>
      %c0_68 = arith.constant 0 : index
      %c0_69 = arith.constant 0 : index
      %115 = vector.load %arg10[%c0_68, %c0_69] : memref<1x32xf32, #tpu.memory_space<vmem>>, vector<1x32xf32>
      %116 = vector.shape_cast %115 : vector<1x32xf32> to vector<32xf32>
      %117 = vector.shape_cast %116 : vector<32xf32> to vector<1x32xf32>
      %118 = vector.broadcast %117 : vector<1x32xf32> to vector<8x32xf32>
      %119 = arith.addf %114, %118 : vector<8x32xf32>
      %120 = arith.truncf %112 : vector<8x32xf32> to vector<8x32xbf16>
      %c0_70 = arith.constant 0 : index
      %c0_71 = arith.constant 0 : index
      %121 = vector.load %arg14[%c0_70, %c0_71] : memref<8x32xbf16, #tpu.memory_space<vmem>>, vector<8x32xbf16>
      tpu.vector_store %arg14[%c0_70, %c0_71], %120 {strides = array<i32>} : memref<8x32xbf16, #tpu.memory_space<vmem>>, vector<8x32xbf16>,
      %122 = arith.truncf %119 : vector<8x32xf32> to vector<8x32xbf16>
      %c0_72 = arith.constant 0 : index
      %c0_73 = arith.constant 0 : index
      %123 = vector.load %arg15[%c0_72, %c0_73] : memref<8x32xbf16, #tpu.memory_space<vmem>>, vector<8x32xbf16>
      tpu.vector_store %arg15[%c0_72, %c0_73], %122 {strides = array<i32>} : memref<8x32xbf16, #tpu.memory_space<vmem>>, vector<8x32xbf16>,
    } else {
    }
    %c0 = arith.constant 0 : index
    %c0_1 = arith.constant 0 : index
    %c0_2 = arith.constant 0 : index
    %3 = vector.load %arg2[%c0, %c0_1, %c0_2] : memref<1x8x32xbf16, #tpu.memory_space<vmem>>, vector<1x8x32xbf16>
    %4 = vector.shape_cast %3 : vector<1x8x32xbf16> to vector<8x32xbf16>
    %c0_3 = arith.constant 0 : index
    %c0_4 = arith.constant 0 : index
    %5 = vector.load %arg5[%c0_3, %c0_4] : memref<32x32xbf16, #tpu.memory_space<vmem>>, vector<32x32xbf16>
    %cst = arith.constant dense<0.000000e+00> : vector<8x32xf32>
    %6 = tpu.matmul %4, %5, %cst {dimension_numbers = #tpu.dot_dimension_numbers<[1], [0], [0], [1], [0, 0, 1, 1], [], []>} : vector<8x32xbf16>, vector<32x32xbf16>, vector<8x32xf32> -> vector<8x32xf32>
    %c0_5 = arith.constant 0 : index
    %c0_6 = arith.constant 0 : index
    %7 = vector.load %arg6[%c0_5, %c0_6] : memref<1x32xf32, #tpu.memory_space<vmem>>, vector<1x32xf32>
    %8 = vector.shape_cast %7 : vector<1x32xf32> to vector<32xf32>
    %9 = vector.shape_cast %8 : vector<32xf32> to vector<1x32xf32>
    %10 = vector.broadcast %9 : vector<1x32xf32> to vector<8x32xf32>
    %11 = arith.addf %6, %10 : vector<8x32xf32>
    %12 = arith.truncf %11 : vector<8x32xf32> to vector<8x32xbf16>
    %cst_7 = arith.constant 0.000000e+00 : f32
    %13 = vector.broadcast %cst_7 : f32 to vector<8x32xf32>
    %14 = vector.extract_strided_slice %12 {offsets = [0, 0], sizes = [8, 8], strides = [1, 1]} : vector<8x32xbf16> to vector<8x8xbf16>
    %c0_8 = arith.constant 0 : index
    %c0_9 = arith.constant 0 : index
    %15 = vector.load %arg14[%c0_8, %c0_9] : memref<8x32xbf16, #tpu.memory_space<vmem>>, vector<8x8xbf16>
    %c0_10 = arith.constant 0 : index
    %c0_11 = arith.constant 0 : index
    %16 = vector.load %arg15[%c0_10, %c0_11] : memref<8x32xbf16, #tpu.memory_space<vmem>>, vector<8x8xbf16>
    %cst_12 = arith.constant dense<0.000000e+00> : vector<8x8xf32>
    %17 = tpu.matmul %14, %15, %cst_12 {dimension_numbers = #tpu.dot_dimension_numbers<[1], [1], [0], [0], [0, 0, 1, 0], [], []>} : vector<8x8xbf16>, vector<8x8xbf16>, vector<8x8xf32> -> vector<8x8xf32>
    %cst_13 = arith.constant dense<0xFF800000> : vector<8xf32>
    %18 = vector.multi_reduction <maximumf>, %17, %cst_13 [1] : vector<8x8xf32> to vector<8xf32>
    %19 = vector.shape_cast %18 : vector<8xf32> to vector<8x1xf32>
    %20 = vector.broadcast %19 : vector<8x1xf32> to vector<8x8xf32>
    %21 = arith.subf %17, %20 : vector<8x8xf32>
    %22 = math.exp %21 : vector<8x8xf32>
    %cst_14 = arith.constant dense<0.000000e+00> : vector<8xf32>
    %23 = vector.multi_reduction <add>, %22, %cst_14 [1] : vector<8x8xf32> to vector<8xf32>
    %24 = vector.shape_cast %23 : vector<8xf32> to vector<8x1xf32>
    %25 = tpu.reciprocal %24 {approx = true} : vector<8x1xf32> -> vector<8x1xf32>
    %26 = vector.broadcast %25 : vector<8x1xf32> to vector<8x8xf32>
    %27 = arith.mulf %22, %26 : vector<8x8xf32>
    %28 = arith.truncf %27 : vector<8x8xf32> to vector<8x8xbf16>
    %cst_15 = arith.constant dense<0.000000e+00> : vector<8x8xf32>
    %29 = tpu.matmul %28, %16, %cst_15 {dimension_numbers = #tpu.dot_dimension_numbers<[1], [0], [0], [1], [0, 0, 1, 1], [], []>} : vector<8x8xbf16>, vector<8x8xbf16>, vector<8x8xf32> -> vector<8x8xf32>
    %30 = arith.truncf %29 : vector<8x8xf32> to vector<8x8xbf16>
    %c0_16 = arith.constant 0 : index
    %c0_17 = arith.constant 0 : index
    %31 = vector.load %arg11[%c0_16, %c0_17] : memref<32x32xbf16, #tpu.memory_space<vmem>>, vector<8x32xbf16>
    %cst_18 = arith.constant dense<0.000000e+00> : vector<8x32xf32>
    %32 = tpu.matmul %30, %31, %cst_18 {dimension_numbers = #tpu.dot_dimension_numbers<[1], [0], [0], [1], [0, 0, 1, 1], [], []>} : vector<8x8xbf16>, vector<8x32xbf16>, vector<8x32xf32> -> vector<8x32xf32>
    %33 = arith.addf %13, %32 : vector<8x32xf32>
    %34 = vector.extract_strided_slice %12 {offsets = [0, 8], sizes = [8, 8], strides = [1, 1]} : vector<8x32xbf16> to vector<8x8xbf16>
    %c0_19 = arith.constant 0 : index
    %c8 = arith.constant 8 : index
    %35 = vector.load %arg14[%c0_19, %c8] : memref<8x32xbf16, #tpu.memory_space<vmem>>, vector<8x8xbf16>
    %c0_20 = arith.constant 0 : index
    %c8_21 = arith.constant 8 : index
    %36 = vector.load %arg15[%c0_20, %c8_21] : memref<8x32xbf16, #tpu.memory_space<vmem>>, vector<8x8xbf16>
    %cst_22 = arith.constant dense<0.000000e+00> : vector<8x8xf32>
    %37 = tpu.matmul %34, %35, %cst_22 {dimension_numbers = #tpu.dot_dimension_numbers<[1], [1], [0], [0], [0, 0, 1, 0], [], []>} : vector<8x8xbf16>, vector<8x8xbf16>, vector<8x8xf32> -> vector<8x8xf32>
    %cst_23 = arith.constant dense<0xFF800000> : vector<8xf32>
    %38 = vector.multi_reduction <maximumf>, %37, %cst_23 [1] : vector<8x8xf32> to vector<8xf32>
    %39 = vector.shape_cast %38 : vector<8xf32> to vector<8x1xf32>
    %40 = vector.broadcast %39 : vector<8x1xf32> to vector<8x8xf32>
    %41 = arith.subf %37, %40 : vector<8x8xf32>
    %42 = math.exp %41 : vector<8x8xf32>
    %cst_24 = arith.constant dense<0.000000e+00> : vector<8xf32>
    %43 = vector.multi_reduction <add>, %42, %cst_24 [1] : vector<8x8xf32> to vector<8xf32>
    %44 = vector.shape_cast %43 : vector<8xf32> to vector<8x1xf32>
    %45 = tpu.reciprocal %44 {approx = true} : vector<8x1xf32> -> vector<8x1xf32>
    %46 = vector.broadcast %45 : vector<8x1xf32> to vector<8x8xf32>
    %47 = arith.mulf %42, %46 : vector<8x8xf32>
    %48 = arith.truncf %47 : vector<8x8xf32> to vector<8x8xbf16>
    %cst_25 = arith.constant dense<0.000000e+00> : vector<8x8xf32>
    %49 = tpu.matmul %48, %36, %cst_25 {dimension_numbers = #tpu.dot_dimension_numbers<[1], [0], [0], [1], [0, 0, 1, 1], [], []>} : vector<8x8xbf16>, vector<8x8xbf16>, vector<8x8xf32> -> vector<8x8xf32>
    %50 = arith.truncf %49 : vector<8x8xf32> to vector<8x8xbf16>
    %c8_26 = arith.constant 8 : index
    %c0_27 = arith.constant 0 : index
    %51 = vector.load %arg11[%c8_26, %c0_27] : memref<32x32xbf16, #tpu.memory_space<vmem>>, vector<8x32xbf16>
    %cst_28 = arith.constant dense<0.000000e+00> : vector<8x32xf32>
    %52 = tpu.matmul %50, %51, %cst_28 {dimension_numbers = #tpu.dot_dimension_numbers<[1], [0], [0], [1], [0, 0, 1, 1], [], []>} : vector<8x8xbf16>, vector<8x32xbf16>, vector<8x32xf32> -> vector<8x32xf32>
    %53 = arith.addf %33, %52 : vector<8x32xf32>
    %54 = vector.extract_strided_slice %12 {offsets = [0, 16], sizes = [8, 8], strides = [1, 1]} : vector<8x32xbf16> to vector<8x8xbf16>
    %c0_29 = arith.constant 0 : index
    %c16 = arith.constant 16 : index
    %55 = vector.load %arg14[%c0_29, %c16] : memref<8x32xbf16, #tpu.memory_space<vmem>>, vector<8x8xbf16>
    %c0_30 = arith.constant 0 : index
    %c16_31 = arith.constant 16 : index
    %56 = vector.load %arg15[%c0_30, %c16_31] : memref<8x32xbf16, #tpu.memory_space<vmem>>, vector<8x8xbf16>
    %cst_32 = arith.constant dense<0.000000e+00> : vector<8x8xf32>
    %57 = tpu.matmul %54, %55, %cst_32 {dimension_numbers = #tpu.dot_dimension_numbers<[1], [1], [0], [0], [0, 0, 1, 0], [], []>} : vector<8x8xbf16>, vector<8x8xbf16>, vector<8x8xf32> -> vector<8x8xf32>
    %cst_33 = arith.constant dense<0xFF800000> : vector<8xf32>
    %58 = vector.multi_reduction <maximumf>, %57, %cst_33 [1] : vector<8x8xf32> to vector<8xf32>
    %59 = vector.shape_cast %58 : vector<8xf32> to vector<8x1xf32>
    %60 = vector.broadcast %59 : vector<8x1xf32> to vector<8x8xf32>
    %61 = arith.subf %57, %60 : vector<8x8xf32>
    %62 = math.exp %61 : vector<8x8xf32>
    %cst_34 = arith.constant dense<0.000000e+00> : vector<8xf32>
    %63 = vector.multi_reduction <add>, %62, %cst_34 [1] : vector<8x8xf32> to vector<8xf32>
    %64 = vector.shape_cast %63 : vector<8xf32> to vector<8x1xf32>
    %65 = tpu.reciprocal %64 {approx = true} : vector<8x1xf32> -> vector<8x1xf32>
    %66 = vector.broadcast %65 : vector<8x1xf32> to vector<8x8xf32>
    %67 = arith.mulf %62, %66 : vector<8x8xf32>
    %68 = arith.truncf %67 : vector<8x8xf32> to vector<8x8xbf16>
    %cst_35 = arith.constant dense<0.000000e+00> : vector<8x8xf32>
    %69 = tpu.matmul %68, %56, %cst_35 {dimension_numbers = #tpu.dot_dimension_numbers<[1], [0], [0], [1], [0, 0, 1, 1], [], []>} : vector<8x8xbf16>, vector<8x8xbf16>, vector<8x8xf32> -> vector<8x8xf32>
    %70 = arith.truncf %69 : vector<8x8xf32> to vector<8x8xbf16>
    %c16_36 = arith.constant 16 : index
    %c0_37 = arith.constant 0 : index
    %71 = vector.load %arg11[%c16_36, %c0_37] : memref<32x32xbf16, #tpu.memory_space<vmem>>, vector<8x32xbf16>
    %cst_38 = arith.constant dense<0.000000e+00> : vector<8x32xf32>
    %72 = tpu.matmul %70, %71, %cst_38 {dimension_numbers = #tpu.dot_dimension_numbers<[1], [0], [0], [1], [0, 0, 1, 1], [], []>} : vector<8x8xbf16>, vector<8x32xbf16>, vector<8x32xf32> -> vector<8x32xf32>
    %73 = arith.addf %53, %72 : vector<8x32xf32>
    %74 = vector.extract_strided_slice %12 {offsets = [0, 24], sizes = [8, 8], strides = [1, 1]} : vector<8x32xbf16> to vector<8x8xbf16>
    %c0_39 = arith.constant 0 : index
    %c24 = arith.constant 24 : index
    %75 = vector.load %arg14[%c0_39, %c24] : memref<8x32xbf16, #tpu.memory_space<vmem>>, vector<8x8xbf16>
    %c0_40 = arith.constant 0 : index
    %c24_41 = arith.constant 24 : index
    %76 = vector.load %arg15[%c0_40, %c24_41] : memref<8x32xbf16, #tpu.memory_space<vmem>>, vector<8x8xbf16>
    %cst_42 = arith.constant dense<0.000000e+00> : vector<8x8xf32>
    %77 = tpu.matmul %74, %75, %cst_42 {dimension_numbers = #tpu.dot_dimension_numbers<[1], [1], [0], [0], [0, 0, 1, 0], [], []>} : vector<8x8xbf16>, vector<8x8xbf16>, vector<8x8xf32> -> vector<8x8xf32>
    %cst_43 = arith.constant dense<0xFF800000> : vector<8xf32>
    %78 = vector.multi_reduction <maximumf>, %77, %cst_43 [1] : vector<8x8xf32> to vector<8xf32>
    %79 = vector.shape_cast %78 : vector<8xf32> to vector<8x1xf32>
    %80 = vector.broadcast %79 : vector<8x1xf32> to vector<8x8xf32>
    %81 = arith.subf %77, %80 : vector<8x8xf32>
    %82 = math.exp %81 : vector<8x8xf32>
    %cst_44 = arith.constant dense<0.000000e+00> : vector<8xf32>
    %83 = vector.multi_reduction <add>, %82, %cst_44 [1] : vector<8x8xf32> to vector<8xf32>
    %84 = vector.shape_cast %83 : vector<8xf32> to vector<8x1xf32>
    %85 = tpu.reciprocal %84 {approx = true} : vector<8x1xf32> -> vector<8x1xf32>
    %86 = vector.broadcast %85 : vector<8x1xf32> to vector<8x8xf32>
    %87 = arith.mulf %82, %86 : vector<8x8xf32>
    %88 = arith.truncf %87 : vector<8x8xf32> to vector<8x8xbf16>
    %cst_45 = arith.constant dense<0.000000e+00> : vector<8x8xf32>
    %89 = tpu.matmul %88, %76, %cst_45 {dimension_numbers = #tpu.dot_dimension_numbers<[1], [0], [0], [1], [0, 0, 1, 1], [], []>} : vector<8x8xbf16>, vector<8x8xbf16>, vector<8x8xf32> -> vector<8x8xf32>
    %90 = arith.truncf %89 : vector<8x8xf32> to vector<8x8xbf16>
    %c24_46 = arith.constant 24 : index
    %c0_47 = arith.constant 0 : index
    %91 = vector.load %arg11[%c24_46, %c0_47] : memref<32x32xbf16, #tpu.memory_space<vmem>>, vector<8x32xbf16>
    %cst_48 = arith.constant dense<0.000000e+00> : vector<8x32xf32>
    %92 = tpu.matmul %90, %91, %cst_48 {dimension_numbers = #tpu.dot_dimension_numbers<[1], [0], [0], [1], [0, 0, 1, 1], [], []>} : vector<8x8xbf16>, vector<8x32xbf16>, vector<8x32xf32> -> vector<8x32xf32>
    %93 = arith.addf %73, %92 : vector<8x32xf32>
    %c0_49 = arith.constant 0 : index
    %c0_50 = arith.constant 0 : index
    %94 = vector.load %arg12[%c0_49, %c0_50] : memref<1x32xf32, #tpu.memory_space<vmem>>, vector<1x32xf32>
    %95 = vector.shape_cast %94 : vector<1x32xf32> to vector<32xf32>
    %96 = vector.shape_cast %95 : vector<32xf32> to vector<1x32xf32>
    %97 = vector.broadcast %96 : vector<1x32xf32> to vector<8x32xf32>
    %98 = arith.addf %93, %97 : vector<8x32xf32>
    %c0_51 = arith.constant 0 : index
    %c0_52 = arith.constant 0 : index
    %c0_53 = arith.constant 0 : index
    %99 = vector.load %arg13[%c0_51, %c0_52, %c0_53] : memref<1x8x32xf32, #tpu.memory_space<vmem>>, vector<1x8x32xf32>
    %100 = vector.shape_cast %99 : vector<1x8x32xf32> to vector<8x32xf32>
    %101 = vector.shape_cast %98 : vector<8x32xf32> to vector<1x8x32xf32>
    tpu.vector_store %arg13[%c0_51, %c0_52, %c0_53], %101 {strides = array<i32>} : memref<1x8x32xf32, #tpu.memory_space<vmem>>, vector<1x8x32xf32>,
    return
  }
  func.func @transform_0(%arg0: i32, %arg1: i32) -> (i32, i32, i32) {
    %c0_i32 = arith.constant 0 : i32
    %c0_i32_0 = arith.constant 0 : i32
    return %arg0, %arg1, %c0_i32 : i32, i32, i32
  }
  func.func @transform_1(%arg0: i32, %arg1: i32) -> (i32, i32, i32) {
    %c0_i32 = arith.constant 0 : i32
    %c0_i32_0 = arith.constant 0 : i32
    %c0_i32_1 = arith.constant 0 : i32
    return %arg0, %c0_i32, %c0_i32_0 : i32, i32, i32
  }
  func.func @transform_2(%arg0: i32, %arg1: i32) -> (i32, i32, i32) {
    %c0_i32 = arith.constant 0 : i32
    %c0_i32_0 = arith.constant 0 : i32
    %c0_i32_1 = arith.constant 0 : i32
    return %arg0, %c0_i32, %c0_i32_0 : i32, i32, i32
  }
  func.func @transform_3(%arg0: i32, %arg1: i32) -> (i32, i32) {
    %c0_i32 = arith.constant 0 : i32
    %c0_i32_0 = arith.constant 0 : i32
    %c0_i32_1 = arith.constant 0 : i32
    return %c0_i32, %c0_i32_0 : i32, i32
  }
  func.func @transform_4(%arg0: i32, %arg1: i32) -> (i32, i32) {
    %c0_i32 = arith.constant 0 : i32
    %c0_i32_0 = arith.constant 0 : i32
    %c0_i32_1 = arith.constant 0 : i32
    return %c0_i32, %c0_i32_0 : i32, i32
  }
  func.func @transform_5(%arg0: i32, %arg1: i32) -> (i32, i32) {
    %c0_i32 = arith.constant 0 : i32
    %c0_i32_0 = arith.constant 0 : i32
    %c0_i32_1 = arith.constant 0 : i32
    return %c0_i32, %c0_i32_0 : i32, i32
  }
  func.func @transform_6(%arg0: i32, %arg1: i32) -> (i32, i32) {
    %c0_i32 = arith.constant 0 : i32
    %c0_i32_0 = arith.constant 0 : i32
    %c0_i32_1 = arith.constant 0 : i32
    return %c0_i32, %c0_i32_0 : i32, i32
  }
  func.func @transform_7(%arg0: i32, %arg1: i32) -> (i32, i32) {
    %c0_i32 = arith.constant 0 : i32
    %c0_i32_0 = arith.constant 0 : i32
    %c0_i32_1 = arith.constant 0 : i32
    return %c0_i32, %c0_i32_0 : i32, i32
  }
  func.func @transform_8(%arg0: i32, %arg1: i32) -> (i32, i32) {
    %c0_i32 = arith.constant 0 : i32
    %c0_i32_0 = arith.constant 0 : i32
    %c0_i32_1 = arith.constant 0 : i32
    return %c0_i32, %c0_i32_0 : i32, i32
  }
  func.func @transform_9(%arg0: i32, %arg1: i32) -> (i32, i32) {
    %c0_i32 = arith.constant 0 : i32
    %c0_i32_0 = arith.constant 0 : i32
    %c0_i32_1 = arith.constant 0 : i32
    return %c0_i32, %c0_i32_0 : i32, i32
  }
  func.func @transform_10(%arg0: i32, %arg1: i32) -> (i32, i32) {
    %c0_i32 = arith.constant 0 : i32
    %c0_i32_0 = arith.constant 0 : i32
    %c0_i32_1 = arith.constant 0 : i32
    return %c0_i32, %c0_i32_0 : i32, i32
  }
  func.func @transform_11(%arg0: i32, %arg1: i32) -> (i32, i32, i32) {
    %c0_i32 = arith.constant 0 : i32
    %c0_i32_0 = arith.constant 0 : i32
    return %arg0, %arg1, %c0_i32 : i32, i32, i32
  }
}

module attributes {stable_mosaic.version = 11 : i64} {
  func.func @mha_kernel(%arg0: i32, %arg1: i32, %arg2: memref<1x8x32xbf16, #tpu.memory_space<vmem>>, %arg3: memref<1x8x32xbf16, #tpu.memory_space<vmem>>, %arg4: memref<1x8x32xbf16, #tpu.memory_space<vmem>>, %arg5: memref<32x32xbf16, #tpu.memory_space<vmem>>, %arg6: memref<1x32xf32, #tpu.memory_space<vmem>>, %arg7: memref<32x32xbf16, #tpu.memory_space<vmem>>, %arg8: memref<1x32xf32, #tpu.memory_space<vmem>>, %arg9: memref<32x32xbf16, #tpu.memory_space<vmem>>, %arg10: memref<1x32xf32, #tpu.memory_space<vmem>>, %arg11: memref<32x32xbf16, #tpu.memory_space<vmem>>, %arg12: memref<1x32xf32, #tpu.memory_space<vmem>>, %arg13: memref<1x8x32xf32, #tpu.memory_space<vmem>>, %arg14: memref<8x32xbf16, #tpu.memory_space<vmem>>, %arg15: memref<8x32xbf16, #tpu.memory_space<vmem>>) attributes {dimension_semantics = [#tpu.dimension_semantics<parallel>, #tpu.dimension_semantics<arbitrary>], iteration_bounds = array<i64: 2, 1>, scalar_prefetch = 0 : i64, scratch_operands = 2 : i64, tpu.core_type = #tpu.core_type<tc>, window_params = [{transform_indices = @transform_0, window_bounds = array<i64: 1, 8, 32>}, {transform_indices = @transform_1, window_bounds = array<i64: 1, 8, 32>}, {transform_indices = @transform_2, window_bounds = array<i64: 1, 8, 32>}, {pipeline_mode = #tpu.pipeline_mode<synchronous>, transform_indices = @transform_3, window_bounds = array<i64: 32, 32>}, {pipeline_mode = #tpu.pipeline_mode<synchronous>, transform_indices = @transform_4, window_bounds = array<i64: 1, 32>}, {pipeline_mode = #tpu.pipeline_mode<synchronous>, transform_indices = @transform_5, window_bounds = array<i64: 32, 32>}, {pipeline_mode = #tpu.pipeline_mode<synchronous>, transform_indices = @transform_6, window_bounds = array<i64: 1, 32>}, {pipeline_mode = #tpu.pipeline_mode<synchronous>, transform_indices = @transform_7, window_bounds = array<i64: 32, 32>}, {pipeline_mode = #tpu.pipeline_mode<synchronous>, transform_indices = @transform_8, window_bounds = array<i64: 1, 32>}, {pipeline_mode = #tpu.pipeline_mode<synchronous>, transform_indices = @transform_9, window_bounds = array<i64: 32, 32>}, {pipeline_mode = #tpu.pipeline_mode<synchronous>, transform_indices = @transform_10, window_bounds = array<i64: 1, 32>}, {transform_indices = @transform_11, window_bounds = array<i64: 1, 8, 32>}]} {
    %c0_i32 = arith.constant 0 : i32
    %0 = arith.cmpi eq, %arg1, %c0_i32 : i32
    %1 = arith.extui %0 : i1 to i32
    %c0_i32_0 = arith.constant 0 : i32
    %2 = arith.cmpi ne, %1, %c0_i32_0 : i32
    scf.if %2 {
      %c0_54 = arith.constant 0 : index
      %c0_55 = arith.constant 0 : index
      %c0_56 = arith.constant 0 : index
      %102 = vector.load %arg3[%c0_54, %c0_55, %c0_56] : memref<1x8x32xbf16, #tpu.memory_space<vmem>>, vector<1x8x32xbf16>
      %103 = vector.shape_cast %102 : vector<1x8x32xbf16> to vector<8x32xbf16>
      %c0_57 = arith.constant 0 : index
      %c0_58 = arith.constant 0 : index
      %c0_59 = arith.constant 0 : index
      %104 = vector.load %arg4[%c0_57, %c0_58, %c0_59] : memref<1x8x32xbf16, #tpu.memory_space<vmem>>, vector<1x8x32xbf16>
      %105 = vector.shape_cast %104 : vector<1x8x32xbf16> to vector<8x32xbf16>
      %c0_60 = arith.constant 0 : index
      %c0_61 = arith.constant 0 : index
      %106 = vector.load %arg7[%c0_60, %c0_61] : memref<32x32xbf16, #tpu.memory_space<vmem>>, vector<32x32xbf16>
      %cst_62 = arith.constant dense<0.000000e+00> : vector<8x32xf32>
      %107 = tpu.matmul %103, %106, %cst_62 {dimension_numbers = #tpu.dot_dimension_numbers<[1], [0], [0], [1], [0, 0, 1, 1], [], []>} : vector<8x32xbf16>, vector<32x32xbf16>, vector<8x32xf32> -> vector<8x32xf32>
      %c0_63 = arith.constant 0 : index
      %c0_64 = arith.constant 0 : index
      %108 = vector.load %arg8[%c0_63, %c0_64] : memref<1x32xf32, #tpu.memory_space<vmem>>, vector<1x32xf32>
      %109 = vector.shape_cast %108 : vector<1x32xf32> to vector<32xf32>
      %110 = vector.shape_cast %109 : vector<32xf32> to vector<1x32xf32>
      %111 = vector.broadcast %110 : vector<1x32xf32> to vector<8x32xf32>
      %112 = arith.addf %107, %111 : vector<8x32xf32>
      %c0_65 = arith.constant 0 : index
      %c0_66 = arith.constant 0 : index
      %113 = vector.load %arg9[%c0_65, %c0_66] : memref<32x32xbf16, #tpu.memory_space<vmem>>, vector<32x32xbf16>
      %cst_67 = arith.constant dense<0.000000e+00> : vector<8x32xf32>
      %114 = tpu.matmul %105, %113, %cst_67 {dimension_numbers = #tpu.dot_dimension_numbers<[1], [0], [0], [1], [0, 0, 1, 1], [], []>} : vector<8x32xbf16>, vector<32x32xbf16>, vector<8x32xf32> -> vector<8x32xf32>
      %c0_68 = arith.constant 0 : index
      %c0_69 = arith.constant 0 : index
      %115 = vector.load %arg10[%c0_68, %c0_69] : memref<1x32xf32, #tpu.memory_space<vmem>>, vector<1x32xf32>
      %116 = vector.shape_cast %115 : vector<1x32xf32> to vector<32xf32>
      %117 = vector.shape_cast %116 : vector<32xf32> to vector<1x32xf32>
      %118 = vector.broadcast %117 : vector<1x32xf32> to vector<8x32xf32>
      %119 = arith.addf %114, %118 : vector<8x32xf32>
      %120 = arith.truncf %112 : vector<8x32xf32> to vector<8x32xbf16>
      %c0_70 = arith.constant 0 : index
      %c0_71 = arith.constant 0 : index
      %121 = vector.load %arg14[%c0_70, %c0_71] : memref<8x32xbf16, #tpu.memory_space<vmem>>, vector<8x32xbf16>
      tpu.vector_store %arg14[%c0_70, %c0_71], %120 {strides = array<i32>} : memref<8x32xbf16, #tpu.memory_space<vmem>>, vector<8x32xbf16>,
      %122 = arith.truncf %119 : vector<8x32xf32> to vector<8x32xbf16>
      %c0_72 = arith.constant 0 : index
      %c0_73 = arith.constant 0 : index
      %123 = vector.load %arg15[%c0_72, %c0_73] : memref<8x32xbf16, #tpu.memory_space<vmem>>, vector<8x32xbf16>
      tpu.vector_store %arg15[%c0_72, %c0_73], %122 {strides = array<i32>} : memref<8x32xbf16, #tpu.memory_space<vmem>>, vector<8x32xbf16>,
    } else {
    }
    %c0 = arith.constant 0 : index
    %c0_1 = arith.constant 0 : index
    %c0_2 = arith.constant 0 : index
    %3 = vector.load %arg2[%c0, %c0_1, %c0_2] : memref<1x8x32xbf16, #tpu.memory_space<vmem>>, vector<1x8x32xbf16>
    %4 = vector.shape_cast %3 : vector<1x8x32xbf16> to vector<8x32xbf16>
    %c0_3 = arith.constant 0 : index
    %c0_4 = arith.constant 0 : index
    %5 = vector.load %arg5[%c0_3, %c0_4] : memref<32x32xbf16, #tpu.memory_space<vmem>>, vector<32x32xbf16>
    %cst = arith.constant dense<0.000000e+00> : vector<8x32xf32>
    %6 = tpu.matmul %4, %5, %cst {dimension_numbers = #tpu.dot_dimension_numbers<[1], [0], [0], [1], [0, 0, 1, 1], [], []>} : vector<8x32xbf16>, vector<32x32xbf16>, vector<8x32xf32> -> vector<8x32xf32>
    %c0_5 = arith.constant 0 : index
    %c0_6 = arith.constant 0 : index
    %7 = vector.load %arg6[%c0_5, %c0_6] : memref<1x32xf32, #tpu.memory_space<vmem>>, vector<1x32xf32>
    %8 = vector.shape_cast %7 : vector<1x32xf32> to vector<32xf32>
    %9 = vector.shape_cast %8 : vector<32xf32> to vector<1x32xf32>
    %10 = vector.broadcast %9 : vector<1x32xf32> to vector<8x32xf32>
    %11 = arith.addf %6, %10 : vector<8x32xf32>
    %12 = arith.truncf %11 : vector<8x32xf32> to vector<8x32xbf16>
    %cst_7 = arith.constant 0.000000e+00 : f32
    %13 = vector.broadcast %cst_7 : f32 to vector<8x32xf32>
    %14 = vector.extract_strided_slice %12 {offsets = [0, 0], sizes = [8, 8], strides = [1, 1]} : vector<8x32xbf16> to vector<8x8xbf16>
    %c0_8 = arith.constant 0 : index
    %c0_9 = arith.constant 0 : index
    %15 = vector.load %arg14[%c0_8, %c0_9] : memref<8x32xbf16, #tpu.memory_space<vmem>>, vector<8x8xbf16>
    %c0_10 = arith.constant 0 : index
    %c0_11 = arith.constant 0 : index
    %16 = vector.load %arg15[%c0_10, %c0_11] : memref<8x32xbf16, #tpu.memory_space<vmem>>, vector<8x8xbf16>
    %cst_12 = arith.constant dense<0.000000e+00> : vector<8x8xf32>
    %17 = tpu.matmul %14, %15, %cst_12 {dimension_numbers = #tpu.dot_dimension_numbers<[1], [1], [0], [0], [0, 0, 1, 0], [], []>} : vector<8x8xbf16>, vector<8x8xbf16>, vector<8x8xf32> -> vector<8x8xf32>
    %cst_13 = arith.constant dense<0xFF800000> : vector<8xf32>
    %18 = vector.multi_reduction <maximumf>, %17, %cst_13 [1] : vector<8x8xf32> to vector<8xf32>
    %19 = vector.shape_cast %18 : vector<8xf32> to vector<8x1xf32>
    %20 = vector.broadcast %19 : vector<8x1xf32> to vector<8x8xf32>
    %21 = arith.subf %17, %20 : vector<8x8xf32>
    %22 = math.exp %21 : vector<8x8xf32>
    %cst_14 = arith.constant dense<0.000000e+00> : vector<8xf32>
    %23 = vector.multi_reduction <add>, %22, %cst_14 [1] : vector<8x8xf32> to vector<8xf32>
    %24 = vector.shape_cast %23 : vector<8xf32> to vector<8x1xf32>
    %25 = tpu.reciprocal %24 {approx = true} : vector<8x1xf32> -> vector<8x1xf32>
    %26 = vector.broadcast %25 : vector<8x1xf32> to vector<8x8xf32>
    %27 = arith.mulf %22, %26 : vector<8x8xf32>
    %28 = arith.truncf %27 : vector<8x8xf32> to vector<8x8xbf16>
    %cst_15 = arith.constant dense<0.000000e+00> : vector<8x8xf32>
    %29 = tpu.matmul %28, %16, %cst_15 {dimension_numbers = #tpu.dot_dimension_numbers<[1], [0], [0], [1], [0, 0, 1, 1], [], []>} : vector<8x8xbf16>, vector<8x8xbf16>, vector<8x8xf32> -> vector<8x8xf32>
    %30 = arith.truncf %29 : vector<8x8xf32> to vector<8x8xbf16>
    %c0_16 = arith.constant 0 : index
    %c0_17 = arith.constant 0 : index
    %31 = vector.load %arg11[%c0_16, %c0_17] : memref<32x32xbf16, #tpu.memory_space<vmem>>, vector<8x32xbf16>
    %cst_18 = arith.constant dense<0.000000e+00> : vector<8x32xf32>
    %32 = tpu.matmul %30, %31, %cst_18 {dimension_numbers = #tpu.dot_dimension_numbers<[1], [0], [0], [1], [0, 0, 1, 1], [], []>} : vector<8x8xbf16>, vector<8x32xbf16>, vector<8x32xf32> -> vector<8x32xf32>
    %33 = arith.addf %13, %32 : vector<8x32xf32>
    %34 = vector.extract_strided_slice %12 {offsets = [0, 8], sizes = [8, 8], strides = [1, 1]} : vector<8x32xbf16> to vector<8x8xbf16>
    %c0_19 = arith.constant 0 : index
    %c8 = arith.constant 8 : index
    %35 = vector.load %arg14[%c0_19, %c8] : memref<8x32xbf16, #tpu.memory_space<vmem>>, vector<8x8xbf16>
    %c0_20 = arith.constant 0 : index
    %c8_21 = arith.constant 8 : index
    %36 = vector.load %arg15[%c0_20, %c8_21] : memref<8x32xbf16, #tpu.memory_space<vmem>>, vector<8x8xbf16>
    %cst_22 = arith.constant dense<0.000000e+00> : vector<8x8xf32>
    %37 = tpu.matmul %34, %35, %cst_22 {dimension_numbers = #tpu.dot_dimension_numbers<[1], [1], [0], [0], [0, 0, 1, 0], [], []>} : vector<8x8xbf16>, vector<8x8xbf16>, vector<8x8xf32> -> vector<8x8xf32>
    %cst_23 = arith.constant dense<0xFF800000> : vector<8xf32>
    %38 = vector.multi_reduction <maximumf>, %37, %cst_23 [1] : vector<8x8xf32> to vector<8xf32>
    %39 = vector.shape_cast %38 : vector<8xf32> to vector<8x1xf32>
    %40 = vector.broadcast %39 : vector<8x1xf32> to vector<8x8xf32>
    %41 = arith.subf %37, %40 : vector<8x8xf32>
    %42 = math.exp %41 : vector<8x8xf32>
    %cst_24 = arith.constant dense<0.000000e+00> : vector<8xf32>
    %43 = vector.multi_reduction <add>, %42, %cst_24 [1] : vector<8x8xf32> to vector<8xf32>
    %44 = vector.shape_cast %43 : vector<8xf32> to vector<8x1xf32>
    %45 = tpu.reciprocal %44 {approx = true} : vector<8x1xf32> -> vector<8x1xf32>
    %46 = vector.broadcast %45 : vector<8x1xf32> to vector<8x8xf32>
    %47 = arith.mulf %42, %46 : vector<8x8xf32>
    %48 = arith.truncf %47 : vector<8x8xf32> to vector<8x8xbf16>
    %cst_25 = arith.constant dense<0.000000e+00> : vector<8x8xf32>
    %49 = tpu.matmul %48, %36, %cst_25 {dimension_numbers = #tpu.dot_dimension_numbers<[1], [0], [0], [1], [0, 0, 1, 1], [], []>} : vector<8x8xbf16>, vector<8x8xbf16>, vector<8x8xf32> -> vector<8x8xf32>
    %50 = arith.truncf %49 : vector<8x8xf32> to vector<8x8xbf16>
    %c8_26 = arith.constant 8 : index
    %c0_27 = arith.constant 0 : index
    %51 = vector.load %arg11[%c8_26, %c0_27] : memref<32x32xbf16, #tpu.memory_space<vmem>>, vector<8x32xbf16>
    %cst_28 = arith.constant dense<0.000000e+00> : vector<8x32xf32>
    %52 = tpu.matmul %50, %51, %cst_28 {dimension_numbers = #tpu.dot_dimension_numbers<[1], [0], [0], [1], [0, 0, 1, 1], [], []>} : vector<8x8xbf16>, vector<8x32xbf16>, vector<8x32xf32> -> vector<8x32xf32>
    %53 = arith.addf %33, %52 : vector<8x32xf32>
    %54 = vector.extract_strided_slice %12 {offsets = [0, 16], sizes = [8, 8], strides = [1, 1]} : vector<8x32xbf16> to vector<8x8xbf16>
    %c0_29 = arith.constant 0 : index
    %c16 = arith.constant 16 : index
    %55 = vector.load %arg14[%c0_29, %c16] : memref<8x32xbf16, #tpu.memory_space<vmem>>, vector<8x8xbf16>
    %c0_30 = arith.constant 0 : index
    %c16_31 = arith.constant 16 : index
    %56 = vector.load %arg15[%c0_30, %c16_31] : memref<8x32xbf16, #tpu.memory_space<vmem>>, vector<8x8xbf16>
    %cst_32 = arith.constant dense<0.000000e+00> : vector<8x8xf32>
    %57 = tpu.matmul %54, %55, %cst_32 {dimension_numbers = #tpu.dot_dimension_numbers<[1], [1], [0], [0], [0, 0, 1, 0], [], []>} : vector<8x8xbf16>, vector<8x8xbf16>, vector<8x8xf32> -> vector<8x8xf32>
    %cst_33 = arith.constant dense<0xFF800000> : vector<8xf32>
    %58 = vector.multi_reduction <maximumf>, %57, %cst_33 [1] : vector<8x8xf32> to vector<8xf32>
    %59 = vector.shape_cast %58 : vector<8xf32> to vector<8x1xf32>
    %60 = vector.broadcast %59 : vector<8x1xf32> to vector<8x8xf32>
    %61 = arith.subf %57, %60 : vector<8x8xf32>
    %62 = math.exp %61 : vector<8x8xf32>
    %cst_34 = arith.constant dense<0.000000e+00> : vector<8xf32>
    %63 = vector.multi_reduction <add>, %62, %cst_34 [1] : vector<8x8xf32> to vector<8xf32>
    %64 = vector.shape_cast %63 : vector<8xf32> to vector<8x1xf32>
    %65 = tpu.reciprocal %64 {approx = true} : vector<8x1xf32> -> vector<8x1xf32>
    %66 = vector.broadcast %65 : vector<8x1xf32> to vector<8x8xf32>
    %67 = arith.mulf %62, %66 : vector<8x8xf32>
    %68 = arith.truncf %67 : vector<8x8xf32> to vector<8x8xbf16>
    %cst_35 = arith.constant dense<0.000000e+00> : vector<8x8xf32>
    %69 = tpu.matmul %68, %56, %cst_35 {dimension_numbers = #tpu.dot_dimension_numbers<[1], [0], [0], [1], [0, 0, 1, 1], [], []>} : vector<8x8xbf16>, vector<8x8xbf16>, vector<8x8xf32> -> vector<8x8xf32>
    %70 = arith.truncf %69 : vector<8x8xf32> to vector<8x8xbf16>
    %c16_36 = arith.constant 16 : index
    %c0_37 = arith.constant 0 : index
    %71 = vector.load %arg11[%c16_36, %c0_37] : memref<32x32xbf16, #tpu.memory_space<vmem>>, vector<8x32xbf16>
    %cst_38 = arith.constant dense<0.000000e+00> : vector<8x32xf32>
    %72 = tpu.matmul %70, %71, %cst_38 {dimension_numbers = #tpu.dot_dimension_numbers<[1], [0], [0], [1], [0, 0, 1, 1], [], []>} : vector<8x8xbf16>, vector<8x32xbf16>, vector<8x32xf32> -> vector<8x32xf32>
    %73 = arith.addf %53, %72 : vector<8x32xf32>
    %74 = vector.extract_strided_slice %12 {offsets = [0, 24], sizes = [8, 8], strides = [1, 1]} : vector<8x32xbf16> to vector<8x8xbf16>
    %c0_39 = arith.constant 0 : index
    %c24 = arith.constant 24 : index
    %75 = vector.load %arg14[%c0_39, %c24] : memref<8x32xbf16, #tpu.memory_space<vmem>>, vector<8x8xbf16>
    %c0_40 = arith.constant 0 : index
    %c24_41 = arith.constant 24 : index
    %76 = vector.load %arg15[%c0_40, %c24_41] : memref<8x32xbf16, #tpu.memory_space<vmem>>, vector<8x8xbf16>
    %cst_42 = arith.constant dense<0.000000e+00> : vector<8x8xf32>
    %77 = tpu.matmul %74, %75, %cst_42 {dimension_numbers = #tpu.dot_dimension_numbers<[1], [1], [0], [0], [0, 0, 1, 0], [], []>} : vector<8x8xbf16>, vector<8x8xbf16>, vector<8x8xf32> -> vector<8x8xf32>
    %cst_43 = arith.constant dense<0xFF800000> : vector<8xf32>
    %78 = vector.multi_reduction <maximumf>, %77, %cst_43 [1] : vector<8x8xf32> to vector<8xf32>
    %79 = vector.shape_cast %78 : vector<8xf32> to vector<8x1xf32>
    %80 = vector.broadcast %79 : vector<8x1xf32> to vector<8x8xf32>
    %81 = arith.subf %77, %80 : vector<8x8xf32>
    %82 = math.exp %81 : vector<8x8xf32>
    %cst_44 = arith.constant dense<0.000000e+00> : vector<8xf32>
    %83 = vector.multi_reduction <add>, %82, %cst_44 [1] : vector<8x8xf32> to vector<8xf32>
    %84 = vector.shape_cast %83 : vector<8xf32> to vector<8x1xf32>
    %85 = tpu.reciprocal %84 {approx = true} : vector<8x1xf32> -> vector<8x1xf32>
    %86 = vector.broadcast %85 : vector<8x1xf32> to vector<8x8xf32>
    %87 = arith.mulf %82, %86 : vector<8x8xf32>
    %88 = arith.truncf %87 : vector<8x8xf32> to vector<8x8xbf16>
    %cst_45 = arith.constant dense<0.000000e+00> : vector<8x8xf32>
    %89 = tpu.matmul %88, %76, %cst_45 {dimension_numbers = #tpu.dot_dimension_numbers<[1], [0], [0], [1], [0, 0, 1, 1], [], []>} : vector<8x8xbf16>, vector<8x8xbf16>, vector<8x8xf32> -> vector<8x8xf32>
    %90 = arith.truncf %89 : vector<8x8xf32> to vector<8x8xbf16>
    %c24_46 = arith.constant 24 : index
    %c0_47 = arith.constant 0 : index
    %91 = vector.load %arg11[%c24_46, %c0_47] : memref<32x32xbf16, #tpu.memory_space<vmem>>, vector<8x32xbf16>
    %cst_48 = arith.constant dense<0.000000e+00> : vector<8x32xf32>
    %92 = tpu.matmul %90, %91, %cst_48 {dimension_numbers = #tpu.dot_dimension_numbers<[1], [0], [0], [1], [0, 0, 1, 1], [], []>} : vector<8x8xbf16>, vector<8x32xbf16>, vector<8x32xf32> -> vector<8x32xf32>
    %93 = arith.addf %73, %92 : vector<8x32xf32>
    %c0_49 = arith.constant 0 : index
    %c0_50 = arith.constant 0 : index
    %94 = vector.load %arg12[%c0_49, %c0_50] : memref<1x32xf32, #tpu.memory_space<vmem>>, vector<1x32xf32>
    %95 = vector.shape_cast %94 : vector<1x32xf32> to vector<32xf32>
    %96 = vector.shape_cast %95 : vector<32xf32> to vector<1x32xf32>
    %97 = vector.broadcast %96 : vector<1x32xf32> to vector<8x32xf32>
    %98 = arith.addf %93, %97 : vector<8x32xf32>
    %c0_51 = arith.constant 0 : index
    %c0_52 = arith.constant 0 : index
    %c0_53 = arith.constant 0 : index
    %99 = vector.load %arg13[%c0_51, %c0_52, %c0_53] : memref<1x8x32xf32, #tpu.memory_space<vmem>>, vector<1x8x32xf32>
    %100 = vector.shape_cast %99 : vector<1x8x32xf32> to vector<8x32xf32>
    %101 = vector.shape_cast %98 : vector<8x32xf32> to vector<1x8x32xf32>
    tpu.vector_store %arg13[%c0_51, %c0_52, %c0_53], %101 {strides = array<i32>} : memref<1x8x32xf32, #tpu.memory_space<vmem>>, vector<1x8x32xf32>,
    return
  }
  func.func @transform_0(%arg0: i32, %arg1: i32) -> (i32, i32, i32) {
    %c0_i32 = arith.constant 0 : i32
    %c0_i32_0 = arith.constant 0 : i32
    return %arg0, %arg1, %c0_i32 : i32, i32, i32
  }
  func.func @transform_1(%arg0: i32, %arg1: i32) -> (i32, i32, i32) {
    %c0_i32 = arith.constant 0 : i32
    %c0_i32_0 = arith.constant 0 : i32
    %c0_i32_1 = arith.constant 0 : i32
    return %arg0, %c0_i32, %c0_i32_0 : i32, i32, i32
  }
  func.func @transform_2(%arg0: i32, %arg1: i32) -> (i32, i32, i32) {
    %c0_i32 = arith.constant 0 : i32
    %c0_i32_0 = arith.constant 0 : i32
    %c0_i32_1 = arith.constant 0 : i32
    return %arg0, %c0_i32, %c0_i32_0 : i32, i32, i32
  }
  func.func @transform_3(%arg0: i32, %arg1: i32) -> (i32, i32) {
    %c0_i32 = arith.constant 0 : i32
    %c0_i32_0 = arith.constant 0 : i32
    %c0_i32_1 = arith.constant 0 : i32
    return %c0_i32, %c0_i32_0 : i32, i32
  }
  func.func @transform_4(%arg0: i32, %arg1: i32) -> (i32, i32) {
    %c0_i32 = arith.constant 0 : i32
    %c0_i32_0 = arith.constant 0 : i32
    %c0_i32_1 = arith.constant 0 : i32
    return %c0_i32, %c0_i32_0 : i32, i32
  }
  func.func @transform_5(%arg0: i32, %arg1: i32) -> (i32, i32) {
    %c0_i32 = arith.constant 0 : i32
    %c0_i32_0 = arith.constant 0 : i32
    %c0_i32_1 = arith.constant 0 : i32
    return %c0_i32, %c0_i32_0 : i32, i32
  }
  func.func @transform_6(%arg0: i32, %arg1: i32) -> (i32, i32) {
    %c0_i32 = arith.constant 0 : i32
    %c0_i32_0 = arith.constant 0 : i32
    %c0_i32_1 = arith.constant 0 : i32
    return %c0_i32, %c0_i32_0 : i32, i32
  }
  func.func @transform_7(%arg0: i32, %arg1: i32) -> (i32, i32) {
    %c0_i32 = arith.constant 0 : i32
    %c0_i32_0 = arith.constant 0 : i32
    %c0_i32_1 = arith.constant 0 : i32
    return %c0_i32, %c0_i32_0 : i32, i32
  }
  func.func @transform_8(%arg0: i32, %arg1: i32) -> (i32, i32) {
    %c0_i32 = arith.constant 0 : i32
    %c0_i32_0 = arith.constant 0 : i32
    %c0_i32_1 = arith.constant 0 : i32
    return %c0_i32, %c0_i32_0 : i32, i32
  }
  func.func @transform_9(%arg0: i32, %arg1: i32) -> (i32, i32) {
    %c0_i32 = arith.constant 0 : i32
    %c0_i32_0 = arith.constant 0 : i32
    %c0_i32_1 = arith.constant 0 : i32
    return %c0_i32, %c0_i32_0 : i32, i32
  }
  func.func @transform_10(%arg0: i32, %arg1: i32) -> (i32, i32) {
    %c0_i32 = arith.constant 0 : i32
    %c0_i32_0 = arith.constant 0 : i32
    %c0_i32_1 = arith.constant 0 : i32
    return %c0_i32, %c0_i32_0 : i32, i32
  }
  func.func @transform_11(%arg0: i32, %arg1: i32) -> (i32, i32, i32) {
    %c0_i32 = arith.constant 0 : i32
    %c0_i32_0 = arith.constant 0 : i32
    return %arg0, %arg1, %c0_i32 : i32, i32, i32
  }
}

</mosaic_0001>

<llo_original>
// kernel: tpu_custom_call.1
$region0: #{tpu_custom_call.1}
  #allocation0 [shape = 'u32[]', space=smem, size = 0x4, offset = 0x4, fixed_abs, tag = 'smem constant byte address 0x4 - core index']
  #allocation1 [shape = 'u32[144,128]{1,0:T(1,128)}', space=vmem, size = 0x12000, scoped, tag = 'internal scratch']
  #allocation2 [shape = 'bf16[8,32]{1,0:T(8,128)(2,1)}', space=vmem, size = 0x800, scoped, tag = 'scratch operand']
  #allocation3 [shape = 'bf16[8,32]{1,0:T(8,128)(2,1)}', space=vmem, size = 0x800, scoped, tag = 'scratch operand']
  %s0 = inlined_call_operand.hbm [shape: bf16[2,8,32], index: 0, kind: input, shape index: {}]
  %s1 = inlined_call_operand.hbm [shape: bf16[2,8,32], index: 1, kind: input, shape index: {}]
  %s2 = inlined_call_operand.hbm [shape: bf16[2,8,32], index: 2, kind: input, shape index: {}]
  %s3 = inlined_call_operand.hbm [shape: bf16[32,32], index: 3, kind: input, shape index: {}]
  %s4 = inlined_call_operand.hbm [shape: f32[1,32], index: 4, kind: input, shape index: {}]
  %s5 = inlined_call_operand.hbm [shape: bf16[32,32], index: 5, kind: input, shape index: {}]
  %s6 = inlined_call_operand.hbm [shape: f32[1,32], index: 6, kind: input, shape index: {}]
  %s7 = inlined_call_operand.hbm [shape: bf16[32,32], index: 7, kind: input, shape index: {}]
  %s8 = inlined_call_operand.hbm [shape: f32[1,32], index: 8, kind: input, shape index: {}]
  %s9 = inlined_call_operand.vmem [shape: bf16[32,32], index: 9, kind: input, shape index: {}]
  %s10 = inlined_call_operand.vmem [shape: f32[1,32], index: 10, kind: input, shape index: {}]
  %s11 = inlined_call_operand.hbm [shape: f32[2,8,32], index: 11, kind: output, shape index: {}]
  %s12 = sld [smem:[#allocation0]]
  $region117: #{tpu_custom_call.1} parent=0
    _
  %s14 = ssub.s32 1, %s12
  %s15 = scalar_select 0, %s14, %s12
  $region1: #{tpu_custom_call.1} parent=0
    #allocation4 [shape = 'u8[4096]{0}', space=vmem, size = 0x1000, scoped, tag = 'input window, operand 0']
    #allocation5 [shape = 's32[2]{0}', space=sflag, size = 0x8, scoped, tag = 'scoped memory for tpu_custom_call.1']
    #allocation6 [shape = 's32[2]{0}', space=sflag, size = 0x8, scoped, tag = 'scoped memory for tpu_custom_call.1']
    #allocation7 [shape = 'u8[4096]{0}', space=vmem, size = 0x1000, scoped, tag = 'input window, operand 1']
    #allocation8 [shape = 's32[2]{0}', space=sflag, size = 0x8, scoped, tag = 'scoped memory for tpu_custom_call.1']
    #allocation9 [shape = 'u8[4096]{0}', space=vmem, size = 0x1000, scoped, tag = 'input window, operand 2']
    #allocation10 [shape = 'u8[8192]{0}', space=vmem, size = 0x2000, scoped, tag = 'input window, operand 3, single buffered']
    #allocation11 [shape = 's32[1]{0}', space=sflag, size = 0x4, scoped, tag = 'scoped memory for tpu_custom_call.1']
    #allocation12 [shape = 'u8[512]{0}', space=vmem, size = 0x400, scoped, tag = 'input window, operand 4, single buffered']
    #allocation13 [shape = 'u8[8192]{0}', space=vmem, size = 0x2000, scoped, tag = 'input window, operand 5, single buffered']
    #allocation14 [shape = 's32[1]{0}', space=sflag, size = 0x4, scoped, tag = 'scoped memory for tpu_custom_call.1']
    #allocation15 [shape = 'u8[512]{0}', space=vmem, size = 0x400, scoped, tag = 'input window, operand 6, single buffered']
    #allocation16 [shape = 'u8[8192]{0}', space=vmem, size = 0x2000, scoped, tag = 'input window, operand 7, single buffered']
    #allocation17 [shape = 's32[1]{0}', space=sflag, size = 0x4, scoped, tag = 'scoped memory for tpu_custom_call.1']
    #allocation18 [shape = 'u8[512]{0}', space=vmem, size = 0x400, scoped, tag = 'input window, operand 8, single buffered']
    #allocation19 [shape = 'u8[8192]{0}', space=vmem, size = 0x2000, scoped, tag = 'output window, operand 0']
    %16 = vsyncpa [#allocation5], 0
    %s17 = scalar_lea.sflag [#allocation5], 1
    %18 = vsyncpa %s17, 0
    %19 = vsyncpa [#allocation8], 0
    %s20 = scalar_lea.sflag [#allocation8], 1
    %21 = vsyncpa %s20, 0
    %22 = vsyncpa [#allocation11], 0
    %23 = vsyncpa [#allocation14], 0
    %24 = vsyncpa [#allocation17], 0
    %25 = vsyncpa [#allocation6], 0
    %s26 = scalar_lea.sflag [#allocation6], 1
    %27 = vsyncpa %s26, 0
    loop: start=0, step=1, limit=4
    $region2: #{tpu_custom_call.1} parent=1 // loop_pre_header
      _
    $region3: #{tpu_custom_call.1} parent=1 // loop_header
      %s29 = sphi 0, %s33
      %p30 = scmp.ge.s32.totalorder %s29, 4
      %s36 = sphi 0, %s48
      %s37 = sphi 0, %s44
      %s38 = sphi 0, %s36
      %s39 = sphi 0, %s37
      %s40 = sphi 0, %s38
      %s41 = sphi 0, %s39
      %s53 = sphi 0, %s55
      %s56 = sphi 0, %s53
      %s57 = sphi 0, %s56
      %s73 = sphi 0, %s57
      %s79 = sphi 0, %s81
      %s82 = sphi 0, %s79
      %s83 = sphi 0, %s82
      %s99 = sphi 0, %s83
      %s105 = sphi 0, %s107
      %s108 = sphi 0, %s105
      %s109 = sphi 0, %s108
      %s125 = sphi 0, %s109
      %s129 = sphi 0, %s129
      %s131 = sphi 0, %s129
      %s132 = sphi 0, %s131
      %s146 = sphi 0, %s132
      %s150 = sphi 0, %s150
      %s152 = sphi 0, %s150
      %s153 = sphi 0, %s152
      %s167 = sphi 0, %s153
      %s171 = sphi 0, %s171
      %s173 = sphi 0, %s171
      %s174 = sphi 0, %s173
      %s188 = sphi 0, %s174
      %s192 = sphi 0, %s192
      %s194 = sphi 0, %s192
      %s195 = sphi 0, %s194
      %s209 = sphi 0, %s195
      %s213 = sphi 0, %s213
      %s215 = sphi 0, %s213
      %s216 = sphi 0, %s215
      %s230 = sphi 0, %s216
      %s234 = sphi 0, %s234
      %s236 = sphi 0, %s234
      %s237 = sphi 0, %s236
      %s251 = sphi 0, %s237
      %s255 = sphi 0, %s255
      %s257 = sphi 0, %s255
      %s258 = sphi 0, %s257
      %s272 = sphi 0, %s258
      %s276 = sphi 0, %s276
      %s278 = sphi 0, %s276
      %s279 = sphi 0, %s278
      %s293 = sphi 0, %s279
      %s301 = sphi 0, %s303
      %s304 = sphi 0, %s301
      %s305 = sphi 0, %s304
      %s321 = sphi 0, %s305
    $region4: #{tpu_custom_call.1} parent=1 // loop_header_branch
      %32 = sbr.rel (%p30) target = $region8
    $region5: #{tpu_custom_call.1} parent=1 // loop_body
      %s34 = ssub.s32 %s29, 1
      %s35 = ssub.s32 %s29, 2
      %s42 = sadd.s32 1, %s37
      %p43 = scmp.ge.s32.totalorder %s42, 1
      %s44 = scalar_select %p43, 0, %s42
      %s45 = sadd.s32 1, %s36
      %s46 = scalar_select %p43, %s45, %s36
      %p47 = scmp.ge.s32.totalorder %s46, 2
      %s48 = scalar_select %p47, 0, %s46
      %s49 = ssub.s32 %s36, %s48
      %s50 = ssub.s32 %s37, %s44
      %s51 = sor.u32 %s49, %s50
      %p52 = scmp.eq.s32.totalorder %s51, 0
      %s54 = sadd.s32 %s53, 1
      %s55 = scalar_select %p52, %s53, %s54
      %p58 = pneg %p52
      %p59 = scmp.eq.s32.totalorder %s29, 1
      %p60 = por %p58, %p59
      %p61 = scmp.ne.s32.totalorder %s53, %s56
      %p62 = scmp.eq.s32.totalorder %s29, 0
      %p63 = por %p61, %p62
      %p64 = scmp.ne.s32.totalorder %s53, %s56
      %p65 = scmp.eq.s32.totalorder %s34, 1
      %p66 = por %p64, %p65
      %p67 = scmp.ne.s32.totalorder %s56, %s57
      %p68 = scmp.eq.s32.totalorder %s34, 0
      %p69 = por %p67, %p68
      %p70 = scmp.ne.s32.totalorder %s56, %s57
      %p71 = scmp.eq.s32.totalorder %s35, 1
      %p72 = por %p70, %p71
      %p74 = scmp.ne.s32.totalorder %s57, %s73
      %p75 = scmp.eq.s32.totalorder %s35, 0
      %p76 = por %p74, %p75
      %s77 = ssub.s32 %s36, %s48
      %p78 = scmp.eq.s32.totalorder %s77, 0
      %s80 = sadd.s32 %s79, 1
      %s81 = scalar_select %p78, %s79, %s80
      %p84 = pneg %p78
      %p85 = scmp.eq.s32.totalorder %s29, 1
      %p86 = por %p84, %p85
      %p87 = scmp.ne.s32.totalorder %s79, %s82
      %p88 = scmp.eq.s32.totalorder %s29, 0
      %p89 = por %p87, %p88
      %p90 = scmp.ne.s32.totalorder %s79, %s82
      %p91 = scmp.eq.s32.totalorder %s34, 1
      %p92 = por %p90, %p91
      %p93 = scmp.ne.s32.totalorder %s82, %s83
      %p94 = scmp.eq.s32.totalorder %s34, 0
      %p95 = por %p93, %p94
      %p96 = scmp.ne.s32.totalorder %s82, %s83
      %p97 = scmp.eq.s32.totalorder %s35, 1
      %p98 = por %p96, %p97
      %p100 = scmp.ne.s32.totalorder %s83, %s99
      %p101 = scmp.eq.s32.totalorder %s35, 0
      %p102 = por %p100, %p101
      %s103 = ssub.s32 %s36, %s48
      %p104 = scmp.eq.s32.totalorder %s103, 0
      %s106 = sadd.s32 %s105, 1
      %s107 = scalar_select %p104, %s105, %s106
      %p110 = pneg %p104
      %p111 = scmp.eq.s32.totalorder %s29, 1
      %p112 = por %p110, %p111
      %p113 = scmp.ne.s32.totalorder %s105, %s108
      %p114 = scmp.eq.s32.totalorder %s29, 0
      %p115 = por %p113, %p114
      %p116 = scmp.ne.s32.totalorder %s105, %s108
      %p117 = scmp.eq.s32.totalorder %s34, 1
      %p118 = por %p116, %p117
      %p119 = scmp.ne.s32.totalorder %s108, %s109
      %p120 = scmp.eq.s32.totalorder %s34, 0
      %p121 = por %p119, %p120
      %p122 = scmp.ne.s32.totalorder %s108, %s109
      %p123 = scmp.eq.s32.totalorder %s35, 1
      %p124 = por %p122, %p123
      %p126 = scmp.ne.s32.totalorder %s109, %s125
      %p127 = scmp.eq.s32.totalorder %s35, 0
      %p128 = por %p126, %p127
      %s130 = sadd.s32 %s129, 1
      %p133 = scmp.eq.s32.totalorder %s29, 1
      %p134 = scmp.ne.s32.totalorder %s129, %s131
      %p135 = scmp.eq.s32.totalorder %s29, 0
      %p136 = por %p134, %p135
      %p137 = scmp.ne.s32.totalorder %s129, %s131
      %p138 = scmp.eq.s32.totalorder %s34, 1
      %p139 = por %p137, %p138
      %p140 = scmp.ne.s32.totalorder %s131, %s132
      %p141 = scmp.eq.s32.totalorder %s34, 0
      %p142 = por %p140, %p141
      %p143 = scmp.ne.s32.totalorder %s131, %s132
      %p144 = scmp.eq.s32.totalorder %s35, 1
      %p145 = por %p143, %p144
      %p147 = scmp.ne.s32.totalorder %s132, %s146
      %p148 = scmp.eq.s32.totalorder %s35, 0
      %p149 = por %p147, %p148
      %s151 = sadd.s32 %s150, 1
      %p154 = scmp.eq.s32.totalorder %s29, 1
      %p155 = scmp.ne.s32.totalorder %s150, %s152
      %p156 = scmp.eq.s32.totalorder %s29, 0
      %p157 = por %p155, %p156
      %p158 = scmp.ne.s32.totalorder %s150, %s152
      %p159 = scmp.eq.s32.totalorder %s34, 1
      %p160 = por %p158, %p159
      %p161 = scmp.ne.s32.totalorder %s152, %s153
      %p162 = scmp.eq.s32.totalorder %s34, 0
      %p163 = por %p161, %p162
      %p164 = scmp.ne.s32.totalorder %s152, %s153
      %p165 = scmp.eq.s32.totalorder %s35, 1
      %p166 = por %p164, %p165
      %p168 = scmp.ne.s32.totalorder %s153, %s167
      %p169 = scmp.eq.s32.totalorder %s35, 0
      %p170 = por %p168, %p169
      %s172 = sadd.s32 %s171, 1
      %p175 = scmp.eq.s32.totalorder %s29, 1
      %p176 = scmp.ne.s32.totalorder %s171, %s173
      %p177 = scmp.eq.s32.totalorder %s29, 0
      %p178 = por %p176, %p177
      %p179 = scmp.ne.s32.totalorder %s171, %s173
      %p180 = scmp.eq.s32.totalorder %s34, 1
      %p181 = por %p179, %p180
      %p182 = scmp.ne.s32.totalorder %s173, %s174
      %p183 = scmp.eq.s32.totalorder %s34, 0
      %p184 = por %p182, %p183
      %p185 = scmp.ne.s32.totalorder %s173, %s174
      %p186 = scmp.eq.s32.totalorder %s35, 1
      %p187 = por %p185, %p186
      %p189 = scmp.ne.s32.totalorder %s174, %s188
      %p190 = scmp.eq.s32.totalorder %s35, 0
      %p191 = por %p189, %p190
      %s193 = sadd.s32 %s192, 1
      %p196 = scmp.eq.s32.totalorder %s29, 1
      %p197 = scmp.ne.s32.totalorder %s192, %s194
      %p198 = scmp.eq.s32.totalorder %s29, 0
      %p199 = por %p197, %p198
      %p200 = scmp.ne.s32.totalorder %s192, %s194
      %p201 = scmp.eq.s32.totalorder %s34, 1
      %p202 = por %p200, %p201
      %p203 = scmp.ne.s32.totalorder %s194, %s195
      %p204 = scmp.eq.s32.totalorder %s34, 0
      %p205 = por %p203, %p204
      %p206 = scmp.ne.s32.totalorder %s194, %s195
      %p207 = scmp.eq.s32.totalorder %s35, 1
      %p208 = por %p206, %p207
      %p210 = scmp.ne.s32.totalorder %s195, %s209
      %p211 = scmp.eq.s32.totalorder %s35, 0
      %p212 = por %p210, %p211
      %s214 = sadd.s32 %s213, 1
      %p217 = scmp.eq.s32.totalorder %s29, 1
      %p218 = scmp.ne.s32.totalorder %s213, %s215
      %p219 = scmp.eq.s32.totalorder %s29, 0
      %p220 = por %p218, %p219
      %p221 = scmp.ne.s32.totalorder %s213, %s215
      %p222 = scmp.eq.s32.totalorder %s34, 1
      %p223 = por %p221, %p222
      %p224 = scmp.ne.s32.totalorder %s215, %s216
      %p225 = scmp.eq.s32.totalorder %s34, 0
      %p226 = por %p224, %p225
      %p227 = scmp.ne.s32.totalorder %s215, %s216
      %p228 = scmp.eq.s32.totalorder %s35, 1
      %p229 = por %p227, %p228
      %p231 = scmp.ne.s32.totalorder %s216, %s230
      %p232 = scmp.eq.s32.totalorder %s35, 0
      %p233 = por %p231, %p232
      %s235 = sadd.s32 %s234, 1
      %p238 = scmp.eq.s32.totalorder %s29, 1
      %p239 = scmp.ne.s32.totalorder %s234, %s236
      %p240 = scmp.eq.s32.totalorder %s29, 0
      %p241 = por %p239, %p240
      %p242 = scmp.ne.s32.totalorder %s234, %s236
      %p243 = scmp.eq.s32.totalorder %s34, 1
      %p244 = por %p242, %p243
      %p245 = scmp.ne.s32.totalorder %s236, %s237
      %p246 = scmp.eq.s32.totalorder %s34, 0
      %p247 = por %p245, %p246
      %p248 = scmp.ne.s32.totalorder %s236, %s237
      %p249 = scmp.eq.s32.totalorder %s35, 1
      %p250 = por %p248, %p249
      %p252 = scmp.ne.s32.totalorder %s237, %s251
      %p253 = scmp.eq.s32.totalorder %s35, 0
      %p254 = por %p252, %p253
      %s256 = sadd.s32 %s255, 1
      %p259 = scmp.eq.s32.totalorder %s29, 1
      %p260 = scmp.ne.s32.totalorder %s255, %s257
      %p261 = scmp.eq.s32.totalorder %s29, 0
      %p262 = por %p260, %p261
      %p263 = scmp.ne.s32.totalorder %s255, %s257
      %p264 = scmp.eq.s32.totalorder %s34, 1
      %p265 = por %p263, %p264
      %p266 = scmp.ne.s32.totalorder %s257, %s258
      %p267 = scmp.eq.s32.totalorder %s34, 0
      %p268 = por %p266, %p267
      %p269 = scmp.ne.s32.totalorder %s257, %s258
      %p270 = scmp.eq.s32.totalorder %s35, 1
      %p271 = por %p269, %p270
      %p273 = scmp.ne.s32.totalorder %s258, %s272
      %p274 = scmp.eq.s32.totalorder %s35, 0
      %p275 = por %p273, %p274
      %s277 = sadd.s32 %s276, 1
      %p280 = scmp.eq.s32.totalorder %s29, 1
      %p281 = scmp.ne.s32.totalorder %s276, %s278
      %p282 = scmp.eq.s32.totalorder %s29, 0
      %p283 = por %p281, %p282
      %p284 = scmp.ne.s32.totalorder %s276, %s278
      %p285 = scmp.eq.s32.totalorder %s34, 1
      %p286 = por %p284, %p285
      %p287 = scmp.ne.s32.totalorder %s278, %s279
      %p288 = scmp.eq.s32.totalorder %s34, 0
      %p289 = por %p287, %p288
      %p290 = scmp.ne.s32.totalorder %s278, %s279
      %p291 = scmp.eq.s32.totalorder %s35, 1
      %p292 = por %p290, %p291
      %p294 = scmp.ne.s32.totalorder %s279, %s293
      %p295 = scmp.eq.s32.totalorder %s35, 0
      %p296 = por %p294, %p295
      %s297 = ssub.s32 %s36, %s48
      %s298 = ssub.s32 %s37, %s44
      %s299 = sor.u32 %s297, %s298
      %p300 = scmp.eq.s32.totalorder %s299, 0
      %s302 = sadd.s32 %s301, 1
      %s303 = scalar_select %p300, %s301, %s302
      %p306 = pneg %p300
      %p307 = scmp.eq.s32.totalorder %s29, 1
      %p308 = por %p306, %p307
      %p309 = scmp.ne.s32.totalorder %s301, %s304
      %p310 = scmp.eq.s32.totalorder %s29, 0
      %p311 = por %p309, %p310
      %p312 = scmp.ne.s32.totalorder %s301, %s304
      %p313 = scmp.eq.s32.totalorder %s34, 1
      %p314 = por %p312, %p313
      %p315 = scmp.ne.s32.totalorder %s304, %s305
      %p316 = scmp.eq.s32.totalorder %s34, 0
      %p317 = por %p315, %p316
      %p318 = scmp.ne.s32.totalorder %s304, %s305
      %p319 = scmp.eq.s32.totalorder %s35, 1
      %p320 = por %p318, %p319
      %p322 = scmp.ne.s32.totalorder %s305, %s321
      %p323 = scmp.eq.s32.totalorder %s35, 0
      %p324 = por %p322, %p323
      %p325 = scmp.le.s32.totalorder 1, %s29
      %p326 = scmp.lt.s32.totalorder %s29, 3
      %p327 = pnand %p325, %p326
      %p328 = pneg %p327
      // Predicated region
      $region9: #{tpu_custom_call.1} parent=5 // pred_check
        _
      $region10: #{tpu_custom_call.1} parent=5 // pred_check_branch
        %330 = sbr.rel (%p327) target = $region12
      $region11: #{tpu_custom_call.1} parent=5 // pred_region
        %s331 = ssub.s32 %s29, 1
        // Predicated region
        $region13: #{tpu_custom_call.1} parent=11 // pred_check
          %p332 = pneg %p142
        $region14: #{tpu_custom_call.1} parent=11 // pred_check_branch
          %334 = sbr.rel (%p332) target = $region16
        $region15: #{tpu_custom_call.1} parent=11 // pred_region
          %s336 = ssub.s32 256, 256
          %337 = vsyncadd [#allocation11], %s336
          %s338 = sshll.u32 [#allocation10], 4
          %s339 = int_to_ptr.vmem [resolvable:$true] %s338
          %344 = dma.hbm_to_vmem [thread:$0]  %s3, 256, %s339, [#allocation11], 64, 64, 4
        $region16: #{tpu_custom_call.1} parent=11 // pred_fallthru
          _
        // Predicated region
        $region17: #{tpu_custom_call.1} parent=11 // pred_check
          %p345 = pneg %p163
        $region18: #{tpu_custom_call.1} parent=11 // pred_check_branch
          %347 = sbr.rel (%p345) target = $region20
        $region19: #{tpu_custom_call.1} parent=11 // pred_region
          %s349 = ssub.s32 16, 16
          %350 = vsyncadd [#allocation11], %s349
          %s352 = sshll.u32 [#allocation12], 4
          %s353 = int_to_ptr.vmem [resolvable:$true] %s352
          %355 = dma.hbm_to_vmem [thread:$0]  %s4, 16, %s353, [#allocation11]
        $region20: #{tpu_custom_call.1} parent=11 // pred_fallthru
          _
        // Predicated region
        $region21: #{tpu_custom_call.1} parent=11 // pred_check
          %p356 = pneg %p184
        $region22: #{tpu_custom_call.1} parent=11 // pred_check_branch
          %358 = sbr.rel (%p356) target = $region24
        $region23: #{tpu_custom_call.1} parent=11 // pred_region
          %s360 = ssub.s32 256, 256
          %361 = vsyncadd [#allocation14], %s360
          %s362 = sshll.u32 [#allocation13], 4
          %s363 = int_to_ptr.vmem [resolvable:$true] %s362
          %368 = dma.hbm_to_vmem [thread:$0]  %s5, 256, %s363, [#allocation14], 64, 64, 4
        $region24: #{tpu_custom_call.1} parent=11 // pred_fallthru
          _
        // Predicated region
        $region25: #{tpu_custom_call.1} parent=11 // pred_check
          %p369 = pneg %p205
        $region26: #{tpu_custom_call.1} parent=11 // pred_check_branch
          %371 = sbr.rel (%p369) target = $region28
        $region27: #{tpu_custom_call.1} parent=11 // pred_region
          %s373 = ssub.s32 16, 16
          %374 = vsyncadd [#allocation14], %s373
          %s376 = sshll.u32 [#allocation15], 4
          %s377 = int_to_ptr.vmem [resolvable:$true] %s376
          %379 = dma.hbm_to_vmem [thread:$0]  %s6, 16, %s377, [#allocation14]
        $region28: #{tpu_custom_call.1} parent=11 // pred_fallthru
          _
        // Predicated region
        $region29: #{tpu_custom_call.1} parent=11 // pred_check
          %p380 = pneg %p226
        $region30: #{tpu_custom_call.1} parent=11 // pred_check_branch
          %382 = sbr.rel (%p380) target = $region32
        $region31: #{tpu_custom_call.1} parent=11 // pred_region
          %s384 = ssub.s32 256, 256
          %385 = vsyncadd [#allocation17], %s384
          %s386 = sshll.u32 [#allocation16], 4
          %s387 = int_to_ptr.vmem [resolvable:$true] %s386
          %392 = dma.hbm_to_vmem [thread:$0]  %s7, 256, %s387, [#allocation17], 64, 64, 4
        $region32: #{tpu_custom_call.1} parent=11 // pred_fallthru
          _
        // Predicated region
        $region33: #{tpu_custom_call.1} parent=11 // pred_check
          %p393 = pneg %p247
        $region34: #{tpu_custom_call.1} parent=11 // pred_check_branch
          %395 = sbr.rel (%p393) target = $region36
        $region35: #{tpu_custom_call.1} parent=11 // pred_region
          %s397 = ssub.s32 16, 16
          %398 = vsyncadd [#allocation17], %s397
          %s400 = sshll.u32 [#allocation18], 4
          %s401 = int_to_ptr.vmem [resolvable:$true] %s400
          %403 = dma.hbm_to_vmem [thread:$0]  %s8, 16, %s401, [#allocation17]
        $region36: #{tpu_custom_call.1} parent=11 // pred_fallthru
          _
        // Predicated region
        $region37: #{tpu_custom_call.1} parent=11 // pred_check
          %p404 = pneg %p268
        $region38: #{tpu_custom_call.1} parent=11 // pred_check_branch
          %406 = sbr.rel (%p404) target = $region40
        $region39: #{tpu_custom_call.1} parent=11 // pred_region
          _
        $region40: #{tpu_custom_call.1} parent=11 // pred_fallthru
          _
        // Predicated region
        $region41: #{tpu_custom_call.1} parent=11 // pred_check
          %p407 = pneg %p289
        $region42: #{tpu_custom_call.1} parent=11 // pred_check_branch
          %409 = sbr.rel (%p407) target = $region44
        $region43: #{tpu_custom_call.1} parent=11 // pred_region
          _
        $region44: #{tpu_custom_call.1} parent=11 // pred_fallthru
          _
      $region12: #{tpu_custom_call.1} parent=5 // pred_fallthru
        _
      %p410 = scmp.lt.s32.totalorder %s29, 2
      // Predicated region
      $region45: #{tpu_custom_call.1} parent=5 // pred_check
        %p411 = pneg %p410
      $region46: #{tpu_custom_call.1} parent=5 // pred_check_branch
        %413 = sbr.rel (%p411) target = $region48
      $region47: #{tpu_custom_call.1} parent=5 // pred_region
        // Predicated region
        $region49: #{tpu_custom_call.1} parent=47 // pred_check
          %p414 = pneg %p63
        $region50: #{tpu_custom_call.1} parent=47 // pred_check_branch
          %416 = sbr.rel (%p414) target = $region52
        $region51: #{tpu_custom_call.1} parent=47 // pred_region
          %s417 = sand.u32 %s53, 1
          %s418 = scalar_lea.sflag [#allocation5], %s417
          %s419 = sand.u32 %s53, 1
          %s420 = smul.addr %s419, 4
          %s421 = scalar_lea.vmem [#allocation4], %s420
          %s423 = ssub.s32 64, 64
          %424 = vsyncadd %s418, %s423
          %s425 = sadd.s32 %s37, %s36
          %s426 = smul.addr %s425, 64
          %s427 = scalar_lea.hbm %s0, %s426
          %s429 = sshll.u32 %s421, 4
          %s430 = int_to_ptr.vmem [resolvable:$true] %s429
          %432 = dma.hbm_to_vmem [thread:$0]  %s427, 64, %s430, %s418
        $region52: #{tpu_custom_call.1} parent=47 // pred_fallthru
          _
        // Predicated region
        $region53: #{tpu_custom_call.1} parent=47 // pred_check
          %p433 = pneg %p89
        $region54: #{tpu_custom_call.1} parent=47 // pred_check_branch
          %435 = sbr.rel (%p433) target = $region56
        $region55: #{tpu_custom_call.1} parent=47 // pred_region
          %s436 = sand.u32 %s29, 1
          %s437 = scalar_lea.sflag [#allocation8], %s436
          %s438 = sand.u32 %s79, 1
          %s439 = smul.addr %s438, 4
          %s440 = scalar_lea.vmem [#allocation7], %s439
          %s442 = ssub.s32 64, 64
          %443 = vsyncadd %s437, %s442
          %s444 = smul.addr %s36, 64
          %s445 = scalar_lea.hbm %s1, %s444
          %s447 = sshll.u32 %s440, 4
          %s448 = int_to_ptr.vmem [resolvable:$true] %s447
          %450 = dma.hbm_to_vmem [thread:$0]  %s445, 64, %s448, %s437
        $region56: #{tpu_custom_call.1} parent=47 // pred_fallthru
          _
        // Predicated region
        $region57: #{tpu_custom_call.1} parent=47 // pred_check
          %p451 = pneg %p115
        $region58: #{tpu_custom_call.1} parent=47 // pred_check_branch
          %453 = sbr.rel (%p451) target = $region60
        $region59: #{tpu_custom_call.1} parent=47 // pred_region
          %s454 = sand.u32 %s29, 1
          %s455 = scalar_lea.sflag [#allocation8], %s454
          %s456 = sand.u32 %s105, 1
          %s457 = smul.addr %s456, 4
          %s458 = scalar_lea.vmem [#allocation9], %s457
          %s460 = ssub.s32 64, 64
          %461 = vsyncadd %s455, %s460
          %s462 = smul.addr %s36, 64
          %s463 = scalar_lea.hbm %s2, %s462
          %s465 = sshll.u32 %s458, 4
          %s466 = int_to_ptr.vmem [resolvable:$true] %s465
          %468 = dma.hbm_to_vmem [thread:$0]  %s463, 64, %s466, %s455
        $region60: #{tpu_custom_call.1} parent=47 // pred_fallthru
          _
      $region48: #{tpu_custom_call.1} parent=5 // pred_fallthru
        _
      %p469 = scmp.le.s32.totalorder 1, %s29
      %p470 = scmp.lt.s32.totalorder %s29, 3
      %p471 = pnand %p469, %p470
      %p472 = pneg %p471
      // Predicated region
      $region61: #{tpu_custom_call.1} parent=5 // pred_check
        _
      $region62: #{tpu_custom_call.1} parent=5 // pred_check_branch
        %474 = sbr.rel (%p471) target = $region64
      $region63: #{tpu_custom_call.1} parent=5 // pred_region
        %s475 = ssub.s32 %s29, 1
        %s476 = sand.u32 %s56, 1
        %s477 = scalar_lea.sflag [#allocation5], %s476
        %s478 = sand.u32 %s56, 1
        %s479 = smul.addr %s478, 4
        %s480 = scalar_lea.vmem [#allocation4], %s479
        // Predicated region
        $region65: #{tpu_custom_call.1} parent=63 // pred_check
          %p481 = pneg %p69
        $region66: #{tpu_custom_call.1} parent=63 // pred_check_branch
          %483 = sbr.rel (%p481) target = $region68
        $region67: #{tpu_custom_call.1} parent=63 // pred_region
          %484 = dma.done %s477, 64
        $region68: #{tpu_custom_call.1} parent=63 // pred_fallthru
          _
        %s485 = sand.u32 %s34, 1
        %s486 = scalar_lea.sflag [#allocation8], %s485
        %s487 = sand.u32 %s82, 1
        %s488 = smul.addr %s487, 4
        %s489 = scalar_lea.vmem [#allocation7], %s488
        // Predicated region
        $region69: #{tpu_custom_call.1} parent=63 // pred_check
          %p490 = pneg %p95
        $region70: #{tpu_custom_call.1} parent=63 // pred_check_branch
          %492 = sbr.rel (%p490) target = $region72
        $region71: #{tpu_custom_call.1} parent=63 // pred_region
          %493 = dma.done %s486, 64
        $region72: #{tpu_custom_call.1} parent=63 // pred_fallthru
          _
        %s494 = sand.u32 %s34, 1
        %s495 = scalar_lea.sflag [#allocation8], %s494
        %s496 = sand.u32 %s108, 1
        %s497 = smul.addr %s496, 4
        %s498 = scalar_lea.vmem [#allocation9], %s497
        // Predicated region
        $region73: #{tpu_custom_call.1} parent=63 // pred_check
          %p499 = pneg %p121
        $region74: #{tpu_custom_call.1} parent=63 // pred_check_branch
          %501 = sbr.rel (%p499) target = $region76
        $region75: #{tpu_custom_call.1} parent=63 // pred_region
          %502 = dma.done %s495, 64
        $region76: #{tpu_custom_call.1} parent=63 // pred_fallthru
          _
        // Predicated region
        $region77: #{tpu_custom_call.1} parent=63 // pred_check
          %p503 = pneg %p142
        $region78: #{tpu_custom_call.1} parent=63 // pred_check_branch
          %505 = sbr.rel (%p503) target = $region80
        $region79: #{tpu_custom_call.1} parent=63 // pred_region
          %506 = dma.done [#allocation11], 256
        $region80: #{tpu_custom_call.1} parent=63 // pred_fallthru
          _
        // Predicated region
        $region81: #{tpu_custom_call.1} parent=63 // pred_check
          %p507 = pneg %p163
        $region82: #{tpu_custom_call.1} parent=63 // pred_check_branch
          %509 = sbr.rel (%p507) target = $region84
        $region83: #{tpu_custom_call.1} parent=63 // pred_region
          %510 = dma.done [#allocation11], 16
        $region84: #{tpu_custom_call.1} parent=63 // pred_fallthru
          _
        // Predicated region
        $region85: #{tpu_custom_call.1} parent=63 // pred_check
          %p511 = pneg %p184
        $region86: #{tpu_custom_call.1} parent=63 // pred_check_branch
          %513 = sbr.rel (%p511) target = $region88
        $region87: #{tpu_custom_call.1} parent=63 // pred_region
          %514 = dma.done [#allocation14], 256
        $region88: #{tpu_custom_call.1} parent=63 // pred_fallthru
          _
        // Predicated region
        $region89: #{tpu_custom_call.1} parent=63 // pred_check
          %p515 = pneg %p205
        $region90: #{tpu_custom_call.1} parent=63 // pred_check_branch
          %517 = sbr.rel (%p515) target = $region92
        $region91: #{tpu_custom_call.1} parent=63 // pred_region
          %518 = dma.done [#allocation14], 16
        $region92: #{tpu_custom_call.1} parent=63 // pred_fallthru
          _
        // Predicated region
        $region93: #{tpu_custom_call.1} parent=63 // pred_check
          %p519 = pneg %p226
        $region94: #{tpu_custom_call.1} parent=63 // pred_check_branch
          %521 = sbr.rel (%p519) target = $region96
        $region95: #{tpu_custom_call.1} parent=63 // pred_region
          %522 = dma.done [#allocation17], 256
        $region96: #{tpu_custom_call.1} parent=63 // pred_fallthru
          _
        // Predicated region
        $region97: #{tpu_custom_call.1} parent=63 // pred_check
          %p523 = pneg %p247
        $region98: #{tpu_custom_call.1} parent=63 // pred_check_branch
          %525 = sbr.rel (%p523) target = $region100
        $region99: #{tpu_custom_call.1} parent=63 // pred_region
          %526 = dma.done [#allocation17], 16
        $region100: #{tpu_custom_call.1} parent=63 // pred_fallthru
          _
        %s527 = sand.u32 %s56, 1
        %s528 = scalar_lea.sflag [#allocation5], %s527
        %s529 = sand.u32 %s56, 1
        %s530 = smul.addr %s529, 4
        %s531 = scalar_lea.vmem [#allocation4], %s530
        %p532 = pneg %p69
        %p533 = pneg %p66
        %s534 = sand.u32 %s34, 1
        %s535 = scalar_lea.sflag [#allocation8], %s534
        %s536 = sand.u32 %s82, 1
        %s537 = smul.addr %s536, 4
        %s538 = scalar_lea.vmem [#allocation7], %s537
        %p539 = pneg %p95
        %p540 = pneg %p92
        %s541 = sand.u32 %s34, 1
        %s542 = scalar_lea.sflag [#allocation8], %s541
        %s543 = sand.u32 %s108, 1
        %s544 = smul.addr %s543, 4
        %s545 = scalar_lea.vmem [#allocation9], %s544
        %p546 = pneg %p121
        %p547 = pneg %p118
        %p548 = pneg %p142
        %p549 = pneg %p139
        %p550 = pneg %p163
        %p551 = pneg %p160
        %p552 = pneg %p184
        %p553 = pneg %p181
        %p554 = pneg %p205
        %p555 = pneg %p202
        %p556 = pneg %p226
        %p557 = pneg %p223
        %p558 = pneg %p247
        %p559 = pneg %p244
        %p560 = pneg %p268
        %p561 = pneg %p265
        %p562 = pneg %p289
        %p563 = pneg %p286
        %p564 = pneg %p317
        %p565 = pneg %p314
        %s566 = sand.u32 %s304, 1
        %s567 = scalar_lea.sflag [#allocation6], %s566
        %s568 = sand.u32 %s304, 1
        %s569 = smul.addr %s568, 8
        %s570 = scalar_lea.vmem [#allocation19], %s569
        %p572 = scmp.eq.s32.totalorder %s39, 0
        // Predicated region
        $region101: #{tpu_custom_call.1} parent=63 // pred_check
          %p573 = pneg %p572
        $region102: #{tpu_custom_call.1} parent=63 // pred_check_branch
          %575 = sbr.rel (%p573) target = $region104
        $region103: #{tpu_custom_call.1} parent=63 // pred_region
          %v576 = vld [vmem:[%s489] sm:$0xf]
          %v577 = vld [vmem:[%s498] sm:$0xf]
          %v578 = vld [vmem:[#allocation13] sm:$0xf]
          %v579 = vld [vmem:[#allocation13 + $0x4] sm:$0xf]
          %v580 = vld [vmem:[#allocation13 + $0x8] sm:$0xf]
          %v581 = vld [vmem:[#allocation13 + $0xc] sm:$0xf]
          %v582 = vld [vmem:[#allocation15] sm:$0x1]
          %v584 = vlaneseq
          %v585 = vshrl.u32 %v584, 7
          %v586 = vsub.s32 0, %v585
          %v587 = vrot.slane %v582, %v586
          %v593 = vunpack.c.l.b16 %v578
          %v594 = vunpack.c.l.b16 %v579
          %v595 = vunpack.c.l.b16 %v580
          %v596 = vunpack.c.l.b16 %v581
          %v597 = vpack.c.b16 %v594, %v593
          %v598 = vpack.c.b16 %v596, %v595
          %vm601 = vcmask 261120
          %v603 = vsel %vm601, %v576, 0
          %605 = vmatprep.subr.bf16.mxu0 0
          %606 = vmatpush1.bf16.msra.mxu0 0
          %607 = vmatprep.subr.bf16.mxu0 0
          %608 = vmatpush1.bf16.msra.mxu0 0
          %609 = vmatprep.subr.bf16.mxu0 0
          %610 = vmatpush1.bf16.msra.mxu0 0
          %611 = vmatprep.subr.bf16.mxu0 0
          %612 = vmatpush1.bf16.msra.mxu0 0
          %613 = vmatprep.subr.bf16.mxu0 0
          %614 = vmatpush1.bf16.msra.mxu0 0
          %615 = vmatprep.subr.bf16.mxu0 0
          %616 = vmatpush1.bf16.msra.mxu0 0
          %617 = vmatprep.subr.bf16.mxu0 0
          %618 = vmatpush1.bf16.msra.mxu0 %v598
          %619 = vmatprep.subr.bf16.mxu0 0
          %620 = vmatpush1.bf16.msra.mxu0 %v597
          %621 = vmatprep.subr.bf16.mxu0 0
          %622 = vmatpush2.bf16.msra.mxu0 0
          %623 = vmatprep.subr.bf16.mxu0 0
          %624 = vmatpush2.bf16.msra.mxu0 0
          %625 = vmatprep.subr.bf16.mxu0 0
          %626 = vmatpush2.bf16.msra.mxu0 0
          %627 = vmatprep.subr.bf16.mxu0 0
          %628 = vmatpush2.bf16.msra.mxu0 0
          %629 = vmatprep.subr.bf16.mxu0 0
          %630 = vmatpush2.bf16.msra.mxu0 0
          %631 = vmatprep.subr.bf16.mxu0 0
          %632 = vmatpush2.bf16.msra.mxu0 0
          %633 = vmatprep.subr.bf16.mxu0 0
          %634 = vmatpush2.bf16.msra.mxu0 0
          %635 = vmatprep.subr.bf16.mxu0 0
          %636 = vmatpush2.bf16.msra.mxu0 0
          %637 = vmatprep.mubr.bf16.mxu0 0
          %638 = vmatmul.mubr.bf16.gmra.mxu0 %v603
          %v639 = vpop.f32.mrf.mxu0
          %v640 = vadd.f32 %v587, %v639
          %v641 = vpop.f32.mrf.mxu0
          %v642 = vpop.f32.mrf.mxu0
          %v643 = vpop.f32.mrf.mxu0
          %644 = vdwg.mxu0
          %v645 = vld [vmem:[#allocation16] sm:$0xf]
          %v646 = vld [vmem:[#allocation16 + $0x4] sm:$0xf]
          %v647 = vld [vmem:[#allocation16 + $0x8] sm:$0xf]
          %v648 = vld [vmem:[#allocation16 + $0xc] sm:$0xf]
          %v649 = vld [vmem:[#allocation18] sm:$0x1]
          %v651 = vlaneseq
          %v652 = vshrl.u32 %v651, 7
          %v653 = vsub.s32 0, %v652
          %v654 = vrot.slane %v649, %v653
          %v660 = vunpack.c.l.b16 %v645
          %v661 = vunpack.c.l.b16 %v646
          %v662 = vunpack.c.l.b16 %v647
          %v663 = vunpack.c.l.b16 %v648
          %v664 = vpack.c.b16 %v661, %v660
          %v665 = vpack.c.b16 %v663, %v662
          %v669 = vsel %vm601, %v577, 0
          %671 = vmatprep.subr.bf16.mxu0 0
          %672 = vmatpush1.bf16.msra.mxu0 0
          %673 = vmatprep.subr.bf16.mxu0 0
          %674 = vmatpush1.bf16.msra.mxu0 0
          %675 = vmatprep.subr.bf16.mxu0 0
          %676 = vmatpush1.bf16.msra.mxu0 0
          %677 = vmatprep.subr.bf16.mxu0 0
          %678 = vmatpush1.bf16.msra.mxu0 0
          %679 = vmatprep.subr.bf16.mxu0 0
          %680 = vmatpush1.bf16.msra.mxu0 0
          %681 = vmatprep.subr.bf16.mxu0 0
          %682 = vmatpush1.bf16.msra.mxu0 0
          %683 = vmatprep.subr.bf16.mxu0 0
          %684 = vmatpush1.bf16.msra.mxu0 %v665
          %685 = vmatprep.subr.bf16.mxu0 0
          %686 = vmatpush1.bf16.msra.mxu0 %v664
          %687 = vmatprep.subr.bf16.mxu0 0
          %688 = vmatpush2.bf16.msra.mxu0 0
          %689 = vmatprep.subr.bf16.mxu0 0
          %690 = vmatpush2.bf16.msra.mxu0 0
          %691 = vmatprep.subr.bf16.mxu0 0
          %692 = vmatpush2.bf16.msra.mxu0 0
          %693 = vmatprep.subr.bf16.mxu0 0
          %694 = vmatpush2.bf16.msra.mxu0 0
          %695 = vmatprep.subr.bf16.mxu0 0
          %696 = vmatpush2.bf16.msra.mxu0 0
          %697 = vmatprep.subr.bf16.mxu0 0
          %698 = vmatpush2.bf16.msra.mxu0 0
          %699 = vmatprep.subr.bf16.mxu0 0
          %700 = vmatpush2.bf16.msra.mxu0 0
          %701 = vmatprep.subr.bf16.mxu0 0
          %702 = vmatpush2.bf16.msra.mxu0 0
          %703 = vmatprep.mubr.bf16.mxu0 0
          %704 = vmatmul.mubr.bf16.gmra.mxu0 %v669
          %v705 = vpop.f32.mrf.mxu0
          %v706 = vadd.f32 %v654, %v705
          %v707 = vpop.f32.mrf.mxu0
          %v708 = vpop.f32.mrf.mxu0
          %v709 = vpop.f32.mrf.mxu0
          %710 = vdwg.mxu0
          %v711 = vpack.c.bf16 %v640, %v640
          %vm712 = vcmask 257024
          %713 = vst.msk [vmem:[#allocation2] sm:$0xf] %vm712, %v711
          %v714 = vpack.c.bf16 %v706, %v706
          %715 = vst.msk [vmem:[#allocation3] sm:$0xf] %vm712, %v714
        $region104: #{tpu_custom_call.1} parent=63 // pred_fallthru
          _
        %v716 = vld [vmem:[%s480] sm:$0xf]
        %v717 = vld [vmem:[#allocation10] sm:$0xf]
        %v718 = vld [vmem:[#allocation10 + $0x4] sm:$0xf]
        %v719 = vld [vmem:[#allocation10 + $0x8] sm:$0xf]
        %v720 = vld [vmem:[#allocation10 + $0xc] sm:$0xf]
        %v721 = vld [vmem:[#allocation12] sm:$0x1]
        %v723 = vlaneseq
        %v724 = vshrl.u32 %v723, 7
        %v725 = vsub.s32 0, %v724
        %v726 = vrot.slane %v721, %v725
        %v732 = vunpack.c.l.b16 %v717
        %v733 = vunpack.c.l.b16 %v718
        %v734 = vunpack.c.l.b16 %v719
        %v735 = vunpack.c.l.b16 %v720
        %v736 = vpack.c.b16 %v733, %v732
        %v737 = vpack.c.b16 %v735, %v734
        %vm740 = vcmask 261120
        %v742 = vsel %vm740, %v716, 0
        %744 = vmatprep.subr.bf16.mxu0 0
        %745 = vmatpush1.bf16.msra.mxu0 0
        %746 = vmatprep.subr.bf16.mxu0 0
        %747 = vmatpush1.bf16.msra.mxu0 0
        %748 = vmatprep.subr.bf16.mxu0 0
        %749 = vmatpush1.bf16.msra.mxu0 0
        %750 = vmatprep.subr.bf16.mxu0 0
        %751 = vmatpush1.bf16.msra.mxu0 0
        %752 = vmatprep.subr.bf16.mxu0 0
        %753 = vmatpush1.bf16.msra.mxu0 0
        %754 = vmatprep.subr.bf16.mxu0 0
        %755 = vmatpush1.bf16.msra.mxu0 0
        %756 = vmatprep.subr.bf16.mxu0 0
        %757 = vmatpush1.bf16.msra.mxu0 %v737
        %758 = vmatprep.subr.bf16.mxu0 0
        %759 = vmatpush1.bf16.msra.mxu0 %v736
        %760 = vmatprep.subr.bf16.mxu0 0
        %761 = vmatpush2.bf16.msra.mxu0 0
        %762 = vmatprep.subr.bf16.mxu0 0
        %763 = vmatpush2.bf16.msra.mxu0 0
        %764 = vmatprep.subr.bf16.mxu0 0
        %765 = vmatpush2.bf16.msra.mxu0 0
        %766 = vmatprep.subr.bf16.mxu0 0
        %767 = vmatpush2.bf16.msra.mxu0 0
        %768 = vmatprep.subr.bf16.mxu0 0
        %769 = vmatpush2.bf16.msra.mxu0 0
        %770 = vmatprep.subr.bf16.mxu0 0
        %771 = vmatpush2.bf16.msra.mxu0 0
        %772 = vmatprep.subr.bf16.mxu0 0
        %773 = vmatpush2.bf16.msra.mxu0 0
        %774 = vmatprep.subr.bf16.mxu0 0
        %775 = vmatpush2.bf16.msra.mxu0 0
        %776 = vmatprep.mubr.bf16.mxu0 0
        %777 = vmatmul.mubr.bf16.gmra.mxu0 %v742
        %v778 = vpop.f32.mrf.mxu0
        %v779 = vadd.f32 %v726, %v778
        %v780 = vpop.f32.mrf.mxu0
        %v781 = vpop.f32.mrf.mxu0
        %v782 = vpop.f32.mrf.mxu0
        %783 = vdwg.mxu0
        %v784 = vpack.c.bf16 %v779, %v779
        %v785 = vld [vmem:[#allocation2] sm:$0xf]
        %v786 = vld [vmem:[#allocation3] sm:$0xf]
        %vm787 = vcmask 64512
        %v789 = vsel %vm787, %v784, 0
        %v792 = vsel %vm787, %v785, 0
        %794 = vmatprep.subr.bf16.mxu0 0
        %795 = vmatpush1.bf16.xpose.msra.mxu0 0
        %796 = vmatprep.subr.bf16.mxu0 0
        %797 = vmatpush1.bf16.xpose.msra.mxu0 0
        %798 = vmatprep.subr.bf16.mxu0 0
        %799 = vmatpush1.bf16.xpose.msra.mxu0 0
        %800 = vmatprep.subr.bf16.mxu0 0
        %801 = vmatpush1.bf16.xpose.msra.mxu0 0
        %802 = vmatprep.subr.bf16.mxu0 0
        %803 = vmatpush1.bf16.xpose.msra.mxu0 0
        %804 = vmatprep.subr.bf16.mxu0 0
        %805 = vmatpush1.bf16.xpose.msra.mxu0 0
        %806 = vmatprep.subr.bf16.mxu0 0
        %807 = vmatpush1.bf16.xpose.msra.mxu0 0
        %808 = vmatprep.subr.bf16.mxu0 0
        %809 = vmatpush1.bf16.xpose.msra.mxu0 %v792
        %810 = vmatprep.subr.bf16.mxu0 0
        %811 = vmatpush2.bf16.xpose.msra.mxu0 0
        %812 = vmatprep.subr.bf16.mxu0 0
        %813 = vmatpush2.bf16.xpose.msra.mxu0 0
        %814 = vmatprep.subr.bf16.mxu0 0
        %815 = vmatpush2.bf16.xpose.msra.mxu0 0
        %816 = vmatprep.subr.bf16.mxu0 0
        %817 = vmatpush2.bf16.xpose.msra.mxu0 0
        %818 = vmatprep.subr.bf16.mxu0 0
        %819 = vmatpush2.bf16.xpose.msra.mxu0 0
        %820 = vmatprep.subr.bf16.mxu0 0
        %821 = vmatpush2.bf16.xpose.msra.mxu0 0
        %822 = vmatprep.subr.bf16.mxu0 0
        %823 = vmatpush2.bf16.xpose.msra.mxu0 0
        %824 = vmatprep.subr.bf16.mxu0 0
        %825 = vmatpush2.bf16.xpose.msra.mxu0 0
        %826 = vmatprep.mubr.bf16.mxu0 0
        %827 = vmatmul.mubr.bf16.gmra.mxu0 %v789
        %v828 = vpop.f32.mrf.mxu0
        %v829 = vadd.f32 0.0, %v828
        %v830 = vpop.f32.mrf.mxu0
        %v831 = vpop.f32.mrf.mxu0
        %v832 = vpop.f32.mrf.mxu0
        %833 = vdwg.mxu0
        %v834 = vsel %vm787, %v829, -inf
        %835 = vmax.xlane.f32.xlu0 %v834
        %v836 = vpop.xlane.xlu0 %835
        %v837 = vsub.f32 %v829, %v836
        %v838 = vmul.f32 %v837, 1.442695
        %v839 = vpow.pop %v838
        %v840 = vsel %vm787, %v839, 0.0
        %841 = vadd.xlane.f32.xlu0 %v840
        %v842 = vpop.xlane.xlu0 %841
        %v843 = vrcp.pop %v842
        %v844 = vmul.f32 %v839, %v843
        %v845 = vpack.c.bf16 %v844, %v844
        %v847 = vsel %vm787, %v845, 0
        %vm849 = vcmask 1043456
        %v851 = vsel %vm849, %v786, 0
        %853 = vmatprep.subr.bf16.mxu0 0
        %854 = vmatpush1.bf16.msra.mxu0 0
        %855 = vmatprep.subr.bf16.mxu0 0
        %856 = vmatpush1.bf16.msra.mxu0 0
        %857 = vmatprep.subr.bf16.mxu0 0
        %858 = vmatpush1.bf16.msra.mxu0 0
        %859 = vmatprep.subr.bf16.mxu0 0
        %860 = vmatpush1.bf16.msra.mxu0 0
        %861 = vmatprep.subr.bf16.mxu0 0
        %862 = vmatpush1.bf16.msra.mxu0 0
        %863 = vmatprep.subr.bf16.mxu0 0
        %864 = vmatpush1.bf16.msra.mxu0 0
        %865 = vmatprep.subr.bf16.mxu0 0
        %866 = vmatpush1.bf16.msra.mxu0 0
        %867 = vmatprep.subr.bf16.mxu0 0
        %868 = vmatpush1.bf16.msra.mxu0 %v851
        %869 = vmatprep.subr.bf16.mxu0 0
        %870 = vmatpush2.bf16.msra.mxu0 0
        %871 = vmatprep.subr.bf16.mxu0 0
        %872 = vmatpush2.bf16.msra.mxu0 0
        %873 = vmatprep.subr.bf16.mxu0 0
        %874 = vmatpush2.bf16.msra.mxu0 0
        %875 = vmatprep.subr.bf16.mxu0 0
        %876 = vmatpush2.bf16.msra.mxu0 0
        %877 = vmatprep.subr.bf16.mxu0 0
        %878 = vmatpush2.bf16.msra.mxu0 0
        %879 = vmatprep.subr.bf16.mxu0 0
        %880 = vmatpush2.bf16.msra.mxu0 0
        %881 = vmatprep.subr.bf16.mxu0 0
        %882 = vmatpush2.bf16.msra.mxu0 0
        %883 = vmatprep.subr.bf16.mxu0 0
        %884 = vmatpush2.bf16.msra.mxu0 0
        %885 = vmatprep.mubr.bf16.mxu0 0
        %886 = vmatmul.mubr.bf16.gmra.mxu0 %v847
        %v887 = vpop.f32.mrf.mxu0
        %v888 = vadd.f32 0.0, %v887
        %v889 = vpop.f32.mrf.mxu0
        %v890 = vpop.f32.mrf.mxu0
        %v891 = vpop.f32.mrf.mxu0
        %892 = vdwg.mxu0
        %v893 = vpack.c.bf16 %v888, %v888
        %v894 = vld [vmem:[%s9] sm:$0xf]
        %896 = vrot.lane.b32.xlu0 %v784, 120
        %v897 = vpop.permute.xlu0 %896
        %v899 = vunpack.c.l.b16 %v785
        %v900 = vpack.c.b16 %v899, %v899
        %901 = vrot.lane.b32.xlu0 %v900, 120
        %v902 = vpop.permute.xlu0 %901
        %v904 = vsel %vm787, %v897, 0
        %v907 = vsel %vm787, %v902, 0
        %909 = vmatprep.subr.bf16.mxu0 0
        %910 = vmatpush1.bf16.xpose.msra.mxu0 0
        %911 = vmatprep.subr.bf16.mxu0 0
        %912 = vmatpush1.bf16.xpose.msra.mxu0 0
        %913 = vmatprep.subr.bf16.mxu0 0
        %914 = vmatpush1.bf16.xpose.msra.mxu0 0
        %915 = vmatprep.subr.bf16.mxu0 0
        %916 = vmatpush1.bf16.xpose.msra.mxu0 0
        %917 = vmatprep.subr.bf16.mxu0 0
        %918 = vmatpush1.bf16.xpose.msra.mxu0 0
        %919 = vmatprep.subr.bf16.mxu0 0
        %920 = vmatpush1.bf16.xpose.msra.mxu0 0
        %921 = vmatprep.subr.bf16.mxu0 0
        %922 = vmatpush1.bf16.xpose.msra.mxu0 0
        %923 = vmatprep.subr.bf16.mxu0 0
        %924 = vmatpush1.bf16.xpose.msra.mxu0 %v907
        %925 = vmatprep.subr.bf16.mxu0 0
        %926 = vmatpush2.bf16.xpose.msra.mxu0 0
        %927 = vmatprep.subr.bf16.mxu0 0
        %928 = vmatpush2.bf16.xpose.msra.mxu0 0
        %929 = vmatprep.subr.bf16.mxu0 0
        %930 = vmatpush2.bf16.xpose.msra.mxu0 0
        %931 = vmatprep.subr.bf16.mxu0 0
        %932 = vmatpush2.bf16.xpose.msra.mxu0 0
        %933 = vmatprep.subr.bf16.mxu0 0
        %934 = vmatpush2.bf16.xpose.msra.mxu0 0
        %935 = vmatprep.subr.bf16.mxu0 0
        %936 = vmatpush2.bf16.xpose.msra.mxu0 0
        %937 = vmatprep.subr.bf16.mxu0 0
        %938 = vmatpush2.bf16.xpose.msra.mxu0 0
        %939 = vmatprep.subr.bf16.mxu0 0
        %940 = vmatpush2.bf16.xpose.msra.mxu0 0
        %941 = vmatprep.mubr.bf16.mxu0 0
        %942 = vmatmul.mubr.bf16.gmra.mxu0 %v904
        %v943 = vpop.f32.mrf.mxu0
        %v944 = vadd.f32 0.0, %v943
        %v945 = vpop.f32.mrf.mxu0
        %v946 = vpop.f32.mrf.mxu0
        %v947 = vpop.f32.mrf.mxu0
        %948 = vdwg.mxu0
        %v949 = vsel %vm787, %v944, -inf
        %950 = vmax.xlane.f32.xlu0 %v949
        %v951 = vpop.xlane.xlu0 %950
        %v952 = vsub.f32 %v944, %v951
        %v953 = vmul.f32 %v952, 1.442695
        %v954 = vpow.pop %v953
        %v955 = vsel %vm787, %v954, 0.0
        %956 = vadd.xlane.f32.xlu0 %v955
        %v957 = vpop.xlane.xlu0 %956
        %v958 = vrcp.pop %v957
        %v959 = vmul.f32 %v954, %v958
        %v960 = vpack.c.bf16 %v959, %v959
        %v962 = vunpack.c.l.b16 %v786
        %v963 = vpack.c.b16 %v962, %v962
        %964 = vrot.lane.b32.xlu0 %v963, 120
        %v965 = vpop.permute.xlu0 %964
        %v967 = vsel %vm787, %v960, 0
        %v970 = vsel %vm849, %v965, 0
        %972 = vmatprep.subr.bf16.mxu0 0
        %973 = vmatpush1.bf16.msra.mxu0 0
        %974 = vmatprep.subr.bf16.mxu0 0
        %975 = vmatpush1.bf16.msra.mxu0 0
        %976 = vmatprep.subr.bf16.mxu0 0
        %977 = vmatpush1.bf16.msra.mxu0 0
        %978 = vmatprep.subr.bf16.mxu0 0
        %979 = vmatpush1.bf16.msra.mxu0 0
        %980 = vmatprep.subr.bf16.mxu0 0
        %981 = vmatpush1.bf16.msra.mxu0 0
        %982 = vmatprep.subr.bf16.mxu0 0
        %983 = vmatpush1.bf16.msra.mxu0 0
        %984 = vmatprep.subr.bf16.mxu0 0
        %985 = vmatpush1.bf16.msra.mxu0 0
        %986 = vmatprep.subr.bf16.mxu0 0
        %987 = vmatpush1.bf16.msra.mxu0 %v970
        %988 = vmatprep.subr.bf16.mxu0 0
        %989 = vmatpush2.bf16.msra.mxu0 0
        %990 = vmatprep.subr.bf16.mxu0 0
        %991 = vmatpush2.bf16.msra.mxu0 0
        %992 = vmatprep.subr.bf16.mxu0 0
        %993 = vmatpush2.bf16.msra.mxu0 0
        %994 = vmatprep.subr.bf16.mxu0 0
        %995 = vmatpush2.bf16.msra.mxu0 0
        %996 = vmatprep.subr.bf16.mxu0 0
        %997 = vmatpush2.bf16.msra.mxu0 0
        %998 = vmatprep.subr.bf16.mxu0 0
        %999 = vmatpush2.bf16.msra.mxu0 0
        %1000 = vmatprep.subr.bf16.mxu0 0
        %1001 = vmatpush2.bf16.msra.mxu0 0
        %1002 = vmatprep.subr.bf16.mxu0 0
        %1003 = vmatpush2.bf16.msra.mxu0 0
        %1004 = vmatprep.mubr.bf16.mxu0 0
        %1005 = vmatmul.mubr.bf16.gmra.mxu0 %v967
        %v1006 = vpop.f32.mrf.mxu0
        %v1007 = vadd.f32 0.0, %v1006
        %v1008 = vpop.f32.mrf.mxu0
        %v1009 = vpop.f32.mrf.mxu0
        %v1010 = vpop.f32.mrf.mxu0
        %1011 = vdwg.mxu0
        %v1012 = vpack.c.bf16 %v1007, %v1007
        %v1013 = vld [vmem:[%s9 + $0x4] sm:$0xf]
        %v1015 = vsel %vm787, %v1012, 0
        %v1018 = vsel %vm849, %v1013, 0
        %1020 = vmatprep.subr.bf16.mxu0 0
        %1021 = vmatpush1.bf16.msra.mxu0 0
        %1022 = vmatprep.subr.bf16.mxu0 0
        %1023 = vmatpush1.bf16.msra.mxu0 0
        %1024 = vmatprep.subr.bf16.mxu0 0
        %1025 = vmatpush1.bf16.msra.mxu0 0
        %1026 = vmatprep.subr.bf16.mxu0 0
        %1027 = vmatpush1.bf16.msra.mxu0 0
        %1028 = vmatprep.subr.bf16.mxu0 0
        %1029 = vmatpush1.bf16.msra.mxu0 0
        %1030 = vmatprep.subr.bf16.mxu0 0
        %1031 = vmatpush1.bf16.msra.mxu0 0
        %1032 = vmatprep.subr.bf16.mxu0 0
        %1033 = vmatpush1.bf16.msra.mxu0 0
        %1034 = vmatprep.subr.bf16.mxu0 0
        %1035 = vmatpush1.bf16.msra.mxu0 %v1018
        %1036 = vmatprep.subr.bf16.mxu0 0
        %1037 = vmatpush2.bf16.msra.mxu0 0
        %1038 = vmatprep.subr.bf16.mxu0 0
        %1039 = vmatpush2.bf16.msra.mxu0 0
        %1040 = vmatprep.subr.bf16.mxu0 0
        %1041 = vmatpush2.bf16.msra.mxu0 0
        %1042 = vmatprep.subr.bf16.mxu0 0
        %1043 = vmatpush2.bf16.msra.mxu0 0
        %1044 = vmatprep.subr.bf16.mxu0 0
        %1045 = vmatpush2.bf16.msra.mxu0 0
        %1046 = vmatprep.subr.bf16.mxu0 0
        %1047 = vmatpush2.bf16.msra.mxu0 0
        %1048 = vmatprep.subr.bf16.mxu0 0
        %1049 = vmatpush2.bf16.msra.mxu0 0
        %1050 = vmatprep.subr.bf16.mxu0 0
        %1051 = vmatpush2.bf16.msra.mxu0 0
        %1052 = vmatprep.mubr.bf16.mxu0 0
        %1053 = vmatmul.mubr.bf16.gmra.mxu0 %v1015
        %v1054 = vpop.f32.mrf.mxu0
        %v1055 = vadd.f32 0.0, %v1054
        %v1056 = vpop.f32.mrf.mxu0
        %v1057 = vpop.f32.mrf.mxu0
        %v1058 = vpop.f32.mrf.mxu0
        %1059 = vdwg.mxu0
        %v1061 = vsel %vm787, %v893, 0
        %v1064 = vsel %vm849, %v894, 0
        %1066 = vmatprep.subr.bf16.mxu0 0
        %1067 = vmatpush1.bf16.msra.mxu0 0
        %1068 = vmatprep.subr.bf16.mxu0 0
        %1069 = vmatpush1.bf16.msra.mxu0 0
        %1070 = vmatprep.subr.bf16.mxu0 0
        %1071 = vmatpush1.bf16.msra.mxu0 0
        %1072 = vmatprep.subr.bf16.mxu0 0
        %1073 = vmatpush1.bf16.msra.mxu0 0
        %1074 = vmatprep.subr.bf16.mxu0 0
        %1075 = vmatpush1.bf16.msra.mxu0 0
        %1076 = vmatprep.subr.bf16.mxu0 0
        %1077 = vmatpush1.bf16.msra.mxu0 0
        %1078 = vmatprep.subr.bf16.mxu0 0
        %1079 = vmatpush1.bf16.msra.mxu0 0
        %1080 = vmatprep.subr.bf16.mxu0 0
        %1081 = vmatpush1.bf16.msra.mxu0 %v1064
        %1082 = vmatprep.subr.bf16.mxu0 0
        %1083 = vmatpush2.bf16.msra.mxu0 0
        %1084 = vmatprep.subr.bf16.mxu0 0
        %1085 = vmatpush2.bf16.msra.mxu0 0
        %1086 = vmatprep.subr.bf16.mxu0 0
        %1087 = vmatpush2.bf16.msra.mxu0 0
        %1088 = vmatprep.subr.bf16.mxu0 0
        %1089 = vmatpush2.bf16.msra.mxu0 0
        %1090 = vmatprep.subr.bf16.mxu0 0
        %1091 = vmatpush2.bf16.msra.mxu0 0
        %1092 = vmatprep.subr.bf16.mxu0 0
        %1093 = vmatpush2.bf16.msra.mxu0 0
        %1094 = vmatprep.subr.bf16.mxu0 0
        %1095 = vmatpush2.bf16.msra.mxu0 0
        %1096 = vmatprep.subr.bf16.mxu0 0
        %1097 = vmatpush2.bf16.msra.mxu0 0
        %1098 = vmatprep.mubr.bf16.mxu0 0
        %1099 = vmatmul.mubr.bf16.gmra.mxu0 %v1061
        %v1100 = vpop.f32.mrf.mxu0
        %v1101 = vadd.f32 %v1055, %v1100
        %v1102 = vpop.f32.mrf.mxu0
        %v1103 = vpop.f32.mrf.mxu0
        %v1104 = vpop.f32.mrf.mxu0
        %1105 = vdwg.mxu0
        %1106 = vrot.lane.b32.xlu0 %v784, 112
        %v1107 = vpop.permute.xlu0 %1106
        %1108 = vrot.lane.b32.xlu0 %v900, 112
        %v1109 = vpop.permute.xlu0 %1108
        %v1111 = vsel %vm787, %v1107, 0
        %v1114 = vsel %vm787, %v1109, 0
        %1116 = vmatprep.subr.bf16.mxu0 0
        %1117 = vmatpush1.bf16.xpose.msra.mxu0 0
        %1118 = vmatprep.subr.bf16.mxu0 0
        %1119 = vmatpush1.bf16.xpose.msra.mxu0 0
        %1120 = vmatprep.subr.bf16.mxu0 0
        %1121 = vmatpush1.bf16.xpose.msra.mxu0 0
        %1122 = vmatprep.subr.bf16.mxu0 0
        %1123 = vmatpush1.bf16.xpose.msra.mxu0 0
        %1124 = vmatprep.subr.bf16.mxu0 0
        %1125 = vmatpush1.bf16.xpose.msra.mxu0 0
        %1126 = vmatprep.subr.bf16.mxu0 0
        %1127 = vmatpush1.bf16.xpose.msra.mxu0 0
        %1128 = vmatprep.subr.bf16.mxu0 0
        %1129 = vmatpush1.bf16.xpose.msra.mxu0 0
        %1130 = vmatprep.subr.bf16.mxu0 0
        %1131 = vmatpush1.bf16.xpose.msra.mxu0 %v1114
        %1132 = vmatprep.subr.bf16.mxu0 0
        %1133 = vmatpush2.bf16.xpose.msra.mxu0 0
        %1134 = vmatprep.subr.bf16.mxu0 0
        %1135 = vmatpush2.bf16.xpose.msra.mxu0 0
        %1136 = vmatprep.subr.bf16.mxu0 0
        %1137 = vmatpush2.bf16.xpose.msra.mxu0 0
        %1138 = vmatprep.subr.bf16.mxu0 0
        %1139 = vmatpush2.bf16.xpose.msra.mxu0 0
        %1140 = vmatprep.subr.bf16.mxu0 0
        %1141 = vmatpush2.bf16.xpose.msra.mxu0 0
        %1142 = vmatprep.subr.bf16.mxu0 0
        %1143 = vmatpush2.bf16.xpose.msra.mxu0 0
        %1144 = vmatprep.subr.bf16.mxu0 0
        %1145 = vmatpush2.bf16.xpose.msra.mxu0 0
        %1146 = vmatprep.subr.bf16.mxu0 0
        %1147 = vmatpush2.bf16.xpose.msra.mxu0 0
        %1148 = vmatprep.mubr.bf16.mxu0 0
        %1149 = vmatmul.mubr.bf16.gmra.mxu0 %v1111
        %v1150 = vpop.f32.mrf.mxu0
        %v1151 = vadd.f32 0.0, %v1150
        %v1152 = vpop.f32.mrf.mxu0
        %v1153 = vpop.f32.mrf.mxu0
        %v1154 = vpop.f32.mrf.mxu0
        %1155 = vdwg.mxu0
        %v1156 = vsel %vm787, %v1151, -inf
        %1157 = vmax.xlane.f32.xlu0 %v1156
        %v1158 = vpop.xlane.xlu0 %1157
        %v1159 = vsub.f32 %v1151, %v1158
        %v1160 = vmul.f32 %v1159, 1.442695
        %v1161 = vpow.pop %v1160
        %v1162 = vsel %vm787, %v1161, 0.0
        %1163 = vadd.xlane.f32.xlu0 %v1162
        %v1164 = vpop.xlane.xlu0 %1163
        %v1165 = vrcp.pop %v1164
        %v1166 = vmul.f32 %v1161, %v1165
        %v1167 = vpack.c.bf16 %v1166, %v1166
        %1168 = vrot.lane.b32.xlu0 %v963, 112
        %v1169 = vpop.permute.xlu0 %1168
        %v1171 = vsel %vm787, %v1167, 0
        %v1174 = vsel %vm849, %v1169, 0
        %1176 = vmatprep.subr.bf16.mxu0 0
        %1177 = vmatpush1.bf16.msra.mxu0 0
        %1178 = vmatprep.subr.bf16.mxu0 0
        %1179 = vmatpush1.bf16.msra.mxu0 0
        %1180 = vmatprep.subr.bf16.mxu0 0
        %1181 = vmatpush1.bf16.msra.mxu0 0
        %1182 = vmatprep.subr.bf16.mxu0 0
        %1183 = vmatpush1.bf16.msra.mxu0 0
        %1184 = vmatprep.subr.bf16.mxu0 0
        %1185 = vmatpush1.bf16.msra.mxu0 0
        %1186 = vmatprep.subr.bf16.mxu0 0
        %1187 = vmatpush1.bf16.msra.mxu0 0
        %1188 = vmatprep.subr.bf16.mxu0 0
        %1189 = vmatpush1.bf16.msra.mxu0 0
        %1190 = vmatprep.subr.bf16.mxu0 0
        %1191 = vmatpush1.bf16.msra.mxu0 %v1174
        %1192 = vmatprep.subr.bf16.mxu0 0
        %1193 = vmatpush2.bf16.msra.mxu0 0
        %1194 = vmatprep.subr.bf16.mxu0 0
        %1195 = vmatpush2.bf16.msra.mxu0 0
        %1196 = vmatprep.subr.bf16.mxu0 0
        %1197 = vmatpush2.bf16.msra.mxu0 0
        %1198 = vmatprep.subr.bf16.mxu0 0
        %1199 = vmatpush2.bf16.msra.mxu0 0
        %1200 = vmatprep.subr.bf16.mxu0 0
        %1201 = vmatpush2.bf16.msra.mxu0 0
        %1202 = vmatprep.subr.bf16.mxu0 0
        %1203 = vmatpush2.bf16.msra.mxu0 0
        %1204 = vmatprep.subr.bf16.mxu0 0
        %1205 = vmatpush2.bf16.msra.mxu0 0
        %1206 = vmatprep.subr.bf16.mxu0 0
        %1207 = vmatpush2.bf16.msra.mxu0 0
        %1208 = vmatprep.mubr.bf16.mxu0 0
        %1209 = vmatmul.mubr.bf16.gmra.mxu0 %v1171
        %v1210 = vpop.f32.mrf.mxu0
        %v1211 = vadd.f32 0.0, %v1210
        %v1212 = vpop.f32.mrf.mxu0
        %v1213 = vpop.f32.mrf.mxu0
        %v1214 = vpop.f32.mrf.mxu0
        %1215 = vdwg.mxu0
        %v1216 = vpack.c.bf16 %v1211, %v1211
        %v1217 = vld [vmem:[%s9 + $0x8] sm:$0xf]
        %v1219 = vsel %vm787, %v1216, 0
        %v1222 = vsel %vm849, %v1217, 0
        %1224 = vmatprep.subr.bf16.mxu0 0
        %1225 = vmatpush1.bf16.msra.mxu0 0
        %1226 = vmatprep.subr.bf16.mxu0 0
        %1227 = vmatpush1.bf16.msra.mxu0 0
        %1228 = vmatprep.subr.bf16.mxu0 0
        %1229 = vmatpush1.bf16.msra.mxu0 0
        %1230 = vmatprep.subr.bf16.mxu0 0
        %1231 = vmatpush1.bf16.msra.mxu0 0
        %1232 = vmatprep.subr.bf16.mxu0 0
        %1233 = vmatpush1.bf16.msra.mxu0 0
        %1234 = vmatprep.subr.bf16.mxu0 0
        %1235 = vmatpush1.bf16.msra.mxu0 0
        %1236 = vmatprep.subr.bf16.mxu0 0
        %1237 = vmatpush1.bf16.msra.mxu0 0
        %1238 = vmatprep.subr.bf16.mxu0 0
        %1239 = vmatpush1.bf16.msra.mxu0 %v1222
        %1240 = vmatprep.subr.bf16.mxu0 0
        %1241 = vmatpush2.bf16.msra.mxu0 0
        %1242 = vmatprep.subr.bf16.mxu0 0
        %1243 = vmatpush2.bf16.msra.mxu0 0
        %1244 = vmatprep.subr.bf16.mxu0 0
        %1245 = vmatpush2.bf16.msra.mxu0 0
        %1246 = vmatprep.subr.bf16.mxu0 0
        %1247 = vmatpush2.bf16.msra.mxu0 0
        %1248 = vmatprep.subr.bf16.mxu0 0
        %1249 = vmatpush2.bf16.msra.mxu0 0
        %1250 = vmatprep.subr.bf16.mxu0 0
        %1251 = vmatpush2.bf16.msra.mxu0 0
        %1252 = vmatprep.subr.bf16.mxu0 0
        %1253 = vmatpush2.bf16.msra.mxu0 0
        %1254 = vmatprep.subr.bf16.mxu0 0
        %1255 = vmatpush2.bf16.msra.mxu0 0
        %1256 = vmatprep.mubr.bf16.mxu0 0
        %1257 = vmatmul.mubr.bf16.gmra.mxu0 %v1219
        %v1258 = vpop.f32.mrf.mxu0
        %v1259 = vadd.f32 0.0, %v1258
        %v1260 = vpop.f32.mrf.mxu0
        %v1261 = vpop.f32.mrf.mxu0
        %v1262 = vpop.f32.mrf.mxu0
        %1263 = vdwg.mxu0
        %v1264 = vadd.f32 %v1101, %v1259
        %1265 = vrot.lane.b32.xlu0 %v784, 104
        %v1266 = vpop.permute.xlu0 %1265
        %1267 = vrot.lane.b32.xlu0 %v900, 104
        %v1268 = vpop.permute.xlu0 %1267
        %v1270 = vsel %vm787, %v1266, 0
        %v1273 = vsel %vm787, %v1268, 0
        %1275 = vmatprep.subr.bf16.mxu0 0
        %1276 = vmatpush1.bf16.xpose.msra.mxu0 0
        %1277 = vmatprep.subr.bf16.mxu0 0
        %1278 = vmatpush1.bf16.xpose.msra.mxu0 0
        %1279 = vmatprep.subr.bf16.mxu0 0
        %1280 = vmatpush1.bf16.xpose.msra.mxu0 0
        %1281 = vmatprep.subr.bf16.mxu0 0
        %1282 = vmatpush1.bf16.xpose.msra.mxu0 0
        %1283 = vmatprep.subr.bf16.mxu0 0
        %1284 = vmatpush1.bf16.xpose.msra.mxu0 0
        %1285 = vmatprep.subr.bf16.mxu0 0
        %1286 = vmatpush1.bf16.xpose.msra.mxu0 0
        %1287 = vmatprep.subr.bf16.mxu0 0
        %1288 = vmatpush1.bf16.xpose.msra.mxu0 0
        %1289 = vmatprep.subr.bf16.mxu0 0
        %1290 = vmatpush1.bf16.xpose.msra.mxu0 %v1273
        %1291 = vmatprep.subr.bf16.mxu0 0
        %1292 = vmatpush2.bf16.xpose.msra.mxu0 0
        %1293 = vmatprep.subr.bf16.mxu0 0
        %1294 = vmatpush2.bf16.xpose.msra.mxu0 0
        %1295 = vmatprep.subr.bf16.mxu0 0
        %1296 = vmatpush2.bf16.xpose.msra.mxu0 0
        %1297 = vmatprep.subr.bf16.mxu0 0
        %1298 = vmatpush2.bf16.xpose.msra.mxu0 0
        %1299 = vmatprep.subr.bf16.mxu0 0
        %1300 = vmatpush2.bf16.xpose.msra.mxu0 0
        %1301 = vmatprep.subr.bf16.mxu0 0
        %1302 = vmatpush2.bf16.xpose.msra.mxu0 0
        %1303 = vmatprep.subr.bf16.mxu0 0
        %1304 = vmatpush2.bf16.xpose.msra.mxu0 0
        %1305 = vmatprep.subr.bf16.mxu0 0
        %1306 = vmatpush2.bf16.xpose.msra.mxu0 0
        %1307 = vmatprep.mubr.bf16.mxu0 0
        %1308 = vmatmul.mubr.bf16.gmra.mxu0 %v1270
        %v1309 = vpop.f32.mrf.mxu0
        %v1310 = vadd.f32 0.0, %v1309
        %v1311 = vpop.f32.mrf.mxu0
        %v1312 = vpop.f32.mrf.mxu0
        %v1313 = vpop.f32.mrf.mxu0
        %1314 = vdwg.mxu0
        %v1315 = vsel %vm787, %v1310, -inf
        %1316 = vmax.xlane.f32.xlu0 %v1315
        %v1317 = vpop.xlane.xlu0 %1316
        %v1318 = vsub.f32 %v1310, %v1317
        %v1319 = vmul.f32 %v1318, 1.442695
        %v1320 = vpow.pop %v1319
        %v1321 = vsel %vm787, %v1320, 0.0
        %1322 = vadd.xlane.f32.xlu0 %v1321
        %v1323 = vpop.xlane.xlu0 %1322
        %v1324 = vrcp.pop %v1323
        %v1325 = vmul.f32 %v1320, %v1324
        %v1326 = vpack.c.bf16 %v1325, %v1325
        %1327 = vrot.lane.b32.xlu0 %v963, 104
        %v1328 = vpop.permute.xlu0 %1327
        %v1330 = vsel %vm787, %v1326, 0
        %v1333 = vsel %vm849, %v1328, 0
        %1335 = vmatprep.subr.bf16.mxu0 0
        %1336 = vmatpush1.bf16.msra.mxu0 0
        %1337 = vmatprep.subr.bf16.mxu0 0
        %1338 = vmatpush1.bf16.msra.mxu0 0
        %1339 = vmatprep.subr.bf16.mxu0 0
        %1340 = vmatpush1.bf16.msra.mxu0 0
        %1341 = vmatprep.subr.bf16.mxu0 0
        %1342 = vmatpush1.bf16.msra.mxu0 0
        %1343 = vmatprep.subr.bf16.mxu0 0
        %1344 = vmatpush1.bf16.msra.mxu0 0
        %1345 = vmatprep.subr.bf16.mxu0 0
        %1346 = vmatpush1.bf16.msra.mxu0 0
        %1347 = vmatprep.subr.bf16.mxu0 0
        %1348 = vmatpush1.bf16.msra.mxu0 0
        %1349 = vmatprep.subr.bf16.mxu0 0
        %1350 = vmatpush1.bf16.msra.mxu0 %v1333
        %1351 = vmatprep.subr.bf16.mxu0 0
        %1352 = vmatpush2.bf16.msra.mxu0 0
        %1353 = vmatprep.subr.bf16.mxu0 0
        %1354 = vmatpush2.bf16.msra.mxu0 0
        %1355 = vmatprep.subr.bf16.mxu0 0
        %1356 = vmatpush2.bf16.msra.mxu0 0
        %1357 = vmatprep.subr.bf16.mxu0 0
        %1358 = vmatpush2.bf16.msra.mxu0 0
        %1359 = vmatprep.subr.bf16.mxu0 0
        %1360 = vmatpush2.bf16.msra.mxu0 0
        %1361 = vmatprep.subr.bf16.mxu0 0
        %1362 = vmatpush2.bf16.msra.mxu0 0
        %1363 = vmatprep.subr.bf16.mxu0 0
        %1364 = vmatpush2.bf16.msra.mxu0 0
        %1365 = vmatprep.subr.bf16.mxu0 0
        %1366 = vmatpush2.bf16.msra.mxu0 0
        %1367 = vmatprep.mubr.bf16.mxu0 0
        %1368 = vmatmul.mubr.bf16.gmra.mxu0 %v1330
        %v1369 = vpop.f32.mrf.mxu0
        %v1370 = vadd.f32 0.0, %v1369
        %v1371 = vpop.f32.mrf.mxu0
        %v1372 = vpop.f32.mrf.mxu0
        %v1373 = vpop.f32.mrf.mxu0
        %1374 = vdwg.mxu0
        %v1375 = vpack.c.bf16 %v1370, %v1370
        %v1376 = vld [vmem:[%s9 + $0xc] sm:$0xf]
        %v1378 = vsel %vm787, %v1375, 0
        %v1381 = vsel %vm849, %v1376, 0
        %1383 = vmatprep.subr.bf16.mxu0 0
        %1384 = vmatpush1.bf16.msra.mxu0 0
        %1385 = vmatprep.subr.bf16.mxu0 0
        %1386 = vmatpush1.bf16.msra.mxu0 0
        %1387 = vmatprep.subr.bf16.mxu0 0
        %1388 = vmatpush1.bf16.msra.mxu0 0
        %1389 = vmatprep.subr.bf16.mxu0 0
        %1390 = vmatpush1.bf16.msra.mxu0 0
        %1391 = vmatprep.subr.bf16.mxu0 0
        %1392 = vmatpush1.bf16.msra.mxu0 0
        %1393 = vmatprep.subr.bf16.mxu0 0
        %1394 = vmatpush1.bf16.msra.mxu0 0
        %1395 = vmatprep.subr.bf16.mxu0 0
        %1396 = vmatpush1.bf16.msra.mxu0 0
        %1397 = vmatprep.subr.bf16.mxu0 0
        %1398 = vmatpush1.bf16.msra.mxu0 %v1381
        %1399 = vmatprep.subr.bf16.mxu0 0
        %1400 = vmatpush2.bf16.msra.mxu0 0
        %1401 = vmatprep.subr.bf16.mxu0 0
        %1402 = vmatpush2.bf16.msra.mxu0 0
        %1403 = vmatprep.subr.bf16.mxu0 0
        %1404 = vmatpush2.bf16.msra.mxu0 0
        %1405 = vmatprep.subr.bf16.mxu0 0
        %1406 = vmatpush2.bf16.msra.mxu0 0
        %1407 = vmatprep.subr.bf16.mxu0 0
        %1408 = vmatpush2.bf16.msra.mxu0 0
        %1409 = vmatprep.subr.bf16.mxu0 0
        %1410 = vmatpush2.bf16.msra.mxu0 0
        %1411 = vmatprep.subr.bf16.mxu0 0
        %1412 = vmatpush2.bf16.msra.mxu0 0
        %1413 = vmatprep.subr.bf16.mxu0 0
        %1414 = vmatpush2.bf16.msra.mxu0 0
        %1415 = vmatprep.mubr.bf16.mxu0 0
        %1416 = vmatmul.mubr.bf16.gmra.mxu0 %v1378
        %v1417 = vpop.f32.mrf.mxu0
        %v1418 = vadd.f32 0.0, %v1417
        %v1419 = vpop.f32.mrf.mxu0
        %v1420 = vpop.f32.mrf.mxu0
        %v1421 = vpop.f32.mrf.mxu0
        %1422 = vdwg.mxu0
        %v1423 = vadd.f32 %v1264, %v1418
        %v1424 = vld [vmem:[%s10] sm:$0x1]
        %v1426 = vlaneseq
        %v1427 = vshrl.u32 %v1426, 7
        %v1428 = vsub.s32 0, %v1427
        %v1429 = vrot.slane %v1424, %v1428
        %v1431 = vadd.f32 %v1423, %v1429
        %1432 = vst.msk [vmem:[%s570] sm:$0xff] %vm740, %v1431
        %s1433 = sand.u32 %s304, 1
        %s1434 = scalar_lea.sflag [#allocation6], %s1433
        %s1435 = sand.u32 %s304, 1
        %s1436 = smul.addr %s1435, 8
        %s1437 = scalar_lea.vmem [#allocation19], %s1436
        // Predicated region
        $region105: #{tpu_custom_call.1} parent=63 // pred_check
          %p1438 = pneg %p314
        $region106: #{tpu_custom_call.1} parent=63 // pred_check_branch
          %1440 = sbr.rel (%p1438) target = $region108
        $region107: #{tpu_custom_call.1} parent=63 // pred_region
          %s1442 = ssub.s32 128, 128
          %1443 = vsyncadd %s1434, %s1442
          %s1444 = sadd.s32 %s39, %s38
          %s1445 = smul.addr %s1444, 128
          %s1446 = scalar_lea.hbm %s11, %s1445
          %s1448 = sshll.u32 %s1437, 4
          %s1449 = int_to_ptr.vmem [resolvable:$true] %s1448
          %1451 = dma.vmem_to_hbm [thread:$0]  %s1449, 128, %s1446, %s1434
        $region108: #{tpu_custom_call.1} parent=63 // pred_fallthru
          _
      $region64: #{tpu_custom_call.1} parent=5 // pred_fallthru
        _
      %p1452 = scmp.le.s32.totalorder 2, %s29
      // Predicated region
      $region109: #{tpu_custom_call.1} parent=5 // pred_check
        %p1453 = pneg %p1452
      $region110: #{tpu_custom_call.1} parent=5 // pred_check_branch
        %1455 = sbr.rel (%p1453) target = $region112
      $region111: #{tpu_custom_call.1} parent=5 // pred_region
        %s1456 = ssub.s32 %s29, 2
        // Predicated region
        $region113: #{tpu_custom_call.1} parent=111 // pred_check
          %p1457 = pneg %p320
        $region114: #{tpu_custom_call.1} parent=111 // pred_check_branch
          %1459 = sbr.rel (%p1457) target = $region116
        $region115: #{tpu_custom_call.1} parent=111 // pred_region
          %s1460 = sand.u32 %s305, 1
          %s1461 = scalar_lea.sflag [#allocation6], %s1460
          %s1462 = sand.u32 %s305, 1
          %s1463 = smul.addr %s1462, 8
          %s1464 = scalar_lea.vmem [#allocation19], %s1463
          %1465 = dma.done %s1461, 128
        $region116: #{tpu_custom_call.1} parent=111 // pred_fallthru
          _
      $region112: #{tpu_custom_call.1} parent=5 // pred_fallthru
        _
    $region6: #{tpu_custom_call.1} parent=1 // loop_footer
      %s33 = sadd.s32 1, %s29
    $region7: #{tpu_custom_call.1} parent=1 // loop_footer_branch
      %28 = sbr.rel target = $region3
    $region8: #{tpu_custom_call.1} parent=1 // loop_exit
      _
    %1466 = vsyncpa [#allocation5], 1
    %s1467 = scalar_lea.sflag [#allocation5], 1
    %1468 = vsyncpa %s1467, 1
    %1469 = vsyncpa [#allocation8], 1
    %s1470 = scalar_lea.sflag [#allocation8], 1
    %1471 = vsyncpa %s1470, 1
    %1472 = vsyncpa [#allocation11], 1
    %1473 = vsyncpa [#allocation14], 1
    %1474 = vsyncpa [#allocation17], 1
    %1475 = vsyncpa [#allocation6], 1
    %s1476 = scalar_lea.sflag [#allocation6], 1
    %1477 = vsyncpa %s1476, 1

// kernel: tpu_custom_call.1
$region0: #{tpu_custom_call.1}
  #allocation0 [shape = 'u32[]', space=smem, size = 0x4, offset = 0x4, fixed_abs, tag = 'smem constant byte address 0x4 - core index']
  #allocation1 [shape = 'u32[144,128]{1,0:T(1,128)}', space=vmem, size = 0x12000, scoped, tag = 'internal scratch']
  #allocation2 [shape = 'bf16[8,32]{1,0:T(8,128)(2,1)}', space=vmem, size = 0x800, scoped, tag = 'scratch operand']
  #allocation3 [shape = 'bf16[8,32]{1,0:T(8,128)(2,1)}', space=vmem, size = 0x800, scoped, tag = 'scratch operand']
  %s0 = inlined_call_operand.hbm [shape: bf16[2,8,32], index: 0, kind: input, shape index: {}]
  %s1 = inlined_call_operand.hbm [shape: bf16[2,8,32], index: 1, kind: input, shape index: {}]
  %s2 = inlined_call_operand.hbm [shape: bf16[2,8,32], index: 2, kind: input, shape index: {}]
  %s3 = inlined_call_operand.hbm [shape: bf16[32,32], index: 3, kind: input, shape index: {}]
  %s4 = inlined_call_operand.hbm [shape: f32[1,32], index: 4, kind: input, shape index: {}]
  %s5 = inlined_call_operand.hbm [shape: bf16[32,32], index: 5, kind: input, shape index: {}]
  %s6 = inlined_call_operand.hbm [shape: f32[1,32], index: 6, kind: input, shape index: {}]
  %s7 = inlined_call_operand.hbm [shape: bf16[32,32], index: 7, kind: input, shape index: {}]
  %s8 = inlined_call_operand.hbm [shape: f32[1,32], index: 8, kind: input, shape index: {}]
  %s9 = inlined_call_operand.vmem [shape: bf16[32,32], index: 9, kind: input, shape index: {}]
  %s10 = inlined_call_operand.vmem [shape: f32[1,32], index: 10, kind: input, shape index: {}]
  %s11 = inlined_call_operand.hbm [shape: f32[2,8,32], index: 11, kind: output, shape index: {}]
  %s12 = sld [smem:[#allocation0]]
  $region117: #{tpu_custom_call.1} parent=0
    _
  %s14 = ssub.s32 1, %s12
  %s15 = scalar_select 0, %s14, %s12
  $region1: #{tpu_custom_call.1} parent=0
    #allocation4 [shape = 'u8[4096]{0}', space=vmem, size = 0x1000, scoped, tag = 'input window, operand 0']
    #allocation5 [shape = 's32[2]{0}', space=sflag, size = 0x8, scoped, tag = 'scoped memory for tpu_custom_call.1']
    #allocation6 [shape = 's32[2]{0}', space=sflag, size = 0x8, scoped, tag = 'scoped memory for tpu_custom_call.1']
    #allocation7 [shape = 'u8[4096]{0}', space=vmem, size = 0x1000, scoped, tag = 'input window, operand 1']
    #allocation8 [shape = 's32[2]{0}', space=sflag, size = 0x8, scoped, tag = 'scoped memory for tpu_custom_call.1']
    #allocation9 [shape = 'u8[4096]{0}', space=vmem, size = 0x1000, scoped, tag = 'input window, operand 2']
    #allocation10 [shape = 'u8[8192]{0}', space=vmem, size = 0x2000, scoped, tag = 'input window, operand 3, single buffered']
    #allocation11 [shape = 's32[1]{0}', space=sflag, size = 0x4, scoped, tag = 'scoped memory for tpu_custom_call.1']
    #allocation12 [shape = 'u8[512]{0}', space=vmem, size = 0x400, scoped, tag = 'input window, operand 4, single buffered']
    #allocation13 [shape = 'u8[8192]{0}', space=vmem, size = 0x2000, scoped, tag = 'input window, operand 5, single buffered']
    #allocation14 [shape = 's32[1]{0}', space=sflag, size = 0x4, scoped, tag = 'scoped memory for tpu_custom_call.1']
    #allocation15 [shape = 'u8[512]{0}', space=vmem, size = 0x400, scoped, tag = 'input window, operand 6, single buffered']
    #allocation16 [shape = 'u8[8192]{0}', space=vmem, size = 0x2000, scoped, tag = 'input window, operand 7, single buffered']
    #allocation17 [shape = 's32[1]{0}', space=sflag, size = 0x4, scoped, tag = 'scoped memory for tpu_custom_call.1']
    #allocation18 [shape = 'u8[512]{0}', space=vmem, size = 0x400, scoped, tag = 'input window, operand 8, single buffered']
    #allocation19 [shape = 'u8[8192]{0}', space=vmem, size = 0x2000, scoped, tag = 'output window, operand 0']
    %16 = vsyncpa [#allocation5], 0
    %s17 = scalar_lea.sflag [#allocation5], 1
    %18 = vsyncpa %s17, 0
    %19 = vsyncpa [#allocation8], 0
    %s20 = scalar_lea.sflag [#allocation8], 1
    %21 = vsyncpa %s20, 0
    %22 = vsyncpa [#allocation11], 0
    %23 = vsyncpa [#allocation14], 0
    %24 = vsyncpa [#allocation17], 0
    %25 = vsyncpa [#allocation6], 0
    %s26 = scalar_lea.sflag [#allocation6], 1
    %27 = vsyncpa %s26, 0
    loop: start=0, step=1, limit=4
    $region2: #{tpu_custom_call.1} parent=1 // loop_pre_header
      _
    $region3: #{tpu_custom_call.1} parent=1 // loop_header
      %s29 = sphi 0, %s33
      %p30 = scmp.ge.s32.totalorder %s29, 4
      %s36 = sphi 0, %s48
      %s37 = sphi 0, %s44
      %s38 = sphi 0, %s36
      %s39 = sphi 0, %s37
      %s40 = sphi 0, %s38
      %s41 = sphi 0, %s39
      %s53 = sphi 0, %s55
      %s56 = sphi 0, %s53
      %s57 = sphi 0, %s56
      %s73 = sphi 0, %s57
      %s79 = sphi 0, %s81
      %s82 = sphi 0, %s79
      %s83 = sphi 0, %s82
      %s99 = sphi 0, %s83
      %s105 = sphi 0, %s107
      %s108 = sphi 0, %s105
      %s109 = sphi 0, %s108
      %s125 = sphi 0, %s109
      %s129 = sphi 0, %s129
      %s131 = sphi 0, %s129
      %s132 = sphi 0, %s131
      %s146 = sphi 0, %s132
      %s150 = sphi 0, %s150
      %s152 = sphi 0, %s150
      %s153 = sphi 0, %s152
      %s167 = sphi 0, %s153
      %s171 = sphi 0, %s171
      %s173 = sphi 0, %s171
      %s174 = sphi 0, %s173
      %s188 = sphi 0, %s174
      %s192 = sphi 0, %s192
      %s194 = sphi 0, %s192
      %s195 = sphi 0, %s194
      %s209 = sphi 0, %s195
      %s213 = sphi 0, %s213
      %s215 = sphi 0, %s213
      %s216 = sphi 0, %s215
      %s230 = sphi 0, %s216
      %s234 = sphi 0, %s234
      %s236 = sphi 0, %s234
      %s237 = sphi 0, %s236
      %s251 = sphi 0, %s237
      %s255 = sphi 0, %s255
      %s257 = sphi 0, %s255
      %s258 = sphi 0, %s257
      %s272 = sphi 0, %s258
      %s276 = sphi 0, %s276
      %s278 = sphi 0, %s276
      %s279 = sphi 0, %s278
      %s293 = sphi 0, %s279
      %s301 = sphi 0, %s303
      %s304 = sphi 0, %s301
      %s305 = sphi 0, %s304
      %s321 = sphi 0, %s305
    $region4: #{tpu_custom_call.1} parent=1 // loop_header_branch
      %32 = sbr.rel (%p30) target = $region8
    $region5: #{tpu_custom_call.1} parent=1 // loop_body
      %s34 = ssub.s32 %s29, 1
      %s35 = ssub.s32 %s29, 2
      %s42 = sadd.s32 1, %s37
      %p43 = scmp.ge.s32.totalorder %s42, 1
      %s44 = scalar_select %p43, 0, %s42
      %s45 = sadd.s32 1, %s36
      %s46 = scalar_select %p43, %s45, %s36
      %p47 = scmp.ge.s32.totalorder %s46, 2
      %s48 = scalar_select %p47, 0, %s46
      %s49 = ssub.s32 %s36, %s48
      %s50 = ssub.s32 %s37, %s44
      %s51 = sor.u32 %s49, %s50
      %p52 = scmp.eq.s32.totalorder %s51, 0
      %s54 = sadd.s32 %s53, 1
      %s55 = scalar_select %p52, %s53, %s54
      %p58 = pneg %p52
      %p59 = scmp.eq.s32.totalorder %s29, 1
      %p60 = por %p58, %p59
      %p61 = scmp.ne.s32.totalorder %s53, %s56
      %p62 = scmp.eq.s32.totalorder %s29, 0
      %p63 = por %p61, %p62
      %p64 = scmp.ne.s32.totalorder %s53, %s56
      %p65 = scmp.eq.s32.totalorder %s34, 1
      %p66 = por %p64, %p65
      %p67 = scmp.ne.s32.totalorder %s56, %s57
      %p68 = scmp.eq.s32.totalorder %s34, 0
      %p69 = por %p67, %p68
      %p70 = scmp.ne.s32.totalorder %s56, %s57
      %p71 = scmp.eq.s32.totalorder %s35, 1
      %p72 = por %p70, %p71
      %p74 = scmp.ne.s32.totalorder %s57, %s73
      %p75 = scmp.eq.s32.totalorder %s35, 0
      %p76 = por %p74, %p75
      %s77 = ssub.s32 %s36, %s48
      %p78 = scmp.eq.s32.totalorder %s77, 0
      %s80 = sadd.s32 %s79, 1
      %s81 = scalar_select %p78, %s79, %s80
      %p84 = pneg %p78
      %p85 = scmp.eq.s32.totalorder %s29, 1
      %p86 = por %p84, %p85
      %p87 = scmp.ne.s32.totalorder %s79, %s82
      %p88 = scmp.eq.s32.totalorder %s29, 0
      %p89 = por %p87, %p88
      %p90 = scmp.ne.s32.totalorder %s79, %s82
      %p91 = scmp.eq.s32.totalorder %s34, 1
      %p92 = por %p90, %p91
      %p93 = scmp.ne.s32.totalorder %s82, %s83
      %p94 = scmp.eq.s32.totalorder %s34, 0
      %p95 = por %p93, %p94
      %p96 = scmp.ne.s32.totalorder %s82, %s83
      %p97 = scmp.eq.s32.totalorder %s35, 1
      %p98 = por %p96, %p97
      %p100 = scmp.ne.s32.totalorder %s83, %s99
      %p101 = scmp.eq.s32.totalorder %s35, 0
      %p102 = por %p100, %p101
      %s103 = ssub.s32 %s36, %s48
      %p104 = scmp.eq.s32.totalorder %s103, 0
      %s106 = sadd.s32 %s105, 1
      %s107 = scalar_select %p104, %s105, %s106
      %p110 = pneg %p104
      %p111 = scmp.eq.s32.totalorder %s29, 1
      %p112 = por %p110, %p111
      %p113 = scmp.ne.s32.totalorder %s105, %s108
      %p114 = scmp.eq.s32.totalorder %s29, 0
      %p115 = por %p113, %p114
      %p116 = scmp.ne.s32.totalorder %s105, %s108
      %p117 = scmp.eq.s32.totalorder %s34, 1
      %p118 = por %p116, %p117
      %p119 = scmp.ne.s32.totalorder %s108, %s109
      %p120 = scmp.eq.s32.totalorder %s34, 0
      %p121 = por %p119, %p120
      %p122 = scmp.ne.s32.totalorder %s108, %s109
      %p123 = scmp.eq.s32.totalorder %s35, 1
      %p124 = por %p122, %p123
      %p126 = scmp.ne.s32.totalorder %s109, %s125
      %p127 = scmp.eq.s32.totalorder %s35, 0
      %p128 = por %p126, %p127
      %s130 = sadd.s32 %s129, 1
      %p133 = scmp.eq.s32.totalorder %s29, 1
      %p134 = scmp.ne.s32.totalorder %s129, %s131
      %p135 = scmp.eq.s32.totalorder %s29, 0
      %p136 = por %p134, %p135
      %p137 = scmp.ne.s32.totalorder %s129, %s131
      %p138 = scmp.eq.s32.totalorder %s34, 1
      %p139 = por %p137, %p138
      %p140 = scmp.ne.s32.totalorder %s131, %s132
      %p141 = scmp.eq.s32.totalorder %s34, 0
      %p142 = por %p140, %p141
      %p143 = scmp.ne.s32.totalorder %s131, %s132
      %p144 = scmp.eq.s32.totalorder %s35, 1
      %p145 = por %p143, %p144
      %p147 = scmp.ne.s32.totalorder %s132, %s146
      %p148 = scmp.eq.s32.totalorder %s35, 0
      %p149 = por %p147, %p148
      %s151 = sadd.s32 %s150, 1
      %p154 = scmp.eq.s32.totalorder %s29, 1
      %p155 = scmp.ne.s32.totalorder %s150, %s152
      %p156 = scmp.eq.s32.totalorder %s29, 0
      %p157 = por %p155, %p156
      %p158 = scmp.ne.s32.totalorder %s150, %s152
      %p159 = scmp.eq.s32.totalorder %s34, 1
      %p160 = por %p158, %p159
      %p161 = scmp.ne.s32.totalorder %s152, %s153
      %p162 = scmp.eq.s32.totalorder %s34, 0
      %p163 = por %p161, %p162
      %p164 = scmp.ne.s32.totalorder %s152, %s153
      %p165 = scmp.eq.s32.totalorder %s35, 1
      %p166 = por %p164, %p165
      %p168 = scmp.ne.s32.totalorder %s153, %s167
      %p169 = scmp.eq.s32.totalorder %s35, 0
      %p170 = por %p168, %p169
      %s172 = sadd.s32 %s171, 1
      %p175 = scmp.eq.s32.totalorder %s29, 1
      %p176 = scmp.ne.s32.totalorder %s171, %s173
      %p177 = scmp.eq.s32.totalorder %s29, 0
      %p178 = por %p176, %p177
      %p179 = scmp.ne.s32.totalorder %s171, %s173
      %p180 = scmp.eq.s32.totalorder %s34, 1
      %p181 = por %p179, %p180
      %p182 = scmp.ne.s32.totalorder %s173, %s174
      %p183 = scmp.eq.s32.totalorder %s34, 0
      %p184 = por %p182, %p183
      %p185 = scmp.ne.s32.totalorder %s173, %s174
      %p186 = scmp.eq.s32.totalorder %s35, 1
      %p187 = por %p185, %p186
      %p189 = scmp.ne.s32.totalorder %s174, %s188
      %p190 = scmp.eq.s32.totalorder %s35, 0
      %p191 = por %p189, %p190
      %s193 = sadd.s32 %s192, 1
      %p196 = scmp.eq.s32.totalorder %s29, 1
      %p197 = scmp.ne.s32.totalorder %s192, %s194
      %p198 = scmp.eq.s32.totalorder %s29, 0
      %p199 = por %p197, %p198
      %p200 = scmp.ne.s32.totalorder %s192, %s194
      %p201 = scmp.eq.s32.totalorder %s34, 1
      %p202 = por %p200, %p201
      %p203 = scmp.ne.s32.totalorder %s194, %s195
      %p204 = scmp.eq.s32.totalorder %s34, 0
      %p205 = por %p203, %p204
      %p206 = scmp.ne.s32.totalorder %s194, %s195
      %p207 = scmp.eq.s32.totalorder %s35, 1
      %p208 = por %p206, %p207
      %p210 = scmp.ne.s32.totalorder %s195, %s209
      %p211 = scmp.eq.s32.totalorder %s35, 0
      %p212 = por %p210, %p211
      %s214 = sadd.s32 %s213, 1
      %p217 = scmp.eq.s32.totalorder %s29, 1
      %p218 = scmp.ne.s32.totalorder %s213, %s215
      %p219 = scmp.eq.s32.totalorder %s29, 0
      %p220 = por %p218, %p219
      %p221 = scmp.ne.s32.totalorder %s213, %s215
      %p222 = scmp.eq.s32.totalorder %s34, 1
      %p223 = por %p221, %p222
      %p224 = scmp.ne.s32.totalorder %s215, %s216
      %p225 = scmp.eq.s32.totalorder %s34, 0
      %p226 = por %p224, %p225
      %p227 = scmp.ne.s32.totalorder %s215, %s216
      %p228 = scmp.eq.s32.totalorder %s35, 1
      %p229 = por %p227, %p228
      %p231 = scmp.ne.s32.totalorder %s216, %s230
      %p232 = scmp.eq.s32.totalorder %s35, 0
      %p233 = por %p231, %p232
      %s235 = sadd.s32 %s234, 1
      %p238 = scmp.eq.s32.totalorder %s29, 1
      %p239 = scmp.ne.s32.totalorder %s234, %s236
      %p240 = scmp.eq.s32.totalorder %s29, 0
      %p241 = por %p239, %p240
      %p242 = scmp.ne.s32.totalorder %s234, %s236
      %p243 = scmp.eq.s32.totalorder %s34, 1
      %p244 = por %p242, %p243
      %p245 = scmp.ne.s32.totalorder %s236, %s237
      %p246 = scmp.eq.s32.totalorder %s34, 0
      %p247 = por %p245, %p246
      %p248 = scmp.ne.s32.totalorder %s236, %s237
      %p249 = scmp.eq.s32.totalorder %s35, 1
      %p250 = por %p248, %p249
      %p252 = scmp.ne.s32.totalorder %s237, %s251
      %p253 = scmp.eq.s32.totalorder %s35, 0
      %p254 = por %p252, %p253
      %s256 = sadd.s32 %s255, 1
      %p259 = scmp.eq.s32.totalorder %s29, 1
      %p260 = scmp.ne.s32.totalorder %s255, %s257
      %p261 = scmp.eq.s32.totalorder %s29, 0
      %p262 = por %p260, %p261
      %p263 = scmp.ne.s32.totalorder %s255, %s257
      %p264 = scmp.eq.s32.totalorder %s34, 1
      %p265 = por %p263, %p264
      %p266 = scmp.ne.s32.totalorder %s257, %s258
      %p267 = scmp.eq.s32.totalorder %s34, 0
      %p268 = por %p266, %p267
      %p269 = scmp.ne.s32.totalorder %s257, %s258
      %p270 = scmp.eq.s32.totalorder %s35, 1
      %p271 = por %p269, %p270
      %p273 = scmp.ne.s32.totalorder %s258, %s272
      %p274 = scmp.eq.s32.totalorder %s35, 0
      %p275 = por %p273, %p274
      %s277 = sadd.s32 %s276, 1
      %p280 = scmp.eq.s32.totalorder %s29, 1
      %p281 = scmp.ne.s32.totalorder %s276, %s278
      %p282 = scmp.eq.s32.totalorder %s29, 0
      %p283 = por %p281, %p282
      %p284 = scmp.ne.s32.totalorder %s276, %s278
      %p285 = scmp.eq.s32.totalorder %s34, 1
      %p286 = por %p284, %p285
      %p287 = scmp.ne.s32.totalorder %s278, %s279
      %p288 = scmp.eq.s32.totalorder %s34, 0
      %p289 = por %p287, %p288
      %p290 = scmp.ne.s32.totalorder %s278, %s279
      %p291 = scmp.eq.s32.totalorder %s35, 1
      %p292 = por %p290, %p291
      %p294 = scmp.ne.s32.totalorder %s279, %s293
      %p295 = scmp.eq.s32.totalorder %s35, 0
      %p296 = por %p294, %p295
      %s297 = ssub.s32 %s36, %s48
      %s298 = ssub.s32 %s37, %s44
      %s299 = sor.u32 %s297, %s298
      %p300 = scmp.eq.s32.totalorder %s299, 0
      %s302 = sadd.s32 %s301, 1
      %s303 = scalar_select %p300, %s301, %s302
      %p306 = pneg %p300
      %p307 = scmp.eq.s32.totalorder %s29, 1
      %p308 = por %p306, %p307
      %p309 = scmp.ne.s32.totalorder %s301, %s304
      %p310 = scmp.eq.s32.totalorder %s29, 0
      %p311 = por %p309, %p310
      %p312 = scmp.ne.s32.totalorder %s301, %s304
      %p313 = scmp.eq.s32.totalorder %s34, 1
      %p314 = por %p312, %p313
      %p315 = scmp.ne.s32.totalorder %s304, %s305
      %p316 = scmp.eq.s32.totalorder %s34, 0
      %p317 = por %p315, %p316
      %p318 = scmp.ne.s32.totalorder %s304, %s305
      %p319 = scmp.eq.s32.totalorder %s35, 1
      %p320 = por %p318, %p319
      %p322 = scmp.ne.s32.totalorder %s305, %s321
      %p323 = scmp.eq.s32.totalorder %s35, 0
      %p324 = por %p322, %p323
      %p325 = scmp.le.s32.totalorder 1, %s29
      %p326 = scmp.lt.s32.totalorder %s29, 3
      %p327 = pnand %p325, %p326
      %p328 = pneg %p327
      // Predicated region
      $region9: #{tpu_custom_call.1} parent=5 // pred_check
        _
      $region10: #{tpu_custom_call.1} parent=5 // pred_check_branch
        %330 = sbr.rel (%p327) target = $region12
      $region11: #{tpu_custom_call.1} parent=5 // pred_region
        %s331 = ssub.s32 %s29, 1
        // Predicated region
        $region13: #{tpu_custom_call.1} parent=11 // pred_check
          %p332 = pneg %p142
        $region14: #{tpu_custom_call.1} parent=11 // pred_check_branch
          %334 = sbr.rel (%p332) target = $region16
        $region15: #{tpu_custom_call.1} parent=11 // pred_region
          %s336 = ssub.s32 256, 256
          %337 = vsyncadd [#allocation11], %s336
          %s338 = sshll.u32 [#allocation10], 4
          %s339 = int_to_ptr.vmem [resolvable:$true] %s338
          %344 = dma.hbm_to_vmem [thread:$0]  %s3, 256, %s339, [#allocation11], 64, 64, 4
        $region16: #{tpu_custom_call.1} parent=11 // pred_fallthru
          _
        // Predicated region
        $region17: #{tpu_custom_call.1} parent=11 // pred_check
          %p345 = pneg %p163
        $region18: #{tpu_custom_call.1} parent=11 // pred_check_branch
          %347 = sbr.rel (%p345) target = $region20
        $region19: #{tpu_custom_call.1} parent=11 // pred_region
          %s349 = ssub.s32 16, 16
          %350 = vsyncadd [#allocation11], %s349
          %s352 = sshll.u32 [#allocation12], 4
          %s353 = int_to_ptr.vmem [resolvable:$true] %s352
          %355 = dma.hbm_to_vmem [thread:$0]  %s4, 16, %s353, [#allocation11]
        $region20: #{tpu_custom_call.1} parent=11 // pred_fallthru
          _
        // Predicated region
        $region21: #{tpu_custom_call.1} parent=11 // pred_check
          %p356 = pneg %p184
        $region22: #{tpu_custom_call.1} parent=11 // pred_check_branch
          %358 = sbr.rel (%p356) target = $region24
        $region23: #{tpu_custom_call.1} parent=11 // pred_region
          %s360 = ssub.s32 256, 256
          %361 = vsyncadd [#allocation14], %s360
          %s362 = sshll.u32 [#allocation13], 4
          %s363 = int_to_ptr.vmem [resolvable:$true] %s362
          %368 = dma.hbm_to_vmem [thread:$0]  %s5, 256, %s363, [#allocation14], 64, 64, 4
        $region24: #{tpu_custom_call.1} parent=11 // pred_fallthru
          _
        // Predicated region
        $region25: #{tpu_custom_call.1} parent=11 // pred_check
          %p369 = pneg %p205
        $region26: #{tpu_custom_call.1} parent=11 // pred_check_branch
          %371 = sbr.rel (%p369) target = $region28
        $region27: #{tpu_custom_call.1} parent=11 // pred_region
          %s373 = ssub.s32 16, 16
          %374 = vsyncadd [#allocation14], %s373
          %s376 = sshll.u32 [#allocation15], 4
          %s377 = int_to_ptr.vmem [resolvable:$true] %s376
          %379 = dma.hbm_to_vmem [thread:$0]  %s6, 16, %s377, [#allocation14]
        $region28: #{tpu_custom_call.1} parent=11 // pred_fallthru
          _
        // Predicated region
        $region29: #{tpu_custom_call.1} parent=11 // pred_check
          %p380 = pneg %p226
        $region30: #{tpu_custom_call.1} parent=11 // pred_check_branch
          %382 = sbr.rel (%p380) target = $region32
        $region31: #{tpu_custom_call.1} parent=11 // pred_region
          %s384 = ssub.s32 256, 256
          %385 = vsyncadd [#allocation17], %s384
          %s386 = sshll.u32 [#allocation16], 4
          %s387 = int_to_ptr.vmem [resolvable:$true] %s386
          %392 = dma.hbm_to_vmem [thread:$0]  %s7, 256, %s387, [#allocation17], 64, 64, 4
        $region32: #{tpu_custom_call.1} parent=11 // pred_fallthru
          _
        // Predicated region
        $region33: #{tpu_custom_call.1} parent=11 // pred_check
          %p393 = pneg %p247
        $region34: #{tpu_custom_call.1} parent=11 // pred_check_branch
          %395 = sbr.rel (%p393) target = $region36
        $region35: #{tpu_custom_call.1} parent=11 // pred_region
          %s397 = ssub.s32 16, 16
          %398 = vsyncadd [#allocation17], %s397
          %s400 = sshll.u32 [#allocation18], 4
          %s401 = int_to_ptr.vmem [resolvable:$true] %s400
          %403 = dma.hbm_to_vmem [thread:$0]  %s8, 16, %s401, [#allocation17]
        $region36: #{tpu_custom_call.1} parent=11 // pred_fallthru
          _
        // Predicated region
        $region37: #{tpu_custom_call.1} parent=11 // pred_check
          %p404 = pneg %p268
        $region38: #{tpu_custom_call.1} parent=11 // pred_check_branch
          %406 = sbr.rel (%p404) target = $region40
        $region39: #{tpu_custom_call.1} parent=11 // pred_region
          _
        $region40: #{tpu_custom_call.1} parent=11 // pred_fallthru
          _
        // Predicated region
        $region41: #{tpu_custom_call.1} parent=11 // pred_check
          %p407 = pneg %p289
        $region42: #{tpu_custom_call.1} parent=11 // pred_check_branch
          %409 = sbr.rel (%p407) target = $region44
        $region43: #{tpu_custom_call.1} parent=11 // pred_region
          _
        $region44: #{tpu_custom_call.1} parent=11 // pred_fallthru
          _
      $region12: #{tpu_custom_call.1} parent=5 // pred_fallthru
        _
      %p410 = scmp.lt.s32.totalorder %s29, 2
      // Predicated region
      $region45: #{tpu_custom_call.1} parent=5 // pred_check
        %p411 = pneg %p410
      $region46: #{tpu_custom_call.1} parent=5 // pred_check_branch
        %413 = sbr.rel (%p411) target = $region48
      $region47: #{tpu_custom_call.1} parent=5 // pred_region
        // Predicated region
        $region49: #{tpu_custom_call.1} parent=47 // pred_check
          %p414 = pneg %p63
        $region50: #{tpu_custom_call.1} parent=47 // pred_check_branch
          %416 = sbr.rel (%p414) target = $region52
        $region51: #{tpu_custom_call.1} parent=47 // pred_region
          %s417 = sand.u32 %s53, 1
          %s418 = scalar_lea.sflag [#allocation5], %s417
          %s419 = sand.u32 %s53, 1
          %s420 = smul.addr %s419, 4
          %s421 = scalar_lea.vmem [#allocation4], %s420
          %s423 = ssub.s32 64, 64
          %424 = vsyncadd %s418, %s423
          %s425 = sadd.s32 %s37, %s36
          %s426 = smul.addr %s425, 64
          %s427 = scalar_lea.hbm %s0, %s426
          %s429 = sshll.u32 %s421, 4
          %s430 = int_to_ptr.vmem [resolvable:$true] %s429
          %432 = dma.hbm_to_vmem [thread:$0]  %s427, 64, %s430, %s418
        $region52: #{tpu_custom_call.1} parent=47 // pred_fallthru
          _
        // Predicated region
        $region53: #{tpu_custom_call.1} parent=47 // pred_check
          %p433 = pneg %p89
        $region54: #{tpu_custom_call.1} parent=47 // pred_check_branch
          %435 = sbr.rel (%p433) target = $region56
        $region55: #{tpu_custom_call.1} parent=47 // pred_region
          %s436 = sand.u32 %s29, 1
          %s437 = scalar_lea.sflag [#allocation8], %s436
          %s438 = sand.u32 %s79, 1
          %s439 = smul.addr %s438, 4
          %s440 = scalar_lea.vmem [#allocation7], %s439
          %s442 = ssub.s32 64, 64
          %443 = vsyncadd %s437, %s442
          %s444 = smul.addr %s36, 64
          %s445 = scalar_lea.hbm %s1, %s444
          %s447 = sshll.u32 %s440, 4
          %s448 = int_to_ptr.vmem [resolvable:$true] %s447
          %450 = dma.hbm_to_vmem [thread:$0]  %s445, 64, %s448, %s437
        $region56: #{tpu_custom_call.1} parent=47 // pred_fallthru
          _
        // Predicated region
        $region57: #{tpu_custom_call.1} parent=47 // pred_check
          %p451 = pneg %p115
        $region58: #{tpu_custom_call.1} parent=47 // pred_check_branch
          %453 = sbr.rel (%p451) target = $region60
        $region59: #{tpu_custom_call.1} parent=47 // pred_region
          %s454 = sand.u32 %s29, 1
          %s455 = scalar_lea.sflag [#allocation8], %s454
          %s456 = sand.u32 %s105, 1
          %s457 = smul.addr %s456, 4
          %s458 = scalar_lea.vmem [#allocation9], %s457
          %s460 = ssub.s32 64, 64
          %461 = vsyncadd %s455, %s460
          %s462 = smul.addr %s36, 64
          %s463 = scalar_lea.hbm %s2, %s462
          %s465 = sshll.u32 %s458, 4
          %s466 = int_to_ptr.vmem [resolvable:$true] %s465
          %468 = dma.hbm_to_vmem [thread:$0]  %s463, 64, %s466, %s455
        $region60: #{tpu_custom_call.1} parent=47 // pred_fallthru
          _
      $region48: #{tpu_custom_call.1} parent=5 // pred_fallthru
        _
      %p469 = scmp.le.s32.totalorder 1, %s29
      %p470 = scmp.lt.s32.totalorder %s29, 3
      %p471 = pnand %p469, %p470
      %p472 = pneg %p471
      // Predicated region
      $region61: #{tpu_custom_call.1} parent=5 // pred_check
        _
      $region62: #{tpu_custom_call.1} parent=5 // pred_check_branch
        %474 = sbr.rel (%p471) target = $region64
      $region63: #{tpu_custom_call.1} parent=5 // pred_region
        %s475 = ssub.s32 %s29, 1
        %s476 = sand.u32 %s56, 1
        %s477 = scalar_lea.sflag [#allocation5], %s476
        %s478 = sand.u32 %s56, 1
        %s479 = smul.addr %s478, 4
        %s480 = scalar_lea.vmem [#allocation4], %s479
        // Predicated region
        $region65: #{tpu_custom_call.1} parent=63 // pred_check
          %p481 = pneg %p69
        $region66: #{tpu_custom_call.1} parent=63 // pred_check_branch
          %483 = sbr.rel (%p481) target = $region68
        $region67: #{tpu_custom_call.1} parent=63 // pred_region
          %484 = dma.done %s477, 64
        $region68: #{tpu_custom_call.1} parent=63 // pred_fallthru
          _
        %s485 = sand.u32 %s34, 1
        %s486 = scalar_lea.sflag [#allocation8], %s485
        %s487 = sand.u32 %s82, 1
        %s488 = smul.addr %s487, 4
        %s489 = scalar_lea.vmem [#allocation7], %s488
        // Predicated region
        $region69: #{tpu_custom_call.1} parent=63 // pred_check
          %p490 = pneg %p95
        $region70: #{tpu_custom_call.1} parent=63 // pred_check_branch
          %492 = sbr.rel (%p490) target = $region72
        $region71: #{tpu_custom_call.1} parent=63 // pred_region
          %493 = dma.done %s486, 64
        $region72: #{tpu_custom_call.1} parent=63 // pred_fallthru
          _
        %s494 = sand.u32 %s34, 1
        %s495 = scalar_lea.sflag [#allocation8], %s494
        %s496 = sand.u32 %s108, 1
        %s497 = smul.addr %s496, 4
        %s498 = scalar_lea.vmem [#allocation9], %s497
        // Predicated region
        $region73: #{tpu_custom_call.1} parent=63 // pred_check
          %p499 = pneg %p121
        $region74: #{tpu_custom_call.1} parent=63 // pred_check_branch
          %501 = sbr.rel (%p499) target = $region76
        $region75: #{tpu_custom_call.1} parent=63 // pred_region
          %502 = dma.done %s495, 64
        $region76: #{tpu_custom_call.1} parent=63 // pred_fallthru
          _
        // Predicated region
        $region77: #{tpu_custom_call.1} parent=63 // pred_check
          %p503 = pneg %p142
        $region78: #{tpu_custom_call.1} parent=63 // pred_check_branch
          %505 = sbr.rel (%p503) target = $region80
        $region79: #{tpu_custom_call.1} parent=63 // pred_region
          %506 = dma.done [#allocation11], 256
        $region80: #{tpu_custom_call.1} parent=63 // pred_fallthru
          _
        // Predicated region
        $region81: #{tpu_custom_call.1} parent=63 // pred_check
          %p507 = pneg %p163
        $region82: #{tpu_custom_call.1} parent=63 // pred_check_branch
          %509 = sbr.rel (%p507) target = $region84
        $region83: #{tpu_custom_call.1} parent=63 // pred_region
          %510 = dma.done [#allocation11], 16
        $region84: #{tpu_custom_call.1} parent=63 // pred_fallthru
          _
        // Predicated region
        $region85: #{tpu_custom_call.1} parent=63 // pred_check
          %p511 = pneg %p184
        $region86: #{tpu_custom_call.1} parent=63 // pred_check_branch
          %513 = sbr.rel (%p511) target = $region88
        $region87: #{tpu_custom_call.1} parent=63 // pred_region
          %514 = dma.done [#allocation14], 256
        $region88: #{tpu_custom_call.1} parent=63 // pred_fallthru
          _
        // Predicated region
        $region89: #{tpu_custom_call.1} parent=63 // pred_check
          %p515 = pneg %p205
        $region90: #{tpu_custom_call.1} parent=63 // pred_check_branch
          %517 = sbr.rel (%p515) target = $region92
        $region91: #{tpu_custom_call.1} parent=63 // pred_region
          %518 = dma.done [#allocation14], 16
        $region92: #{tpu_custom_call.1} parent=63 // pred_fallthru
          _
        // Predicated region
        $region93: #{tpu_custom_call.1} parent=63 // pred_check
          %p519 = pneg %p226
        $region94: #{tpu_custom_call.1} parent=63 // pred_check_branch
          %521 = sbr.rel (%p519) target = $region96
        $region95: #{tpu_custom_call.1} parent=63 // pred_region
          %522 = dma.done [#allocation17], 256
        $region96: #{tpu_custom_call.1} parent=63 // pred_fallthru
          _
        // Predicated region
        $region97: #{tpu_custom_call.1} parent=63 // pred_check
          %p523 = pneg %p247
        $region98: #{tpu_custom_call.1} parent=63 // pred_check_branch
          %525 = sbr.rel (%p523) target = $region100
        $region99: #{tpu_custom_call.1} parent=63 // pred_region
          %526 = dma.done [#allocation17], 16
        $region100: #{tpu_custom_call.1} parent=63 // pred_fallthru
          _
        %s527 = sand.u32 %s56, 1
        %s528 = scalar_lea.sflag [#allocation5], %s527
        %s529 = sand.u32 %s56, 1
        %s530 = smul.addr %s529, 4
        %s531 = scalar_lea.vmem [#allocation4], %s530
        %p532 = pneg %p69
        %p533 = pneg %p66
        %s534 = sand.u32 %s34, 1
        %s535 = scalar_lea.sflag [#allocation8], %s534
        %s536 = sand.u32 %s82, 1
        %s537 = smul.addr %s536, 4
        %s538 = scalar_lea.vmem [#allocation7], %s537
        %p539 = pneg %p95
        %p540 = pneg %p92
        %s541 = sand.u32 %s34, 1
        %s542 = scalar_lea.sflag [#allocation8], %s541
        %s543 = sand.u32 %s108, 1
        %s544 = smul.addr %s543, 4
        %s545 = scalar_lea.vmem [#allocation9], %s544
        %p546 = pneg %p121
        %p547 = pneg %p118
        %p548 = pneg %p142
        %p549 = pneg %p139
        %p550 = pneg %p163
        %p551 = pneg %p160
        %p552 = pneg %p184
        %p553 = pneg %p181
        %p554 = pneg %p205
        %p555 = pneg %p202
        %p556 = pneg %p226
        %p557 = pneg %p223
        %p558 = pneg %p247
        %p559 = pneg %p244
        %p560 = pneg %p268
        %p561 = pneg %p265
        %p562 = pneg %p289
        %p563 = pneg %p286
        %p564 = pneg %p317
        %p565 = pneg %p314
        %s566 = sand.u32 %s304, 1
        %s567 = scalar_lea.sflag [#allocation6], %s566
        %s568 = sand.u32 %s304, 1
        %s569 = smul.addr %s568, 8
        %s570 = scalar_lea.vmem [#allocation19], %s569
        %p572 = scmp.eq.s32.totalorder %s39, 0
        // Predicated region
        $region101: #{tpu_custom_call.1} parent=63 // pred_check
          %p573 = pneg %p572
        $region102: #{tpu_custom_call.1} parent=63 // pred_check_branch
          %575 = sbr.rel (%p573) target = $region104
        $region103: #{tpu_custom_call.1} parent=63 // pred_region
          %v576 = vld [vmem:[%s489] sm:$0xf]
          %v577 = vld [vmem:[%s498] sm:$0xf]
          %v578 = vld [vmem:[#allocation13] sm:$0xf]
          %v579 = vld [vmem:[#allocation13 + $0x4] sm:$0xf]
          %v580 = vld [vmem:[#allocation13 + $0x8] sm:$0xf]
          %v581 = vld [vmem:[#allocation13 + $0xc] sm:$0xf]
          %v582 = vld [vmem:[#allocation15] sm:$0x1]
          %v584 = vlaneseq
          %v585 = vshrl.u32 %v584, 7
          %v586 = vsub.s32 0, %v585
          %v587 = vrot.slane %v582, %v586
          %v593 = vunpack.c.l.b16 %v578
          %v594 = vunpack.c.l.b16 %v579
          %v595 = vunpack.c.l.b16 %v580
          %v596 = vunpack.c.l.b16 %v581
          %v597 = vpack.c.b16 %v594, %v593
          %v598 = vpack.c.b16 %v596, %v595
          %vm601 = vcmask 261120
          %v603 = vsel %vm601, %v576, 0
          %605 = vmatprep.subr.bf16.mxu0 0
          %606 = vmatpush1.bf16.msra.mxu0 0
          %607 = vmatprep.subr.bf16.mxu0 0
          %608 = vmatpush1.bf16.msra.mxu0 0
          %609 = vmatprep.subr.bf16.mxu0 0
          %610 = vmatpush1.bf16.msra.mxu0 0
          %611 = vmatprep.subr.bf16.mxu0 0
          %612 = vmatpush1.bf16.msra.mxu0 0
          %613 = vmatprep.subr.bf16.mxu0 0
          %614 = vmatpush1.bf16.msra.mxu0 0
          %615 = vmatprep.subr.bf16.mxu0 0
          %616 = vmatpush1.bf16.msra.mxu0 0
          %617 = vmatprep.subr.bf16.mxu0 0
          %618 = vmatpush1.bf16.msra.mxu0 %v598
          %619 = vmatprep.subr.bf16.mxu0 0
          %620 = vmatpush1.bf16.msra.mxu0 %v597
          %621 = vmatprep.subr.bf16.mxu0 0
          %622 = vmatpush2.bf16.msra.mxu0 0
          %623 = vmatprep.subr.bf16.mxu0 0
          %624 = vmatpush2.bf16.msra.mxu0 0
          %625 = vmatprep.subr.bf16.mxu0 0
          %626 = vmatpush2.bf16.msra.mxu0 0
          %627 = vmatprep.subr.bf16.mxu0 0
          %628 = vmatpush2.bf16.msra.mxu0 0
          %629 = vmatprep.subr.bf16.mxu0 0
          %630 = vmatpush2.bf16.msra.mxu0 0
          %631 = vmatprep.subr.bf16.mxu0 0
          %632 = vmatpush2.bf16.msra.mxu0 0
          %633 = vmatprep.subr.bf16.mxu0 0
          %634 = vmatpush2.bf16.msra.mxu0 0
          %635 = vmatprep.subr.bf16.mxu0 0
          %636 = vmatpush2.bf16.msra.mxu0 0
          %637 = vmatprep.mubr.bf16.mxu0 0
          %638 = vmatmul.mubr.bf16.gmra.mxu0 %v603
          %v639 = vpop.f32.mrf.mxu0
          %v640 = vadd.f32 %v587, %v639
          %v641 = vpop.f32.mrf.mxu0
          %v642 = vpop.f32.mrf.mxu0
          %v643 = vpop.f32.mrf.mxu0
          %644 = vdwg.mxu0
          %v645 = vld [vmem:[#allocation16] sm:$0xf]
          %v646 = vld [vmem:[#allocation16 + $0x4] sm:$0xf]
          %v647 = vld [vmem:[#allocation16 + $0x8] sm:$0xf]
          %v648 = vld [vmem:[#allocation16 + $0xc] sm:$0xf]
          %v649 = vld [vmem:[#allocation18] sm:$0x1]
          %v651 = vlaneseq
          %v652 = vshrl.u32 %v651, 7
          %v653 = vsub.s32 0, %v652
          %v654 = vrot.slane %v649, %v653
          %v660 = vunpack.c.l.b16 %v645
          %v661 = vunpack.c.l.b16 %v646
          %v662 = vunpack.c.l.b16 %v647
          %v663 = vunpack.c.l.b16 %v648
          %v664 = vpack.c.b16 %v661, %v660
          %v665 = vpack.c.b16 %v663, %v662
          %v669 = vsel %vm601, %v577, 0
          %671 = vmatprep.subr.bf16.mxu0 0
          %672 = vmatpush1.bf16.msra.mxu0 0
          %673 = vmatprep.subr.bf16.mxu0 0
          %674 = vmatpush1.bf16.msra.mxu0 0
          %675 = vmatprep.subr.bf16.mxu0 0
          %676 = vmatpush1.bf16.msra.mxu0 0
          %677 = vmatprep.subr.bf16.mxu0 0
          %678 = vmatpush1.bf16.msra.mxu0 0
          %679 = vmatprep.subr.bf16.mxu0 0
          %680 = vmatpush1.bf16.msra.mxu0 0
          %681 = vmatprep.subr.bf16.mxu0 0
          %682 = vmatpush1.bf16.msra.mxu0 0
          %683 = vmatprep.subr.bf16.mxu0 0
          %684 = vmatpush1.bf16.msra.mxu0 %v665
          %685 = vmatprep.subr.bf16.mxu0 0
          %686 = vmatpush1.bf16.msra.mxu0 %v664
          %687 = vmatprep.subr.bf16.mxu0 0
          %688 = vmatpush2.bf16.msra.mxu0 0
          %689 = vmatprep.subr.bf16.mxu0 0
          %690 = vmatpush2.bf16.msra.mxu0 0
          %691 = vmatprep.subr.bf16.mxu0 0
          %692 = vmatpush2.bf16.msra.mxu0 0
          %693 = vmatprep.subr.bf16.mxu0 0
          %694 = vmatpush2.bf16.msra.mxu0 0
          %695 = vmatprep.subr.bf16.mxu0 0
          %696 = vmatpush2.bf16.msra.mxu0 0
          %697 = vmatprep.subr.bf16.mxu0 0
          %698 = vmatpush2.bf16.msra.mxu0 0
          %699 = vmatprep.subr.bf16.mxu0 0
          %700 = vmatpush2.bf16.msra.mxu0 0
          %701 = vmatprep.subr.bf16.mxu0 0
          %702 = vmatpush2.bf16.msra.mxu0 0
          %703 = vmatprep.mubr.bf16.mxu0 0
          %704 = vmatmul.mubr.bf16.gmra.mxu0 %v669
          %v705 = vpop.f32.mrf.mxu0
          %v706 = vadd.f32 %v654, %v705
          %v707 = vpop.f32.mrf.mxu0
          %v708 = vpop.f32.mrf.mxu0
          %v709 = vpop.f32.mrf.mxu0
          %710 = vdwg.mxu0
          %v711 = vpack.c.bf16 %v640, %v640
          %vm712 = vcmask 257024
          %713 = vst.msk [vmem:[#allocation2] sm:$0xf] %vm712, %v711
          %v714 = vpack.c.bf16 %v706, %v706
          %715 = vst.msk [vmem:[#allocation3] sm:$0xf] %vm712, %v714
        $region104: #{tpu_custom_call.1} parent=63 // pred_fallthru
          _
        %v716 = vld [vmem:[%s480] sm:$0xf]
        %v717 = vld [vmem:[#allocation10] sm:$0xf]
        %v718 = vld [vmem:[#allocation10 + $0x4] sm:$0xf]
        %v719 = vld [vmem:[#allocation10 + $0x8] sm:$0xf]
        %v720 = vld [vmem:[#allocation10 + $0xc] sm:$0xf]
        %v721 = vld [vmem:[#allocation12] sm:$0x1]
        %v723 = vlaneseq
        %v724 = vshrl.u32 %v723, 7
        %v725 = vsub.s32 0, %v724
        %v726 = vrot.slane %v721, %v725
        %v732 = vunpack.c.l.b16 %v717
        %v733 = vunpack.c.l.b16 %v718
        %v734 = vunpack.c.l.b16 %v719
        %v735 = vunpack.c.l.b16 %v720
        %v736 = vpack.c.b16 %v733, %v732
        %v737 = vpack.c.b16 %v735, %v734
        %vm740 = vcmask 261120
        %v742 = vsel %vm740, %v716, 0
        %744 = vmatprep.subr.bf16.mxu0 0
        %745 = vmatpush1.bf16.msra.mxu0 0
        %746 = vmatprep.subr.bf16.mxu0 0
        %747 = vmatpush1.bf16.msra.mxu0 0
        %748 = vmatprep.subr.bf16.mxu0 0
        %749 = vmatpush1.bf16.msra.mxu0 0
        %750 = vmatprep.subr.bf16.mxu0 0
        %751 = vmatpush1.bf16.msra.mxu0 0
        %752 = vmatprep.subr.bf16.mxu0 0
        %753 = vmatpush1.bf16.msra.mxu0 0
        %754 = vmatprep.subr.bf16.mxu0 0
        %755 = vmatpush1.bf16.msra.mxu0 0
        %756 = vmatprep.subr.bf16.mxu0 0
        %757 = vmatpush1.bf16.msra.mxu0 %v737
        %758 = vmatprep.subr.bf16.mxu0 0
        %759 = vmatpush1.bf16.msra.mxu0 %v736
        %760 = vmatprep.subr.bf16.mxu0 0
        %761 = vmatpush2.bf16.msra.mxu0 0
        %762 = vmatprep.subr.bf16.mxu0 0
        %763 = vmatpush2.bf16.msra.mxu0 0
        %764 = vmatprep.subr.bf16.mxu0 0
        %765 = vmatpush2.bf16.msra.mxu0 0
        %766 = vmatprep.subr.bf16.mxu0 0
        %767 = vmatpush2.bf16.msra.mxu0 0
        %768 = vmatprep.subr.bf16.mxu0 0
        %769 = vmatpush2.bf16.msra.mxu0 0
        %770 = vmatprep.subr.bf16.mxu0 0
        %771 = vmatpush2.bf16.msra.mxu0 0
        %772 = vmatprep.subr.bf16.mxu0 0
        %773 = vmatpush2.bf16.msra.mxu0 0
        %774 = vmatprep.subr.bf16.mxu0 0
        %775 = vmatpush2.bf16.msra.mxu0 0
        %776 = vmatprep.mubr.bf16.mxu0 0
        %777 = vmatmul.mubr.bf16.gmra.mxu0 %v742
        %v778 = vpop.f32.mrf.mxu0
        %v779 = vadd.f32 %v726, %v778
        %v780 = vpop.f32.mrf.mxu0
        %v781 = vpop.f32.mrf.mxu0
        %v782 = vpop.f32.mrf.mxu0
        %783 = vdwg.mxu0
        %v784 = vpack.c.bf16 %v779, %v779
        %v785 = vld [vmem:[#allocation2] sm:$0xf]
        %v786 = vld [vmem:[#allocation3] sm:$0xf]
        %vm787 = vcmask 64512
        %v789 = vsel %vm787, %v784, 0
        %v792 = vsel %vm787, %v785, 0
        %794 = vmatprep.subr.bf16.mxu0 0
        %795 = vmatpush1.bf16.xpose.msra.mxu0 0
        %796 = vmatprep.subr.bf16.mxu0 0
        %797 = vmatpush1.bf16.xpose.msra.mxu0 0
        %798 = vmatprep.subr.bf16.mxu0 0
        %799 = vmatpush1.bf16.xpose.msra.mxu0 0
        %800 = vmatprep.subr.bf16.mxu0 0
        %801 = vmatpush1.bf16.xpose.msra.mxu0 0
        %802 = vmatprep.subr.bf16.mxu0 0
        %803 = vmatpush1.bf16.xpose.msra.mxu0 0
        %804 = vmatprep.subr.bf16.mxu0 0
        %805 = vmatpush1.bf16.xpose.msra.mxu0 0
        %806 = vmatprep.subr.bf16.mxu0 0
        %807 = vmatpush1.bf16.xpose.msra.mxu0 0
        %808 = vmatprep.subr.bf16.mxu0 0
        %809 = vmatpush1.bf16.xpose.msra.mxu0 %v792
        %810 = vmatprep.subr.bf16.mxu0 0
        %811 = vmatpush2.bf16.xpose.msra.mxu0 0
        %812 = vmatprep.subr.bf16.mxu0 0
        %813 = vmatpush2.bf16.xpose.msra.mxu0 0
        %814 = vmatprep.subr.bf16.mxu0 0
        %815 = vmatpush2.bf16.xpose.msra.mxu0 0
        %816 = vmatprep.subr.bf16.mxu0 0
        %817 = vmatpush2.bf16.xpose.msra.mxu0 0
        %818 = vmatprep.subr.bf16.mxu0 0
        %819 = vmatpush2.bf16.xpose.msra.mxu0 0
        %820 = vmatprep.subr.bf16.mxu0 0
        %821 = vmatpush2.bf16.xpose.msra.mxu0 0
        %822 = vmatprep.subr.bf16.mxu0 0
        %823 = vmatpush2.bf16.xpose.msra.mxu0 0
        %824 = vmatprep.subr.bf16.mxu0 0
        %825 = vmatpush2.bf16.xpose.msra.mxu0 0
        %826 = vmatprep.mubr.bf16.mxu0 0
        %827 = vmatmul.mubr.bf16.gmra.mxu0 %v789
        %v828 = vpop.f32.mrf.mxu0
        %v829 = vadd.f32 0.0, %v828
        %v830 = vpop.f32.mrf.mxu0
        %v831 = vpop.f32.mrf.mxu0
        %v832 = vpop.f32.mrf.mxu0
        %833 = vdwg.mxu0
        %v834 = vsel %vm787, %v829, -inf
        %835 = vmax.xlane.f32.xlu0 %v834
        %v836 = vpop.xlane.xlu0 %835
        %v837 = vsub.f32 %v829, %v836
        %v838 = vmul.f32 %v837, 1.442695
        %v839 = vpow.pop %v838
        %v840 = vsel %vm787, %v839, 0.0
        %841 = vadd.xlane.f32.xlu0 %v840
        %v842 = vpop.xlane.xlu0 %841
        %v843 = vrcp.pop %v842
        %v844 = vmul.f32 %v839, %v843
        %v845 = vpack.c.bf16 %v844, %v844
        %v847 = vsel %vm787, %v845, 0
        %vm849 = vcmask 1043456
        %v851 = vsel %vm849, %v786, 0
        %853 = vmatprep.subr.bf16.mxu0 0
        %854 = vmatpush1.bf16.msra.mxu0 0
        %855 = vmatprep.subr.bf16.mxu0 0
        %856 = vmatpush1.bf16.msra.mxu0 0
        %857 = vmatprep.subr.bf16.mxu0 0
        %858 = vmatpush1.bf16.msra.mxu0 0
        %859 = vmatprep.subr.bf16.mxu0 0
        %860 = vmatpush1.bf16.msra.mxu0 0
        %861 = vmatprep.subr.bf16.mxu0 0
        %862 = vmatpush1.bf16.msra.mxu0 0
        %863 = vmatprep.subr.bf16.mxu0 0
        %864 = vmatpush1.bf16.msra.mxu0 0
        %865 = vmatprep.subr.bf16.mxu0 0
        %866 = vmatpush1.bf16.msra.mxu0 0
        %867 = vmatprep.subr.bf16.mxu0 0
        %868 = vmatpush1.bf16.msra.mxu0 %v851
        %869 = vmatprep.subr.bf16.mxu0 0
        %870 = vmatpush2.bf16.msra.mxu0 0
        %871 = vmatprep.subr.bf16.mxu0 0
        %872 = vmatpush2.bf16.msra.mxu0 0
        %873 = vmatprep.subr.bf16.mxu0 0
        %874 = vmatpush2.bf16.msra.mxu0 0
        %875 = vmatprep.subr.bf16.mxu0 0
        %876 = vmatpush2.bf16.msra.mxu0 0
        %877 = vmatprep.subr.bf16.mxu0 0
        %878 = vmatpush2.bf16.msra.mxu0 0
        %879 = vmatprep.subr.bf16.mxu0 0
        %880 = vmatpush2.bf16.msra.mxu0 0
        %881 = vmatprep.subr.bf16.mxu0 0
        %882 = vmatpush2.bf16.msra.mxu0 0
        %883 = vmatprep.subr.bf16.mxu0 0
        %884 = vmatpush2.bf16.msra.mxu0 0
        %885 = vmatprep.mubr.bf16.mxu0 0
        %886 = vmatmul.mubr.bf16.gmra.mxu0 %v847
        %v887 = vpop.f32.mrf.mxu0
        %v888 = vadd.f32 0.0, %v887
        %v889 = vpop.f32.mrf.mxu0
        %v890 = vpop.f32.mrf.mxu0
        %v891 = vpop.f32.mrf.mxu0
        %892 = vdwg.mxu0
        %v893 = vpack.c.bf16 %v888, %v888
        %v894 = vld [vmem:[%s9] sm:$0xf]
        %896 = vrot.lane.b32.xlu0 %v784, 120
        %v897 = vpop.permute.xlu0 %896
        %v899 = vunpack.c.l.b16 %v785
        %v900 = vpack.c.b16 %v899, %v899
        %901 = vrot.lane.b32.xlu0 %v900, 120
        %v902 = vpop.permute.xlu0 %901
        %v904 = vsel %vm787, %v897, 0
        %v907 = vsel %vm787, %v902, 0
        %909 = vmatprep.subr.bf16.mxu0 0
        %910 = vmatpush1.bf16.xpose.msra.mxu0 0
        %911 = vmatprep.subr.bf16.mxu0 0
        %912 = vmatpush1.bf16.xpose.msra.mxu0 0
        %913 = vmatprep.subr.bf16.mxu0 0
        %914 = vmatpush1.bf16.xpose.msra.mxu0 0
        %915 = vmatprep.subr.bf16.mxu0 0
        %916 = vmatpush1.bf16.xpose.msra.mxu0 0
        %917 = vmatprep.subr.bf16.mxu0 0
        %918 = vmatpush1.bf16.xpose.msra.mxu0 0
        %919 = vmatprep.subr.bf16.mxu0 0
        %920 = vmatpush1.bf16.xpose.msra.mxu0 0
        %921 = vmatprep.subr.bf16.mxu0 0
        %922 = vmatpush1.bf16.xpose.msra.mxu0 0
        %923 = vmatprep.subr.bf16.mxu0 0
        %924 = vmatpush1.bf16.xpose.msra.mxu0 %v907
        %925 = vmatprep.subr.bf16.mxu0 0
        %926 = vmatpush2.bf16.xpose.msra.mxu0 0
        %927 = vmatprep.subr.bf16.mxu0 0
        %928 = vmatpush2.bf16.xpose.msra.mxu0 0
        %929 = vmatprep.subr.bf16.mxu0 0
        %930 = vmatpush2.bf16.xpose.msra.mxu0 0
        %931 = vmatprep.subr.bf16.mxu0 0
        %932 = vmatpush2.bf16.xpose.msra.mxu0 0
        %933 = vmatprep.subr.bf16.mxu0 0
        %934 = vmatpush2.bf16.xpose.msra.mxu0 0
        %935 = vmatprep.subr.bf16.mxu0 0
        %936 = vmatpush2.bf16.xpose.msra.mxu0 0
        %937 = vmatprep.subr.bf16.mxu0 0
        %938 = vmatpush2.bf16.xpose.msra.mxu0 0
        %939 = vmatprep.subr.bf16.mxu0 0
        %940 = vmatpush2.bf16.xpose.msra.mxu0 0
        %941 = vmatprep.mubr.bf16.mxu0 0
        %942 = vmatmul.mubr.bf16.gmra.mxu0 %v904
        %v943 = vpop.f32.mrf.mxu0
        %v944 = vadd.f32 0.0, %v943
        %v945 = vpop.f32.mrf.mxu0
        %v946 = vpop.f32.mrf.mxu0
        %v947 = vpop.f32.mrf.mxu0
        %948 = vdwg.mxu0
        %v949 = vsel %vm787, %v944, -inf
        %950 = vmax.xlane.f32.xlu0 %v949
        %v951 = vpop.xlane.xlu0 %950
        %v952 = vsub.f32 %v944, %v951
        %v953 = vmul.f32 %v952, 1.442695
        %v954 = vpow.pop %v953
        %v955 = vsel %vm787, %v954, 0.0
        %956 = vadd.xlane.f32.xlu0 %v955
        %v957 = vpop.xlane.xlu0 %956
        %v958 = vrcp.pop %v957
        %v959 = vmul.f32 %v954, %v958
        %v960 = vpack.c.bf16 %v959, %v959
        %v962 = vunpack.c.l.b16 %v786
        %v963 = vpack.c.b16 %v962, %v962
        %964 = vrot.lane.b32.xlu0 %v963, 120
        %v965 = vpop.permute.xlu0 %964
        %v967 = vsel %vm787, %v960, 0
        %v970 = vsel %vm849, %v965, 0
        %972 = vmatprep.subr.bf16.mxu0 0
        %973 = vmatpush1.bf16.msra.mxu0 0
        %974 = vmatprep.subr.bf16.mxu0 0
        %975 = vmatpush1.bf16.msra.mxu0 0
        %976 = vmatprep.subr.bf16.mxu0 0
        %977 = vmatpush1.bf16.msra.mxu0 0
        %978 = vmatprep.subr.bf16.mxu0 0
        %979 = vmatpush1.bf16.msra.mxu0 0
        %980 = vmatprep.subr.bf16.mxu0 0
        %981 = vmatpush1.bf16.msra.mxu0 0
        %982 = vmatprep.subr.bf16.mxu0 0
        %983 = vmatpush1.bf16.msra.mxu0 0
        %984 = vmatprep.subr.bf16.mxu0 0
        %985 = vmatpush1.bf16.msra.mxu0 0
        %986 = vmatprep.subr.bf16.mxu0 0
        %987 = vmatpush1.bf16.msra.mxu0 %v970
        %988 = vmatprep.subr.bf16.mxu0 0
        %989 = vmatpush2.bf16.msra.mxu0 0
        %990 = vmatprep.subr.bf16.mxu0 0
        %991 = vmatpush2.bf16.msra.mxu0 0
        %992 = vmatprep.subr.bf16.mxu0 0
        %993 = vmatpush2.bf16.msra.mxu0 0
        %994 = vmatprep.subr.bf16.mxu0 0
        %995 = vmatpush2.bf16.msra.mxu0 0
        %996 = vmatprep.subr.bf16.mxu0 0
        %997 = vmatpush2.bf16.msra.mxu0 0
        %998 = vmatprep.subr.bf16.mxu0 0
        %999 = vmatpush2.bf16.msra.mxu0 0
        %1000 = vmatprep.subr.bf16.mxu0 0
        %1001 = vmatpush2.bf16.msra.mxu0 0
        %1002 = vmatprep.subr.bf16.mxu0 0
        %1003 = vmatpush2.bf16.msra.mxu0 0
        %1004 = vmatprep.mubr.bf16.mxu0 0
        %1005 = vmatmul.mubr.bf16.gmra.mxu0 %v967
        %v1006 = vpop.f32.mrf.mxu0
        %v1007 = vadd.f32 0.0, %v1006
        %v1008 = vpop.f32.mrf.mxu0
        %v1009 = vpop.f32.mrf.mxu0
        %v1010 = vpop.f32.mrf.mxu0
        %1011 = vdwg.mxu0
        %v1012 = vpack.c.bf16 %v1007, %v1007
        %v1013 = vld [vmem:[%s9 + $0x4] sm:$0xf]
        %v1015 = vsel %vm787, %v1012, 0
        %v1018 = vsel %vm849, %v1013, 0
        %1020 = vmatprep.subr.bf16.mxu0 0
        %1021 = vmatpush1.bf16.msra.mxu0 0
        %1022 = vmatprep.subr.bf16.mxu0 0
        %1023 = vmatpush1.bf16.msra.mxu0 0
        %1024 = vmatprep.subr.bf16.mxu0 0
        %1025 = vmatpush1.bf16.msra.mxu0 0
        %1026 = vmatprep.subr.bf16.mxu0 0
        %1027 = vmatpush1.bf16.msra.mxu0 0
        %1028 = vmatprep.subr.bf16.mxu0 0
        %1029 = vmatpush1.bf16.msra.mxu0 0
        %1030 = vmatprep.subr.bf16.mxu0 0
        %1031 = vmatpush1.bf16.msra.mxu0 0
        %1032 = vmatprep.subr.bf16.mxu0 0
        %1033 = vmatpush1.bf16.msra.mxu0 0
        %1034 = vmatprep.subr.bf16.mxu0 0
        %1035 = vmatpush1.bf16.msra.mxu0 %v1018
        %1036 = vmatprep.subr.bf16.mxu0 0
        %1037 = vmatpush2.bf16.msra.mxu0 0
        %1038 = vmatprep.subr.bf16.mxu0 0
        %1039 = vmatpush2.bf16.msra.mxu0 0
        %1040 = vmatprep.subr.bf16.mxu0 0
        %1041 = vmatpush2.bf16.msra.mxu0 0
        %1042 = vmatprep.subr.bf16.mxu0 0
        %1043 = vmatpush2.bf16.msra.mxu0 0
        %1044 = vmatprep.subr.bf16.mxu0 0
        %1045 = vmatpush2.bf16.msra.mxu0 0
        %1046 = vmatprep.subr.bf16.mxu0 0
        %1047 = vmatpush2.bf16.msra.mxu0 0
        %1048 = vmatprep.subr.bf16.mxu0 0
        %1049 = vmatpush2.bf16.msra.mxu0 0
        %1050 = vmatprep.subr.bf16.mxu0 0
        %1051 = vmatpush2.bf16.msra.mxu0 0
        %1052 = vmatprep.mubr.bf16.mxu0 0
        %1053 = vmatmul.mubr.bf16.gmra.mxu0 %v1015
        %v1054 = vpop.f32.mrf.mxu0
        %v1055 = vadd.f32 0.0, %v1054
        %v1056 = vpop.f32.mrf.mxu0
        %v1057 = vpop.f32.mrf.mxu0
        %v1058 = vpop.f32.mrf.mxu0
        %1059 = vdwg.mxu0
        %v1061 = vsel %vm787, %v893, 0
        %v1064 = vsel %vm849, %v894, 0
        %1066 = vmatprep.subr.bf16.mxu0 0
        %1067 = vmatpush1.bf16.msra.mxu0 0
        %1068 = vmatprep.subr.bf16.mxu0 0
        %1069 = vmatpush1.bf16.msra.mxu0 0
        %1070 = vmatprep.subr.bf16.mxu0 0
        %1071 = vmatpush1.bf16.msra.mxu0 0
        %1072 = vmatprep.subr.bf16.mxu0 0
        %1073 = vmatpush1.bf16.msra.mxu0 0
        %1074 = vmatprep.subr.bf16.mxu0 0
        %1075 = vmatpush1.bf16.msra.mxu0 0
        %1076 = vmatprep.subr.bf16.mxu0 0
        %1077 = vmatpush1.bf16.msra.mxu0 0
        %1078 = vmatprep.subr.bf16.mxu0 0
        %1079 = vmatpush1.bf16.msra.mxu0 0
        %1080 = vmatprep.subr.bf16.mxu0 0
        %1081 = vmatpush1.bf16.msra.mxu0 %v1064
        %1082 = vmatprep.subr.bf16.mxu0 0
        %1083 = vmatpush2.bf16.msra.mxu0 0
        %1084 = vmatprep.subr.bf16.mxu0 0
        %1085 = vmatpush2.bf16.msra.mxu0 0
        %1086 = vmatprep.subr.bf16.mxu0 0
        %1087 = vmatpush2.bf16.msra.mxu0 0
        %1088 = vmatprep.subr.bf16.mxu0 0
        %1089 = vmatpush2.bf16.msra.mxu0 0
        %1090 = vmatprep.subr.bf16.mxu0 0
        %1091 = vmatpush2.bf16.msra.mxu0 0
        %1092 = vmatprep.subr.bf16.mxu0 0
        %1093 = vmatpush2.bf16.msra.mxu0 0
        %1094 = vmatprep.subr.bf16.mxu0 0
        %1095 = vmatpush2.bf16.msra.mxu0 0
        %1096 = vmatprep.subr.bf16.mxu0 0
        %1097 = vmatpush2.bf16.msra.mxu0 0
        %1098 = vmatprep.mubr.bf16.mxu0 0
        %1099 = vmatmul.mubr.bf16.gmra.mxu0 %v1061
        %v1100 = vpop.f32.mrf.mxu0
        %v1101 = vadd.f32 %v1055, %v1100
        %v1102 = vpop.f32.mrf.mxu0
        %v1103 = vpop.f32.mrf.mxu0
        %v1104 = vpop.f32.mrf.mxu0
        %1105 = vdwg.mxu0
        %1106 = vrot.lane.b32.xlu0 %v784, 112
        %v1107 = vpop.permute.xlu0 %1106
        %1108 = vrot.lane.b32.xlu0 %v900, 112
        %v1109 = vpop.permute.xlu0 %1108
        %v1111 = vsel %vm787, %v1107, 0
        %v1114 = vsel %vm787, %v1109, 0
        %1116 = vmatprep.subr.bf16.mxu0 0
        %1117 = vmatpush1.bf16.xpose.msra.mxu0 0
        %1118 = vmatprep.subr.bf16.mxu0 0
        %1119 = vmatpush1.bf16.xpose.msra.mxu0 0
        %1120 = vmatprep.subr.bf16.mxu0 0
        %1121 = vmatpush1.bf16.xpose.msra.mxu0 0
        %1122 = vmatprep.subr.bf16.mxu0 0
        %1123 = vmatpush1.bf16.xpose.msra.mxu0 0
        %1124 = vmatprep.subr.bf16.mxu0 0
        %1125 = vmatpush1.bf16.xpose.msra.mxu0 0
        %1126 = vmatprep.subr.bf16.mxu0 0
        %1127 = vmatpush1.bf16.xpose.msra.mxu0 0
        %1128 = vmatprep.subr.bf16.mxu0 0
        %1129 = vmatpush1.bf16.xpose.msra.mxu0 0
        %1130 = vmatprep.subr.bf16.mxu0 0
        %1131 = vmatpush1.bf16.xpose.msra.mxu0 %v1114
        %1132 = vmatprep.subr.bf16.mxu0 0
        %1133 = vmatpush2.bf16.xpose.msra.mxu0 0
        %1134 = vmatprep.subr.bf16.mxu0 0
        %1135 = vmatpush2.bf16.xpose.msra.mxu0 0
        %1136 = vmatprep.subr.bf16.mxu0 0
        %1137 = vmatpush2.bf16.xpose.msra.mxu0 0
        %1138 = vmatprep.subr.bf16.mxu0 0
        %1139 = vmatpush2.bf16.xpose.msra.mxu0 0
        %1140 = vmatprep.subr.bf16.mxu0 0
        %1141 = vmatpush2.bf16.xpose.msra.mxu0 0
        %1142 = vmatprep.subr.bf16.mxu0 0
        %1143 = vmatpush2.bf16.xpose.msra.mxu0 0
        %1144 = vmatprep.subr.bf16.mxu0 0
        %1145 = vmatpush2.bf16.xpose.msra.mxu0 0
        %1146 = vmatprep.subr.bf16.mxu0 0
        %1147 = vmatpush2.bf16.xpose.msra.mxu0 0
        %1148 = vmatprep.mubr.bf16.mxu0 0
        %1149 = vmatmul.mubr.bf16.gmra.mxu0 %v1111
        %v1150 = vpop.f32.mrf.mxu0
        %v1151 = vadd.f32 0.0, %v1150
        %v1152 = vpop.f32.mrf.mxu0
        %v1153 = vpop.f32.mrf.mxu0
        %v1154 = vpop.f32.mrf.mxu0
        %1155 = vdwg.mxu0
        %v1156 = vsel %vm787, %v1151, -inf
        %1157 = vmax.xlane.f32.xlu0 %v1156
        %v1158 = vpop.xlane.xlu0 %1157
        %v1159 = vsub.f32 %v1151, %v1158
        %v1160 = vmul.f32 %v1159, 1.442695
        %v1161 = vpow.pop %v1160
        %v1162 = vsel %vm787, %v1161, 0.0
        %1163 = vadd.xlane.f32.xlu0 %v1162
        %v1164 = vpop.xlane.xlu0 %1163
        %v1165 = vrcp.pop %v1164
        %v1166 = vmul.f32 %v1161, %v1165
        %v1167 = vpack.c.bf16 %v1166, %v1166
        %1168 = vrot.lane.b32.xlu0 %v963, 112
        %v1169 = vpop.permute.xlu0 %1168
        %v1171 = vsel %vm787, %v1167, 0
        %v1174 = vsel %vm849, %v1169, 0
        %1176 = vmatprep.subr.bf16.mxu0 0
        %1177 = vmatpush1.bf16.msra.mxu0 0
        %1178 = vmatprep.subr.bf16.mxu0 0
        %1179 = vmatpush1.bf16.msra.mxu0 0
        %1180 = vmatprep.subr.bf16.mxu0 0
        %1181 = vmatpush1.bf16.msra.mxu0 0
        %1182 = vmatprep.subr.bf16.mxu0 0
        %1183 = vmatpush1.bf16.msra.mxu0 0
        %1184 = vmatprep.subr.bf16.mxu0 0
        %1185 = vmatpush1.bf16.msra.mxu0 0
        %1186 = vmatprep.subr.bf16.mxu0 0
        %1187 = vmatpush1.bf16.msra.mxu0 0
        %1188 = vmatprep.subr.bf16.mxu0 0
        %1189 = vmatpush1.bf16.msra.mxu0 0
        %1190 = vmatprep.subr.bf16.mxu0 0
        %1191 = vmatpush1.bf16.msra.mxu0 %v1174
        %1192 = vmatprep.subr.bf16.mxu0 0
        %1193 = vmatpush2.bf16.msra.mxu0 0
        %1194 = vmatprep.subr.bf16.mxu0 0
        %1195 = vmatpush2.bf16.msra.mxu0 0
        %1196 = vmatprep.subr.bf16.mxu0 0
        %1197 = vmatpush2.bf16.msra.mxu0 0
        %1198 = vmatprep.subr.bf16.mxu0 0
        %1199 = vmatpush2.bf16.msra.mxu0 0
        %1200 = vmatprep.subr.bf16.mxu0 0
        %1201 = vmatpush2.bf16.msra.mxu0 0
        %1202 = vmatprep.subr.bf16.mxu0 0
        %1203 = vmatpush2.bf16.msra.mxu0 0
        %1204 = vmatprep.subr.bf16.mxu0 0
        %1205 = vmatpush2.bf16.msra.mxu0 0
        %1206 = vmatprep.subr.bf16.mxu0 0
        %1207 = vmatpush2.bf16.msra.mxu0 0
        %1208 = vmatprep.mubr.bf16.mxu0 0
        %1209 = vmatmul.mubr.bf16.gmra.mxu0 %v1171
        %v1210 = vpop.f32.mrf.mxu0
        %v1211 = vadd.f32 0.0, %v1210
        %v1212 = vpop.f32.mrf.mxu0
        %v1213 = vpop.f32.mrf.mxu0
        %v1214 = vpop.f32.mrf.mxu0
        %1215 = vdwg.mxu0
        %v1216 = vpack.c.bf16 %v1211, %v1211
        %v1217 = vld [vmem:[%s9 + $0x8] sm:$0xf]
        %v1219 = vsel %vm787, %v1216, 0
        %v1222 = vsel %vm849, %v1217, 0
        %1224 = vmatprep.subr.bf16.mxu0 0
        %1225 = vmatpush1.bf16.msra.mxu0 0
        %1226 = vmatprep.subr.bf16.mxu0 0
        %1227 = vmatpush1.bf16.msra.mxu0 0
        %1228 = vmatprep.subr.bf16.mxu0 0
        %1229 = vmatpush1.bf16.msra.mxu0 0
        %1230 = vmatprep.subr.bf16.mxu0 0
        %1231 = vmatpush1.bf16.msra.mxu0 0
        %1232 = vmatprep.subr.bf16.mxu0 0
        %1233 = vmatpush1.bf16.msra.mxu0 0
        %1234 = vmatprep.subr.bf16.mxu0 0
        %1235 = vmatpush1.bf16.msra.mxu0 0
        %1236 = vmatprep.subr.bf16.mxu0 0
        %1237 = vmatpush1.bf16.msra.mxu0 0
        %1238 = vmatprep.subr.bf16.mxu0 0
        %1239 = vmatpush1.bf16.msra.mxu0 %v1222
        %1240 = vmatprep.subr.bf16.mxu0 0
        %1241 = vmatpush2.bf16.msra.mxu0 0
        %1242 = vmatprep.subr.bf16.mxu0 0
        %1243 = vmatpush2.bf16.msra.mxu0 0
        %1244 = vmatprep.subr.bf16.mxu0 0
        %1245 = vmatpush2.bf16.msra.mxu0 0
        %1246 = vmatprep.subr.bf16.mxu0 0
        %1247 = vmatpush2.bf16.msra.mxu0 0
        %1248 = vmatprep.subr.bf16.mxu0 0
        %1249 = vmatpush2.bf16.msra.mxu0 0
        %1250 = vmatprep.subr.bf16.mxu0 0
        %1251 = vmatpush2.bf16.msra.mxu0 0
        %1252 = vmatprep.subr.bf16.mxu0 0
        %1253 = vmatpush2.bf16.msra.mxu0 0
        %1254 = vmatprep.subr.bf16.mxu0 0
        %1255 = vmatpush2.bf16.msra.mxu0 0
        %1256 = vmatprep.mubr.bf16.mxu0 0
        %1257 = vmatmul.mubr.bf16.gmra.mxu0 %v1219
        %v1258 = vpop.f32.mrf.mxu0
        %v1259 = vadd.f32 0.0, %v1258
        %v1260 = vpop.f32.mrf.mxu0
        %v1261 = vpop.f32.mrf.mxu0
        %v1262 = vpop.f32.mrf.mxu0
        %1263 = vdwg.mxu0
        %v1264 = vadd.f32 %v1101, %v1259
        %1265 = vrot.lane.b32.xlu0 %v784, 104
        %v1266 = vpop.permute.xlu0 %1265
        %1267 = vrot.lane.b32.xlu0 %v900, 104
        %v1268 = vpop.permute.xlu0 %1267
        %v1270 = vsel %vm787, %v1266, 0
        %v1273 = vsel %vm787, %v1268, 0
        %1275 = vmatprep.subr.bf16.mxu0 0
        %1276 = vmatpush1.bf16.xpose.msra.mxu0 0
        %1277 = vmatprep.subr.bf16.mxu0 0
        %1278 = vmatpush1.bf16.xpose.msra.mxu0 0
        %1279 = vmatprep.subr.bf16.mxu0 0
        %1280 = vmatpush1.bf16.xpose.msra.mxu0 0
        %1281 = vmatprep.subr.bf16.mxu0 0
        %1282 = vmatpush1.bf16.xpose.msra.mxu0 0
        %1283 = vmatprep.subr.bf16.mxu0 0
        %1284 = vmatpush1.bf16.xpose.msra.mxu0 0
        %1285 = vmatprep.subr.bf16.mxu0 0
        %1286 = vmatpush1.bf16.xpose.msra.mxu0 0
        %1287 = vmatprep.subr.bf16.mxu0 0
        %1288 = vmatpush1.bf16.xpose.msra.mxu0 0
        %1289 = vmatprep.subr.bf16.mxu0 0
        %1290 = vmatpush1.bf16.xpose.msra.mxu0 %v1273
        %1291 = vmatprep.subr.bf16.mxu0 0
        %1292 = vmatpush2.bf16.xpose.msra.mxu0 0
        %1293 = vmatprep.subr.bf16.mxu0 0
        %1294 = vmatpush2.bf16.xpose.msra.mxu0 0
        %1295 = vmatprep.subr.bf16.mxu0 0
        %1296 = vmatpush2.bf16.xpose.msra.mxu0 0
        %1297 = vmatprep.subr.bf16.mxu0 0
        %1298 = vmatpush2.bf16.xpose.msra.mxu0 0
        %1299 = vmatprep.subr.bf16.mxu0 0
        %1300 = vmatpush2.bf16.xpose.msra.mxu0 0
        %1301 = vmatprep.subr.bf16.mxu0 0
        %1302 = vmatpush2.bf16.xpose.msra.mxu0 0
        %1303 = vmatprep.subr.bf16.mxu0 0
        %1304 = vmatpush2.bf16.xpose.msra.mxu0 0
        %1305 = vmatprep.subr.bf16.mxu0 0
        %1306 = vmatpush2.bf16.xpose.msra.mxu0 0
        %1307 = vmatprep.mubr.bf16.mxu0 0
        %1308 = vmatmul.mubr.bf16.gmra.mxu0 %v1270
        %v1309 = vpop.f32.mrf.mxu0
        %v1310 = vadd.f32 0.0, %v1309
        %v1311 = vpop.f32.mrf.mxu0
        %v1312 = vpop.f32.mrf.mxu0
        %v1313 = vpop.f32.mrf.mxu0
        %1314 = vdwg.mxu0
        %v1315 = vsel %vm787, %v1310, -inf
        %1316 = vmax.xlane.f32.xlu0 %v1315
        %v1317 = vpop.xlane.xlu0 %1316
        %v1318 = vsub.f32 %v1310, %v1317
        %v1319 = vmul.f32 %v1318, 1.442695
        %v1320 = vpow.pop %v1319
        %v1321 = vsel %vm787, %v1320, 0.0
        %1322 = vadd.xlane.f32.xlu0 %v1321
        %v1323 = vpop.xlane.xlu0 %1322
        %v1324 = vrcp.pop %v1323
        %v1325 = vmul.f32 %v1320, %v1324
        %v1326 = vpack.c.bf16 %v1325, %v1325
        %1327 = vrot.lane.b32.xlu0 %v963, 104
        %v1328 = vpop.permute.xlu0 %1327
        %v1330 = vsel %vm787, %v1326, 0
        %v1333 = vsel %vm849, %v1328, 0
        %1335 = vmatprep.subr.bf16.mxu0 0
        %1336 = vmatpush1.bf16.msra.mxu0 0
        %1337 = vmatprep.subr.bf16.mxu0 0
        %1338 = vmatpush1.bf16.msra.mxu0 0
        %1339 = vmatprep.subr.bf16.mxu0 0
        %1340 = vmatpush1.bf16.msra.mxu0 0
        %1341 = vmatprep.subr.bf16.mxu0 0
        %1342 = vmatpush1.bf16.msra.mxu0 0
        %1343 = vmatprep.subr.bf16.mxu0 0
        %1344 = vmatpush1.bf16.msra.mxu0 0
        %1345 = vmatprep.subr.bf16.mxu0 0
        %1346 = vmatpush1.bf16.msra.mxu0 0
        %1347 = vmatprep.subr.bf16.mxu0 0
        %1348 = vmatpush1.bf16.msra.mxu0 0
        %1349 = vmatprep.subr.bf16.mxu0 0
        %1350 = vmatpush1.bf16.msra.mxu0 %v1333
        %1351 = vmatprep.subr.bf16.mxu0 0
        %1352 = vmatpush2.bf16.msra.mxu0 0
        %1353 = vmatprep.subr.bf16.mxu0 0
        %1354 = vmatpush2.bf16.msra.mxu0 0
        %1355 = vmatprep.subr.bf16.mxu0 0
        %1356 = vmatpush2.bf16.msra.mxu0 0
        %1357 = vmatprep.subr.bf16.mxu0 0
        %1358 = vmatpush2.bf16.msra.mxu0 0
        %1359 = vmatprep.subr.bf16.mxu0 0
        %1360 = vmatpush2.bf16.msra.mxu0 0
        %1361 = vmatprep.subr.bf16.mxu0 0
        %1362 = vmatpush2.bf16.msra.mxu0 0
        %1363 = vmatprep.subr.bf16.mxu0 0
        %1364 = vmatpush2.bf16.msra.mxu0 0
        %1365 = vmatprep.subr.bf16.mxu0 0
        %1366 = vmatpush2.bf16.msra.mxu0 0
        %1367 = vmatprep.mubr.bf16.mxu0 0
        %1368 = vmatmul.mubr.bf16.gmra.mxu0 %v1330
        %v1369 = vpop.f32.mrf.mxu0
        %v1370 = vadd.f32 0.0, %v1369
        %v1371 = vpop.f32.mrf.mxu0
        %v1372 = vpop.f32.mrf.mxu0
        %v1373 = vpop.f32.mrf.mxu0
        %1374 = vdwg.mxu0
        %v1375 = vpack.c.bf16 %v1370, %v1370
        %v1376 = vld [vmem:[%s9 + $0xc] sm:$0xf]
        %v1378 = vsel %vm787, %v1375, 0
        %v1381 = vsel %vm849, %v1376, 0
        %1383 = vmatprep.subr.bf16.mxu0 0
        %1384 = vmatpush1.bf16.msra.mxu0 0
        %1385 = vmatprep.subr.bf16.mxu0 0
        %1386 = vmatpush1.bf16.msra.mxu0 0
        %1387 = vmatprep.subr.bf16.mxu0 0
        %1388 = vmatpush1.bf16.msra.mxu0 0
        %1389 = vmatprep.subr.bf16.mxu0 0
        %1390 = vmatpush1.bf16.msra.mxu0 0
        %1391 = vmatprep.subr.bf16.mxu0 0
        %1392 = vmatpush1.bf16.msra.mxu0 0
        %1393 = vmatprep.subr.bf16.mxu0 0
        %1394 = vmatpush1.bf16.msra.mxu0 0
        %1395 = vmatprep.subr.bf16.mxu0 0
        %1396 = vmatpush1.bf16.msra.mxu0 0
        %1397 = vmatprep.subr.bf16.mxu0 0
        %1398 = vmatpush1.bf16.msra.mxu0 %v1381
        %1399 = vmatprep.subr.bf16.mxu0 0
        %1400 = vmatpush2.bf16.msra.mxu0 0
        %1401 = vmatprep.subr.bf16.mxu0 0
        %1402 = vmatpush2.bf16.msra.mxu0 0
        %1403 = vmatprep.subr.bf16.mxu0 0
        %1404 = vmatpush2.bf16.msra.mxu0 0
        %1405 = vmatprep.subr.bf16.mxu0 0
        %1406 = vmatpush2.bf16.msra.mxu0 0
        %1407 = vmatprep.subr.bf16.mxu0 0
        %1408 = vmatpush2.bf16.msra.mxu0 0
        %1409 = vmatprep.subr.bf16.mxu0 0
        %1410 = vmatpush2.bf16.msra.mxu0 0
        %1411 = vmatprep.subr.bf16.mxu0 0
        %1412 = vmatpush2.bf16.msra.mxu0 0
        %1413 = vmatprep.subr.bf16.mxu0 0
        %1414 = vmatpush2.bf16.msra.mxu0 0
        %1415 = vmatprep.mubr.bf16.mxu0 0
        %1416 = vmatmul.mubr.bf16.gmra.mxu0 %v1378
        %v1417 = vpop.f32.mrf.mxu0
        %v1418 = vadd.f32 0.0, %v1417
        %v1419 = vpop.f32.mrf.mxu0
        %v1420 = vpop.f32.mrf.mxu0
        %v1421 = vpop.f32.mrf.mxu0
        %1422 = vdwg.mxu0
        %v1423 = vadd.f32 %v1264, %v1418
        %v1424 = vld [vmem:[%s10] sm:$0x1]
        %v1426 = vlaneseq
        %v1427 = vshrl.u32 %v1426, 7
        %v1428 = vsub.s32 0, %v1427
        %v1429 = vrot.slane %v1424, %v1428
        %v1431 = vadd.f32 %v1423, %v1429
        %1432 = vst.msk [vmem:[%s570] sm:$0xff] %vm740, %v1431
        %s1433 = sand.u32 %s304, 1
        %s1434 = scalar_lea.sflag [#allocation6], %s1433
        %s1435 = sand.u32 %s304, 1
        %s1436 = smul.addr %s1435, 8
        %s1437 = scalar_lea.vmem [#allocation19], %s1436
        // Predicated region
        $region105: #{tpu_custom_call.1} parent=63 // pred_check
          %p1438 = pneg %p314
        $region106: #{tpu_custom_call.1} parent=63 // pred_check_branch
          %1440 = sbr.rel (%p1438) target = $region108
        $region107: #{tpu_custom_call.1} parent=63 // pred_region
          %s1442 = ssub.s32 128, 128
          %1443 = vsyncadd %s1434, %s1442
          %s1444 = sadd.s32 %s39, %s38
          %s1445 = smul.addr %s1444, 128
          %s1446 = scalar_lea.hbm %s11, %s1445
          %s1448 = sshll.u32 %s1437, 4
          %s1449 = int_to_ptr.vmem [resolvable:$true] %s1448
          %1451 = dma.vmem_to_hbm [thread:$0]  %s1449, 128, %s1446, %s1434
        $region108: #{tpu_custom_call.1} parent=63 // pred_fallthru
          _
      $region64: #{tpu_custom_call.1} parent=5 // pred_fallthru
        _
      %p1452 = scmp.le.s32.totalorder 2, %s29
      // Predicated region
      $region109: #{tpu_custom_call.1} parent=5 // pred_check
        %p1453 = pneg %p1452
      $region110: #{tpu_custom_call.1} parent=5 // pred_check_branch
        %1455 = sbr.rel (%p1453) target = $region112
      $region111: #{tpu_custom_call.1} parent=5 // pred_region
        %s1456 = ssub.s32 %s29, 2
        // Predicated region
        $region113: #{tpu_custom_call.1} parent=111 // pred_check
          %p1457 = pneg %p320
        $region114: #{tpu_custom_call.1} parent=111 // pred_check_branch
          %1459 = sbr.rel (%p1457) target = $region116
        $region115: #{tpu_custom_call.1} parent=111 // pred_region
          %s1460 = sand.u32 %s305, 1
          %s1461 = scalar_lea.sflag [#allocation6], %s1460
          %s1462 = sand.u32 %s305, 1
          %s1463 = smul.addr %s1462, 8
          %s1464 = scalar_lea.vmem [#allocation19], %s1463
          %1465 = dma.done %s1461, 128
        $region116: #{tpu_custom_call.1} parent=111 // pred_fallthru
          _
      $region112: #{tpu_custom_call.1} parent=5 // pred_fallthru
        _
    $region6: #{tpu_custom_call.1} parent=1 // loop_footer
      %s33 = sadd.s32 1, %s29
    $region7: #{tpu_custom_call.1} parent=1 // loop_footer_branch
      %28 = sbr.rel target = $region3
    $region8: #{tpu_custom_call.1} parent=1 // loop_exit
      _
    %1466 = vsyncpa [#allocation5], 1
    %s1467 = scalar_lea.sflag [#allocation5], 1
    %1468 = vsyncpa %s1467, 1
    %1469 = vsyncpa [#allocation8], 1
    %s1470 = scalar_lea.sflag [#allocation8], 1
    %1471 = vsyncpa %s1470, 1
    %1472 = vsyncpa [#allocation11], 1
    %1473 = vsyncpa [#allocation14], 1
    %1474 = vsyncpa [#allocation17], 1
    %1475 = vsyncpa [#allocation6], 1
    %s1476 = scalar_lea.sflag [#allocation6], 1
    %1477 = vsyncpa %s1476, 1

</llo_original>
